<compile_context>
chip_gen: v6e
topology: v6e:2x2x1
jax: 0.10.0
libtpu: 0.0.40
codegen_flags: <defaults>
</compile_context>

<pallas_src>
import functools

import jax
import jax.numpy as jnp
from jax.experimental import pallas as pl
from jax.experimental.pallas import tpu as pltpu

_BN_EPS = 1e-5


# ----------------------------------------------------------------------------
# Fused kernel: conv1 + BN1 + ReLU + conv2 + BN2 + ReLU + Linear + sigmoid
# ----------------------------------------------------------------------------
def _fused_discriminator_kernel(n, p1_ref, mask_ref, w1_ref, g1_ref, b1_ref,
                                w2_ref, g2_ref, b2_ref, wd_ref, bd_ref, o_ref):
    """Single-call forward pass.

    p1_ref:   (4*n*64, 16) bf16  conv1 im2col patches, rows grouped as
              (parity plane, sample, slot_row, slot_col); border slots are
              zero patches.
    mask_ref: (4*n*64, 1)  f32   1.0 on real slots, 0.0 on the border ring.
    w1_ref:   (16, 64)     bf16  conv1 weights in (kh,kw,cin)->cout order.
    w2_ref:   (16, 64, 128)bf16  conv2 weights, tap-major (kh*4+kw).
    g*/b*:    BN gamma/beta.
    wd_ref:   (1, 7, 7, 128) f32 dense weights permuted to (oy, ox, c).
    bd_ref:   (1, 1, 1, 1)   f32 dense bias.
    o_ref:    (n, 1, 1, 1)   f32 sigmoid output.
    """
    # ---- conv1 (1->64, k4 s2 p1): one im2col matmul + BN1(batch stats) + ReLU
    y1 = jnp.dot(p1_ref[...], w1_ref[...], preferred_element_type=jnp.float32)
    inv1 = 1.0 / (196.0 * n)          # border (zero-patch) rows add 0 to sums
    mu1 = jnp.sum(y1, axis=0, keepdims=True) * inv1
    ex1 = jnp.sum(y1 * y1, axis=0, keepdims=True) * inv1
    var1 = jnp.maximum(ex1 - mu1 * mu1, 0.0)
    scale1 = g1_ref[...] * jax.lax.rsqrt(var1 + _BN_EPS)
    shift1 = b1_ref[...] - mu1 * scale1
    # Mask re-zeros the conv2 padding ring (BN's shift would make it nonzero).
    h1 = (jnp.maximum(y1 * scale1 + shift1, 0.0)
          * mask_ref[...]).astype(jnp.bfloat16)            # (4*n*64, 64)

    # ---- conv2 (64->128, k4 s2 p1): 16 taps over VMEM-resident parity planes
    rows = n * 64
    acc = jnp.zeros((n, 7, 7, 128), jnp.float32)
    for kh in range(4):
        rp, q = kh % 2, kh // 2
        for kw in range(4):
            cp, qw = kw % 2, kw // 2
            pi = rp * 2 + cp
            plane = h1[pi * rows:(pi + 1) * rows, :]        # (n*64, 64) bf16
            y_t = jnp.dot(plane, w2_ref[kh * 4 + kw],
                          preferred_element_type=jnp.float32)
            y_t = y_t.reshape(n, 8, 8, 128)                 # 8-aligned, no relayout
            acc = acc + y_t[:, q:q + 7, qw:qw + 7, :]

    # ---- BN2 (batch stats) + ReLU ------------------------------------------
    inv2 = 1.0 / (49.0 * n)
    s = jnp.sum(acc, axis=0, keepdims=True)
    s = jnp.sum(s, axis=1, keepdims=True)
    mu2 = jnp.sum(s, axis=2, keepdims=True) * inv2          # (1,1,1,128)
    s2 = jnp.sum(acc * acc, axis=0, keepdims=True)
    s2 = jnp.sum(s2, axis=1, keepdims=True)
    ex2 = jnp.sum(s2, axis=2, keepdims=True) * inv2
    var2 = jnp.maximum(ex2 - mu2 * mu2, 0.0)
    scale2 = g2_ref[...] * jax.lax.rsqrt(var2 + _BN_EPS)
    shift2 = b2_ref[...] - mu2 * scale2
    a2 = jnp.maximum(acc * scale2 + shift2, 0.0)            # (n,7,7,128) f32

    # ---- Linear(128*7*7 -> 1) + sigmoid (weights pre-permuted to (oy,ox,c)) --
    z = a2 * wd_ref[...]
    t = jnp.sum(z, axis=3, keepdims=True)
    t = jnp.sum(t, axis=2, keepdims=True)
    t = jnp.sum(t, axis=1, keepdims=True)                   # (n,1,1,1)
    o_ref[...] = jax.nn.sigmoid(t + bd_ref[...])


# ----------------------------------------------------------------------------
# Wrapper-side glue (tiny XLA ops): conv1 im2col + parity-plane regrouping
# ----------------------------------------------------------------------------
def _conv1_patches_nhwc(x_nhwc):
    """(N,28,28,1) -> (N,14,14,16) conv1 im2col patches, feature order (kh,kw,cin)."""
    xp = jnp.pad(x_nhwc, ((0, 0), (1, 1), (1, 1), (0, 0)))
    cols = []
    for kh in range(4):
        for kw in range(4):
            cols.append(xp[:, kh:kh + 28:2, kw:kw + 28:2, :])
    return jnp.concatenate(cols, axis=-1)


def _parity_planes(patches):
    """Group conv1 patch rows into conv2's four parity planes, padded to 8x8.

    Plane (rp, cp) holds conv1 output (oy, ox) whose padded conv2-input
    coordinate (oy+1, ox+1) has parities (rp, cp), at slot ((oy+1)//2,
    (ox+1)//2).  Border slots (conv2's zero-padding ring) hold zero patches;
    a matching 0/1 mask lets the kernel zero them again after BN1+ReLU.
    """
    n = patches.shape[0]
    planes, masks = [], []
    for rp in (0, 1):
        for cp in (0, 1):
            rows = patches[:, (1 - rp)::2, (1 - cp)::2, :]            # (N,7,7,16)
            pr = (1, 0) if rp == 0 else (0, 1)
            pc = (1, 0) if cp == 0 else (0, 1)
            planes.append(jnp.pad(rows, ((0, 0), pr, pc, (0, 0))))    # (N,8,8,16)
            m = jnp.pad(jnp.ones((7, 7), jnp.float32), (pr, pc))      # (8,8)
            masks.append(jnp.broadcast_to(m[None], (n, 8, 8)))
    p1 = jnp.stack(planes, axis=0).reshape(4 * n * 64, 16).astype(jnp.bfloat16)
    mask = jnp.stack(masks, axis=0).reshape(4 * n * 64, 1)
    return p1, mask


# ----------------------------------------------------------------------------
# One-time parameter re-layout (PyTorch layout -> kernel layout)
# ----------------------------------------------------------------------------
def prepare_params(params):
    w1 = params["conv1_w"].transpose(2, 3, 1, 0).reshape(16, 64).astype(jnp.bfloat16)
    w2 = params["conv2_w"].transpose(2, 3, 1, 0).reshape(16, 64, 128).astype(jnp.bfloat16)
    # PyTorch flatten order of the 6272 dense columns is (c, oy, ox); permute
    # once to (oy, ox, c) so it matches the kernel's channels-last activations.
    wd = params["dense1_w"].reshape(128, 7, 7).transpose(1, 2, 0)[None]
    return {
        "w1": w1,
        "w2": w2,
        "wd": wd.astype(jnp.float32),
        "bd": params["dense1_b"].reshape(1, 1, 1, 1).astype(jnp.float32),
        "g1": params["bn1_gamma"].reshape(1, 64).astype(jnp.float32),
        "b1": params["bn1_beta"].reshape(1, 64).astype(jnp.float32),
        "g2": params["bn2_gamma"].reshape(1, 1, 1, 128).astype(jnp.float32),
        "b2": params["bn2_beta"].reshape(1, 1, 1, 128).astype(jnp.float32),
        # conv1_b / conv2_b omitted on purpose: a conv bias is removed exactly
        # by batch-statistics BatchNorm.
    }


# ----------------------------------------------------------------------------
# Full discriminator forward (single fused pallas_call)
# ----------------------------------------------------------------------------
@jax.jit
def discriminator_forward(x, prep):
    n = x.shape[0]
    x_nhwc = jnp.transpose(x, (0, 2, 3, 1))                 # (N,28,28,1), Cin==1
    patches = _conv1_patches_nhwc(x_nhwc)
    p1, mask = _parity_planes(patches)                      # (4N*64,16) bf16, (4N*64,1)
    m1 = 4 * n * 64

    kernel = functools.partial(_fused_discriminator_kernel, n)
    out = pl.pallas_call(
        kernel,
        out_shape=jax.ShapeDtypeStruct((n, 1, 1, 1), jnp.float32),
        in_specs=[
            pl.BlockSpec((m1, 16), lambda: (0, 0)),
            pl.BlockSpec((m1, 1), lambda: (0, 0)),
            pl.BlockSpec((16, 64), lambda: (0, 0)),
            pl.BlockSpec((1, 64), lambda: (0, 0)),
            pl.BlockSpec((1, 64), lambda: (0, 0)),
            pl.BlockSpec((16, 64, 128), lambda: (0, 0, 0)),
            pl.BlockSpec((1, 1, 1, 128), lambda: (0, 0, 0, 0)),
            pl.BlockSpec((1, 1, 1, 128), lambda: (0, 0, 0, 0)),
            pl.BlockSpec((1, 7, 7, 128), lambda: (0, 0, 0, 0)),
            pl.BlockSpec((1, 1, 1, 1), lambda: (0, 0, 0, 0)),
        ],
        out_specs=pl.BlockSpec((n, 1, 1, 1), lambda: (0, 0, 0, 0)),
        compiler_params=pltpu.CompilerParams(vmem_limit_bytes=32 << 20),
    )(p1, mask, prep["w1"], prep["g1"], prep["b1"],
      prep["w2"], prep["g2"], prep["b2"], prep["wd"], prep["bd"])
    return out.reshape(n, 1)


# ----------------------------------------------------------------------------
# Deterministic parameter init (shapes from the module __init__)
# ----------------------------------------------------------------------------
def init_params(key):
    keys = jax.random.split(key, 6)
    scale = 0.05
    return {
        "conv1_w": scale * jax.random.normal(keys[0], (64, 1, 4, 4), jnp.float32),
        "conv1_b": scale * jax.random.normal(keys[1], (64,), jnp.float32),
        "conv2_w": scale * jax.random.normal(keys[2], (128, 64, 4, 4), jnp.float32),
        "conv2_b": scale * jax.random.normal(keys[3], (128,), jnp.float32),
        "dense1_w": scale * jax.random.normal(keys[4], (1, 128 * 7 * 7), jnp.float32),
        "dense1_b": scale * jax.random.normal(keys[5], (1,), jnp.float32),
        "bn1_gamma": jnp.ones((64,), jnp.float32),
        "bn1_beta": jnp.zeros((64,), jnp.float32),
        "bn2_gamma": jnp.ones((128,), jnp.float32),
        "bn2_beta": jnp.zeros((128,), jnp.float32),
    }


# ----------------------------------------------------------------------------
# Pure-JAX f32 reference (matches the PyTorch module, batch-stat BN)
# ----------------------------------------------------------------------------
def reference_forward(x, params):
    def conv(x, w, b):
        y = jax.lax.conv_general_dilated(
            x, w, window_strides=(2, 2), padding=((1, 1), (1, 1)),
            dimension_numbers=("NCHW", "OIHW", "NCHW"))
        return y + b.reshape(1, -1, 1, 1)

    def bn(y, g, b):
        mean = jnp.mean(y, axis=(0, 2, 3), keepdims=True)
        var = jnp.mean((y - mean) ** 2, axis=(0, 2, 3), keepdims=True)
        return ((y - mean) * jax.lax.rsqrt(var + _BN_EPS)
                * g.reshape(1, -1, 1, 1) + b.reshape(1, -1, 1, 1))

    h = jax.nn.relu(bn(conv(x, params["conv1_w"], params["conv1_b"]),
                       params["bn1_gamma"], params["bn1_beta"]))
    h = jax.nn.relu(bn(conv(h, params["conv2_w"], params["conv2_b"]),
                       params["bn2_gamma"], params["bn2_beta"]))
    feat = h.reshape(x.shape[0], -1)                        # NCHW flatten, like .view
    logit = feat @ params["dense1_w"].T + params["dense1_b"]
    return jax.nn.sigmoid(logit)


if __name__ == "__main__":
    key = jax.random.PRNGKey(0)
    k_x, k_p = jax.random.split(key)

    # The 128*7*7 flatten in the module implies 28x28 single-channel input.
    x = jax.random.normal(k_x, (2, 1, 28, 28), jnp.float32)
    params = init_params(k_p)
    prep = prepare_params(params)

    out = discriminator_forward(x, prep)
    out = jax.block_until_ready(out)

    assert out.shape == (2, 1), out.shape
    assert bool(jnp.all((out >= 0.0) & (out <= 1.0))), "sigmoid range violated"

    ref = jax.block_until_ready(reference_forward(x, params))
    max_diff = float(jnp.max(jnp.abs(out - ref)))
    assert max_diff <= 5e-2, f"mismatch vs f32 reference: max abs diff {max_diff}"

    print("KERNEL_OK")
</pallas_src>

<mosaic_0001>
module attributes {stable_mosaic.version = 11 : i64} {
  func.func @_fused_discriminator_kernel(%arg0: memref<512x16xbf16, #tpu.memory_space<vmem>>, %arg1: memref<512x1xf32, #tpu.memory_space<vmem>>, %arg2: memref<16x64xbf16, #tpu.memory_space<vmem>>, %arg3: memref<1x64xf32, #tpu.memory_space<vmem>>, %arg4: memref<1x64xf32, #tpu.memory_space<vmem>>, %arg5: memref<16x64x128xbf16, #tpu.memory_space<vmem>>, %arg6: memref<1x1x1x128xf32, #tpu.memory_space<vmem>>, %arg7: memref<1x1x1x128xf32, #tpu.memory_space<vmem>>, %arg8: memref<1x7x7x128xf32, #tpu.memory_space<vmem>>, %arg9: memref<1x1x1x1xf32, #tpu.memory_space<vmem>>, %arg10: memref<2x1x1x1xf32, #tpu.memory_space<vmem>>) attributes {dimension_semantics = [], scalar_prefetch = 0 : i64, scratch_operands = 0 : i64, tpu.core_type = #tpu.core_type<tc>} {
    %c0 = arith.constant 0 : index
    %c0_0 = arith.constant 0 : index
    %0 = vector.load %arg0[%c0, %c0_0] : memref<512x16xbf16, #tpu.memory_space<vmem>>, vector<512x16xbf16>
    %c0_1 = arith.constant 0 : index
    %c0_2 = arith.constant 0 : index
    %1 = vector.load %arg2[%c0_1, %c0_2] : memref<16x64xbf16, #tpu.memory_space<vmem>>, vector<16x64xbf16>
    %cst = arith.constant dense<0.000000e+00> : vector<512x64xf32>
    %2 = tpu.matmul %0, %1, %cst {dimension_numbers = #tpu.dot_dimension_numbers<[1], [0], [0], [1], [0, 0, 1, 1], [], []>} : vector<512x16xbf16>, vector<16x64xbf16>, vector<512x64xf32> -> vector<512x64xf32>
    %cst_3 = arith.constant dense<0.000000e+00> : vector<64xf32>
    %3 = vector.multi_reduction <add>, %2, %cst_3 [0] : vector<512x64xf32> to vector<64xf32>
    %4 = vector.shape_cast %3 : vector<64xf32> to vector<1x64xf32>
    %cst_4 = arith.constant 0.00255102036 : f32
    %5 = vector.broadcast %cst_4 : f32 to vector<1x64xf32>
    %6 = arith.mulf %4, %5 : vector<1x64xf32>
    %7 = arith.mulf %2, %2 : vector<512x64xf32>
    %cst_5 = arith.constant dense<0.000000e+00> : vector<64xf32>
    %8 = vector.multi_reduction <add>, %7, %cst_5 [0] : vector<512x64xf32> to vector<64xf32>
    %9 = vector.shape_cast %8 : vector<64xf32> to vector<1x64xf32>
    %cst_6 = arith.constant 0.00255102036 : f32
    %10 = vector.broadcast %cst_6 : f32 to vector<1x64xf32>
    %11 = arith.mulf %9, %10 : vector<1x64xf32>
    %12 = arith.mulf %6, %6 : vector<1x64xf32>
    %13 = arith.subf %11, %12 : vector<1x64xf32>
    %cst_7 = arith.constant 0.000000e+00 : f32
    %14 = vector.broadcast %cst_7 : f32 to vector<1x64xf32>
    %15 = arith.maximumf %13, %14 : vector<1x64xf32>
    %c0_8 = arith.constant 0 : index
    %c0_9 = arith.constant 0 : index
    %16 = vector.load %arg3[%c0_8, %c0_9] : memref<1x64xf32, #tpu.memory_space<vmem>>, vector<1x64xf32>
    %cst_10 = arith.constant 9.99999974E-6 : f32
    %17 = vector.broadcast %cst_10 : f32 to vector<1x64xf32>
    %18 = arith.addf %15, %17 : vector<1x64xf32>
    %19 = math.rsqrt %18 : vector<1x64xf32>
    %20 = arith.mulf %16, %19 : vector<1x64xf32>
    %c0_11 = arith.constant 0 : index
    %c0_12 = arith.constant 0 : index
    %21 = vector.load %arg4[%c0_11, %c0_12] : memref<1x64xf32, #tpu.memory_space<vmem>>, vector<1x64xf32>
    %22 = arith.mulf %6, %20 : vector<1x64xf32>
    %23 = arith.subf %21, %22 : vector<1x64xf32>
    %24 = vector.broadcast %20 : vector<1x64xf32> to vector<512x64xf32>
    %25 = arith.mulf %2, %24 : vector<512x64xf32>
    %26 = vector.broadcast %23 : vector<1x64xf32> to vector<512x64xf32>
    %27 = arith.addf %25, %26 : vector<512x64xf32>
    %cst_13 = arith.constant 0.000000e+00 : f32
    %28 = vector.broadcast %cst_13 : f32 to vector<512x64xf32>
    %29 = arith.maximumf %27, %28 : vector<512x64xf32>
    %c0_14 = arith.constant 0 : index
    %c0_15 = arith.constant 0 : index
    %30 = vector.load %arg1[%c0_14, %c0_15] : memref<512x1xf32, #tpu.memory_space<vmem>>, vector<512x1xf32>
    %31 = vector.broadcast %30 : vector<512x1xf32> to vector<512x64xf32>
    %32 = arith.mulf %29, %31 : vector<512x64xf32>
    %33 = arith.truncf %32 : vector<512x64xf32> to vector<512x64xbf16>
    %cst_16 = arith.constant 0.000000e+00 : f32
    %34 = vector.broadcast %cst_16 : f32 to vector<2x7x7x128xf32>
    %35 = vector.extract_strided_slice %33 {offsets = [0, 0], sizes = [128, 64], strides = [1, 1]} : vector<512x64xbf16> to vector<128x64xbf16>
    %c0_17 = arith.constant 0 : index
    %c0_18 = arith.constant 0 : index
    %c0_19 = arith.constant 0 : index
    %36 = vector.load %arg5[%c0_17, %c0_18, %c0_19] : memref<16x64x128xbf16, #tpu.memory_space<vmem>>, vector<1x64x128xbf16>
    %37 = vector.shape_cast %36 : vector<1x64x128xbf16> to vector<64x128xbf16>
    %cst_20 = arith.constant dense<0.000000e+00> : vector<128x128xf32>
    %38 = tpu.matmul %35, %37, %cst_20 {dimension_numbers = #tpu.dot_dimension_numbers<[1], [0], [0], [1], [0, 0, 1, 1], [], []>} : vector<128x64xbf16>, vector<64x128xbf16>, vector<128x128xf32> -> vector<128x128xf32>
    %39 = vector.shape_cast %38 : vector<128x128xf32> to vector<2x8x8x128xf32>
    %40 = vector.extract_strided_slice %39 {offsets = [0, 0, 0, 0], sizes = [2, 7, 7, 128], strides = [1, 1, 1, 1]} : vector<2x8x8x128xf32> to vector<2x7x7x128xf32>
    %41 = arith.addf %34, %40 : vector<2x7x7x128xf32>
    %42 = vector.extract_strided_slice %33 {offsets = [128, 0], sizes = [128, 64], strides = [1, 1]} : vector<512x64xbf16> to vector<128x64xbf16>
    %c1 = arith.constant 1 : index
    %c0_21 = arith.constant 0 : index
    %c0_22 = arith.constant 0 : index
    %43 = vector.load %arg5[%c1, %c0_21, %c0_22] : memref<16x64x128xbf16, #tpu.memory_space<vmem>>, vector<1x64x128xbf16>
    %44 = vector.shape_cast %43 : vector<1x64x128xbf16> to vector<64x128xbf16>
    %cst_23 = arith.constant dense<0.000000e+00> : vector<128x128xf32>
    %45 = tpu.matmul %42, %44, %cst_23 {dimension_numbers = #tpu.dot_dimension_numbers<[1], [0], [0], [1], [0, 0, 1, 1], [], []>} : vector<128x64xbf16>, vector<64x128xbf16>, vector<128x128xf32> -> vector<128x128xf32>
    %46 = vector.shape_cast %45 : vector<128x128xf32> to vector<2x8x8x128xf32>
    %47 = vector.extract_strided_slice %46 {offsets = [0, 0, 0, 0], sizes = [2, 7, 7, 128], strides = [1, 1, 1, 1]} : vector<2x8x8x128xf32> to vector<2x7x7x128xf32>
    %48 = arith.addf %41, %47 : vector<2x7x7x128xf32>
    %49 = vector.extract_strided_slice %33 {offsets = [0, 0], sizes = [128, 64], strides = [1, 1]} : vector<512x64xbf16> to vector<128x64xbf16>
    %c2 = arith.constant 2 : index
    %c0_24 = arith.constant 0 : index
    %c0_25 = arith.constant 0 : index
    %50 = vector.load %arg5[%c2, %c0_24, %c0_25] : memref<16x64x128xbf16, #tpu.memory_space<vmem>>, vector<1x64x128xbf16>
    %51 = vector.shape_cast %50 : vector<1x64x128xbf16> to vector<64x128xbf16>
    %cst_26 = arith.constant dense<0.000000e+00> : vector<128x128xf32>
    %52 = tpu.matmul %49, %51, %cst_26 {dimension_numbers = #tpu.dot_dimension_numbers<[1], [0], [0], [1], [0, 0, 1, 1], [], []>} : vector<128x64xbf16>, vector<64x128xbf16>, vector<128x128xf32> -> vector<128x128xf32>
    %53 = vector.shape_cast %52 : vector<128x128xf32> to vector<2x8x8x128xf32>
    %54 = vector.extract_strided_slice %53 {offsets = [0, 0, 1, 0], sizes = [2, 7, 7, 128], strides = [1, 1, 1, 1]} : vector<2x8x8x128xf32> to vector<2x7x7x128xf32>
    %55 = arith.addf %48, %54 : vector<2x7x7x128xf32>
    %56 = vector.extract_strided_slice %33 {offsets = [128, 0], sizes = [128, 64], strides = [1, 1]} : vector<512x64xbf16> to vector<128x64xbf16>
    %c3 = arith.constant 3 : index
    %c0_27 = arith.constant 0 : index
    %c0_28 = arith.constant 0 : index
    %57 = vector.load %arg5[%c3, %c0_27, %c0_28] : memref<16x64x128xbf16, #tpu.memory_space<vmem>>, vector<1x64x128xbf16>
    %58 = vector.shape_cast %57 : vector<1x64x128xbf16> to vector<64x128xbf16>
    %cst_29 = arith.constant dense<0.000000e+00> : vector<128x128xf32>
    %59 = tpu.matmul %56, %58, %cst_29 {dimension_numbers = #tpu.dot_dimension_numbers<[1], [0], [0], [1], [0, 0, 1, 1], [], []>} : vector<128x64xbf16>, vector<64x128xbf16>, vector<128x128xf32> -> vector<128x128xf32>
    %60 = vector.shape_cast %59 : vector<128x128xf32> to vector<2x8x8x128xf32>
    %61 = vector.extract_strided_slice %60 {offsets = [0, 0, 1, 0], sizes = [2, 7, 7, 128], strides = [1, 1, 1, 1]} : vector<2x8x8x128xf32> to vector<2x7x7x128xf32>
    %62 = arith.addf %55, %61 : vector<2x7x7x128xf32>
    %63 = vector.extract_strided_slice %33 {offsets = [256, 0], sizes = [128, 64], strides = [1, 1]} : vector<512x64xbf16> to vector<128x64xbf16>
    %c4 = arith.constant 4 : index
    %c0_30 = arith.constant 0 : index
    %c0_31 = arith.constant 0 : index
    %64 = vector.load %arg5[%c4, %c0_30, %c0_31] : memref<16x64x128xbf16, #tpu.memory_space<vmem>>, vector<1x64x128xbf16>
    %65 = vector.shape_cast %64 : vector<1x64x128xbf16> to vector<64x128xbf16>
    %cst_32 = arith.constant dense<0.000000e+00> : vector<128x128xf32>
    %66 = tpu.matmul %63, %65, %cst_32 {dimension_numbers = #tpu.dot_dimension_numbers<[1], [0], [0], [1], [0, 0, 1, 1], [], []>} : vector<128x64xbf16>, vector<64x128xbf16>, vector<128x128xf32> -> vector<128x128xf32>
    %67 = vector.shape_cast %66 : vector<128x128xf32> to vector<2x8x8x128xf32>
    %68 = vector.extract_strided_slice %67 {offsets = [0, 0, 0, 0], sizes = [2, 7, 7, 128], strides = [1, 1, 1, 1]} : vector<2x8x8x128xf32> to vector<2x7x7x128xf32>
    %69 = arith.addf %62, %68 : vector<2x7x7x128xf32>
    %70 = vector.extract_strided_slice %33 {offsets = [384, 0], sizes = [128, 64], strides = [1, 1]} : vector<512x64xbf16> to vector<128x64xbf16>
    %c5 = arith.constant 5 : index
    %c0_33 = arith.constant 0 : index
    %c0_34 = arith.constant 0 : index
    %71 = vector.load %arg5[%c5, %c0_33, %c0_34] : memref<16x64x128xbf16, #tpu.memory_space<vmem>>, vector<1x64x128xbf16>
    %72 = vector.shape_cast %71 : vector<1x64x128xbf16> to vector<64x128xbf16>
    %cst_35 = arith.constant dense<0.000000e+00> : vector<128x128xf32>
    %73 = tpu.matmul %70, %72, %cst_35 {dimension_numbers = #tpu.dot_dimension_numbers<[1], [0], [0], [1], [0, 0, 1, 1], [], []>} : vector<128x64xbf16>, vector<64x128xbf16>, vector<128x128xf32> -> vector<128x128xf32>
    %74 = vector.shape_cast %73 : vector<128x128xf32> to vector<2x8x8x128xf32>
    %75 = vector.extract_strided_slice %74 {offsets = [0, 0, 0, 0], sizes = [2, 7, 7, 128], strides = [1, 1, 1, 1]} : vector<2x8x8x128xf32> to vector<2x7x7x128xf32>
    %76 = arith.addf %69, %75 : vector<2x7x7x128xf32>
    %77 = vector.extract_strided_slice %33 {offsets = [256, 0], sizes = [128, 64], strides = [1, 1]} : vector<512x64xbf16> to vector<128x64xbf16>
    %c6 = arith.constant 6 : index
    %c0_36 = arith.constant 0 : index
    %c0_37 = arith.constant 0 : index
    %78 = vector.load %arg5[%c6, %c0_36, %c0_37] : memref<16x64x128xbf16, #tpu.memory_space<vmem>>, vector<1x64x128xbf16>
    %79 = vector.shape_cast %78 : vector<1x64x128xbf16> to vector<64x128xbf16>
    %cst_38 = arith.constant dense<0.000000e+00> : vector<128x128xf32>
    %80 = tpu.matmul %77, %79, %cst_38 {dimension_numbers = #tpu.dot_dimension_numbers<[1], [0], [0], [1], [0, 0, 1, 1], [], []>} : vector<128x64xbf16>, vector<64x128xbf16>, vector<128x128xf32> -> vector<128x128xf32>
    %81 = vector.shape_cast %80 : vector<128x128xf32> to vector<2x8x8x128xf32>
    %82 = vector.extract_strided_slice %81 {offsets = [0, 0, 1, 0], sizes = [2, 7, 7, 128], strides = [1, 1, 1, 1]} : vector<2x8x8x128xf32> to vector<2x7x7x128xf32>
    %83 = arith.addf %76, %82 : vector<2x7x7x128xf32>
    %84 = vector.extract_strided_slice %33 {offsets = [384, 0], sizes = [128, 64], strides = [1, 1]} : vector<512x64xbf16> to vector<128x64xbf16>
    %c7 = arith.constant 7 : index
    %c0_39 = arith.constant 0 : index
    %c0_40 = arith.constant 0 : index
    %85 = vector.load %arg5[%c7, %c0_39, %c0_40] : memref<16x64x128xbf16, #tpu.memory_space<vmem>>, vector<1x64x128xbf16>
    %86 = vector.shape_cast %85 : vector<1x64x128xbf16> to vector<64x128xbf16>
    %cst_41 = arith.constant dense<0.000000e+00> : vector<128x128xf32>
    %87 = tpu.matmul %84, %86, %cst_41 {dimension_numbers = #tpu.dot_dimension_numbers<[1], [0], [0], [1], [0, 0, 1, 1], [], []>} : vector<128x64xbf16>, vector<64x128xbf16>, vector<128x128xf32> -> vector<128x128xf32>
    %88 = vector.shape_cast %87 : vector<128x128xf32> to vector<2x8x8x128xf32>
    %89 = vector.extract_strided_slice %88 {offsets = [0, 0, 1, 0], sizes = [2, 7, 7, 128], strides = [1, 1, 1, 1]} : vector<2x8x8x128xf32> to vector<2x7x7x128xf32>
    %90 = arith.addf %83, %89 : vector<2x7x7x128xf32>
    %91 = vector.extract_strided_slice %33 {offsets = [0, 0], sizes = [128, 64], strides = [1, 1]} : vector<512x64xbf16> to vector<128x64xbf16>
    %c8 = arith.constant 8 : index
    %c0_42 = arith.constant 0 : index
    %c0_43 = arith.constant 0 : index
    %92 = vector.load %arg5[%c8, %c0_42, %c0_43] : memref<16x64x128xbf16, #tpu.memory_space<vmem>>, vector<1x64x128xbf16>
    %93 = vector.shape_cast %92 : vector<1x64x128xbf16> to vector<64x128xbf16>
    %cst_44 = arith.constant dense<0.000000e+00> : vector<128x128xf32>
    %94 = tpu.matmul %91, %93, %cst_44 {dimension_numbers = #tpu.dot_dimension_numbers<[1], [0], [0], [1], [0, 0, 1, 1], [], []>} : vector<128x64xbf16>, vector<64x128xbf16>, vector<128x128xf32> -> vector<128x128xf32>
    %95 = vector.shape_cast %94 : vector<128x128xf32> to vector<2x8x8x128xf32>
    %96 = vector.extract_strided_slice %95 {offsets = [0, 1, 0, 0], sizes = [2, 7, 7, 128], strides = [1, 1, 1, 1]} : vector<2x8x8x128xf32> to vector<2x7x7x128xf32>
    %97 = arith.addf %90, %96 : vector<2x7x7x128xf32>
    %98 = vector.extract_strided_slice %33 {offsets = [128, 0], sizes = [128, 64], strides = [1, 1]} : vector<512x64xbf16> to vector<128x64xbf16>
    %c9 = arith.constant 9 : index
    %c0_45 = arith.constant 0 : index
    %c0_46 = arith.constant 0 : index
    %99 = vector.load %arg5[%c9, %c0_45, %c0_46] : memref<16x64x128xbf16, #tpu.memory_space<vmem>>, vector<1x64x128xbf16>
    %100 = vector.shape_cast %99 : vector<1x64x128xbf16> to vector<64x128xbf16>
    %cst_47 = arith.constant dense<0.000000e+00> : vector<128x128xf32>
    %101 = tpu.matmul %98, %100, %cst_47 {dimension_numbers = #tpu.dot_dimension_numbers<[1], [0], [0], [1], [0, 0, 1, 1], [], []>} : vector<128x64xbf16>, vector<64x128xbf16>, vector<128x128xf32> -> vector<128x128xf32>
    %102 = vector.shape_cast %101 : vector<128x128xf32> to vector<2x8x8x128xf32>
    %103 = vector.extract_strided_slice %102 {offsets = [0, 1, 0, 0], sizes = [2, 7, 7, 128], strides = [1, 1, 1, 1]} : vector<2x8x8x128xf32> to vector<2x7x7x128xf32>
    %104 = arith.addf %97, %103 : vector<2x7x7x128xf32>
    %105 = vector.extract_strided_slice %33 {offsets = [0, 0], sizes = [128, 64], strides = [1, 1]} : vector<512x64xbf16> to vector<128x64xbf16>
    %c10 = arith.constant 10 : index
    %c0_48 = arith.constant 0 : index
    %c0_49 = arith.constant 0 : index
    %106 = vector.load %arg5[%c10, %c0_48, %c0_49] : memref<16x64x128xbf16, #tpu.memory_space<vmem>>, vector<1x64x128xbf16>
    %107 = vector.shape_cast %106 : vector<1x64x128xbf16> to vector<64x128xbf16>
    %cst_50 = arith.constant dense<0.000000e+00> : vector<128x128xf32>
    %108 = tpu.matmul %105, %107, %cst_50 {dimension_numbers = #tpu.dot_dimension_numbers<[1], [0], [0], [1], [0, 0, 1, 1], [], []>} : vector<128x64xbf16>, vector<64x128xbf16>, vector<128x128xf32> -> vector<128x128xf32>
    %109 = vector.shape_cast %108 : vector<128x128xf32> to vector<2x8x8x128xf32>
    %110 = vector.extract_strided_slice %109 {offsets = [0, 1, 1, 0], sizes = [2, 7, 7, 128], strides = [1, 1, 1, 1]} : vector<2x8x8x128xf32> to vector<2x7x7x128xf32>
    %111 = arith.addf %104, %110 : vector<2x7x7x128xf32>
    %112 = vector.extract_strided_slice %33 {offsets = [128, 0], sizes = [128, 64], strides = [1, 1]} : vector<512x64xbf16> to vector<128x64xbf16>
    %c11 = arith.constant 11 : index
    %c0_51 = arith.constant 0 : index
    %c0_52 = arith.constant 0 : index
    %113 = vector.load %arg5[%c11, %c0_51, %c0_52] : memref<16x64x128xbf16, #tpu.memory_space<vmem>>, vector<1x64x128xbf16>
    %114 = vector.shape_cast %113 : vector<1x64x128xbf16> to vector<64x128xbf16>
    %cst_53 = arith.constant dense<0.000000e+00> : vector<128x128xf32>
    %115 = tpu.matmul %112, %114, %cst_53 {dimension_numbers = #tpu.dot_dimension_numbers<[1], [0], [0], [1], [0, 0, 1, 1], [], []>} : vector<128x64xbf16>, vector<64x128xbf16>, vector<128x128xf32> -> vector<128x128xf32>
    %116 = vector.shape_cast %115 : vector<128x128xf32> to vector<2x8x8x128xf32>
    %117 = vector.extract_strided_slice %116 {offsets = [0, 1, 1, 0], sizes = [2, 7, 7, 128], strides = [1, 1, 1, 1]} : vector<2x8x8x128xf32> to vector<2x7x7x128xf32>
    %118 = arith.addf %111, %117 : vector<2x7x7x128xf32>
    %119 = vector.extract_strided_slice %33 {offsets = [256, 0], sizes = [128, 64], strides = [1, 1]} : vector<512x64xbf16> to vector<128x64xbf16>
    %c12 = arith.constant 12 : index
    %c0_54 = arith.constant 0 : index
    %c0_55 = arith.constant 0 : index
    %120 = vector.load %arg5[%c12, %c0_54, %c0_55] : memref<16x64x128xbf16, #tpu.memory_space<vmem>>, vector<1x64x128xbf16>
    %121 = vector.shape_cast %120 : vector<1x64x128xbf16> to vector<64x128xbf16>
    %cst_56 = arith.constant dense<0.000000e+00> : vector<128x128xf32>
    %122 = tpu.matmul %119, %121, %cst_56 {dimension_numbers = #tpu.dot_dimension_numbers<[1], [0], [0], [1], [0, 0, 1, 1], [], []>} : vector<128x64xbf16>, vector<64x128xbf16>, vector<128x128xf32> -> vector<128x128xf32>
    %123 = vector.shape_cast %122 : vector<128x128xf32> to vector<2x8x8x128xf32>
    %124 = vector.extract_strided_slice %123 {offsets = [0, 1, 0, 0], sizes = [2, 7, 7, 128], strides = [1, 1, 1, 1]} : vector<2x8x8x128xf32> to vector<2x7x7x128xf32>
    %125 = arith.addf %118, %124 : vector<2x7x7x128xf32>
    %126 = vector.extract_strided_slice %33 {offsets = [384, 0], sizes = [128, 64], strides = [1, 1]} : vector<512x64xbf16> to vector<128x64xbf16>
    %c13 = arith.constant 13 : index
    %c0_57 = arith.constant 0 : index
    %c0_58 = arith.constant 0 : index
    %127 = vector.load %arg5[%c13, %c0_57, %c0_58] : memref<16x64x128xbf16, #tpu.memory_space<vmem>>, vector<1x64x128xbf16>
    %128 = vector.shape_cast %127 : vector<1x64x128xbf16> to vector<64x128xbf16>
    %cst_59 = arith.constant dense<0.000000e+00> : vector<128x128xf32>
    %129 = tpu.matmul %126, %128, %cst_59 {dimension_numbers = #tpu.dot_dimension_numbers<[1], [0], [0], [1], [0, 0, 1, 1], [], []>} : vector<128x64xbf16>, vector<64x128xbf16>, vector<128x128xf32> -> vector<128x128xf32>
    %130 = vector.shape_cast %129 : vector<128x128xf32> to vector<2x8x8x128xf32>
    %131 = vector.extract_strided_slice %130 {offsets = [0, 1, 0, 0], sizes = [2, 7, 7, 128], strides = [1, 1, 1, 1]} : vector<2x8x8x128xf32> to vector<2x7x7x128xf32>
    %132 = arith.addf %125, %131 : vector<2x7x7x128xf32>
    %133 = vector.extract_strided_slice %33 {offsets = [256, 0], sizes = [128, 64], strides = [1, 1]} : vector<512x64xbf16> to vector<128x64xbf16>
    %c14 = arith.constant 14 : index
    %c0_60 = arith.constant 0 : index
    %c0_61 = arith.constant 0 : index
    %134 = vector.load %arg5[%c14, %c0_60, %c0_61] : memref<16x64x128xbf16, #tpu.memory_space<vmem>>, vector<1x64x128xbf16>
    %135 = vector.shape_cast %134 : vector<1x64x128xbf16> to vector<64x128xbf16>
    %cst_62 = arith.constant dense<0.000000e+00> : vector<128x128xf32>
    %136 = tpu.matmul %133, %135, %cst_62 {dimension_numbers = #tpu.dot_dimension_numbers<[1], [0], [0], [1], [0, 0, 1, 1], [], []>} : vector<128x64xbf16>, vector<64x128xbf16>, vector<128x128xf32> -> vector<128x128xf32>
    %137 = vector.shape_cast %136 : vector<128x128xf32> to vector<2x8x8x128xf32>
    %138 = vector.extract_strided_slice %137 {offsets = [0, 1, 1, 0], sizes = [2, 7, 7, 128], strides = [1, 1, 1, 1]} : vector<2x8x8x128xf32> to vector<2x7x7x128xf32>
    %139 = arith.addf %132, %138 : vector<2x7x7x128xf32>
    %140 = vector.extract_strided_slice %33 {offsets = [384, 0], sizes = [128, 64], strides = [1, 1]} : vector<512x64xbf16> to vector<128x64xbf16>
    %c15 = arith.constant 15 : index
    %c0_63 = arith.constant 0 : index
    %c0_64 = arith.constant 0 : index
    %141 = vector.load %arg5[%c15, %c0_63, %c0_64] : memref<16x64x128xbf16, #tpu.memory_space<vmem>>, vector<1x64x128xbf16>
    %142 = vector.shape_cast %141 : vector<1x64x128xbf16> to vector<64x128xbf16>
    %cst_65 = arith.constant dense<0.000000e+00> : vector<128x128xf32>
    %143 = tpu.matmul %140, %142, %cst_65 {dimension_numbers = #tpu.dot_dimension_numbers<[1], [0], [0], [1], [0, 0, 1, 1], [], []>} : vector<128x64xbf16>, vector<64x128xbf16>, vector<128x128xf32> -> vector<128x128xf32>
    %144 = vector.shape_cast %143 : vector<128x128xf32> to vector<2x8x8x128xf32>
    %145 = vector.extract_strided_slice %144 {offsets = [0, 1, 1, 0], sizes = [2, 7, 7, 128], strides = [1, 1, 1, 1]} : vector<2x8x8x128xf32> to vector<2x7x7x128xf32>
    %146 = arith.addf %139, %145 : vector<2x7x7x128xf32>
    %cst_66 = arith.constant dense<0.000000e+00> : vector<7x7x128xf32>
    %147 = vector.multi_reduction <add>, %146, %cst_66 [0] : vector<2x7x7x128xf32> to vector<7x7x128xf32>
    %148 = vector.shape_cast %147 : vector<7x7x128xf32> to vector<1x7x7x128xf32>
    %cst_67 = arith.constant dense<0.000000e+00> : vector<1x7x128xf32>
    %149 = vector.multi_reduction <add>, %148, %cst_67 [1] : vector<1x7x7x128xf32> to vector<1x7x128xf32>
    %150 = vector.shape_cast %149 : vector<1x7x128xf32> to vector<1x1x7x128xf32>
    %cst_68 = arith.constant dense<0.000000e+00> : vector<1x1x128xf32>
    %151 = vector.multi_reduction <add>, %150, %cst_68 [2] : vector<1x1x7x128xf32> to vector<1x1x128xf32>
    %152 = vector.shape_cast %151 : vector<1x1x128xf32> to vector<1x1x1x128xf32>
    %cst_69 = arith.constant 0.0102040814 : f32
    %153 = vector.broadcast %cst_69 : f32 to vector<1x1x1x128xf32>
    %154 = arith.mulf %152, %153 : vector<1x1x1x128xf32>
    %155 = arith.mulf %146, %146 : vector<2x7x7x128xf32>
    %cst_70 = arith.constant dense<0.000000e+00> : vector<7x7x128xf32>
    %156 = vector.multi_reduction <add>, %155, %cst_70 [0] : vector<2x7x7x128xf32> to vector<7x7x128xf32>
    %157 = vector.shape_cast %156 : vector<7x7x128xf32> to vector<1x7x7x128xf32>
    %cst_71 = arith.constant dense<0.000000e+00> : vector<1x7x128xf32>
    %158 = vector.multi_reduction <add>, %157, %cst_71 [1] : vector<1x7x7x128xf32> to vector<1x7x128xf32>
    %159 = vector.shape_cast %158 : vector<1x7x128xf32> to vector<1x1x7x128xf32>
    %cst_72 = arith.constant dense<0.000000e+00> : vector<1x1x128xf32>
    %160 = vector.multi_reduction <add>, %159, %cst_72 [2] : vector<1x1x7x128xf32> to vector<1x1x128xf32>
    %161 = vector.shape_cast %160 : vector<1x1x128xf32> to vector<1x1x1x128xf32>
    %cst_73 = arith.constant 0.0102040814 : f32
    %162 = vector.broadcast %cst_73 : f32 to vector<1x1x1x128xf32>
    %163 = arith.mulf %161, %162 : vector<1x1x1x128xf32>
    %164 = arith.mulf %154, %154 : vector<1x1x1x128xf32>
    %165 = arith.subf %163, %164 : vector<1x1x1x128xf32>
    %cst_74 = arith.constant 0.000000e+00 : f32
    %166 = vector.broadcast %cst_74 : f32 to vector<1x1x1x128xf32>
    %167 = arith.maximumf %165, %166 : vector<1x1x1x128xf32>
    %c0_75 = arith.constant 0 : index
    %c0_76 = arith.constant 0 : index
    %c0_77 = arith.constant 0 : index
    %c0_78 = arith.constant 0 : index
    %168 = vector.load %arg6[%c0_75, %c0_76, %c0_77, %c0_78] : memref<1x1x1x128xf32, #tpu.memory_space<vmem>>, vector<1x1x1x128xf32>
    %cst_79 = arith.constant 9.99999974E-6 : f32
    %169 = vector.broadcast %cst_79 : f32 to vector<1x1x1x128xf32>
    %170 = arith.addf %167, %169 : vector<1x1x1x128xf32>
    %171 = math.rsqrt %170 : vector<1x1x1x128xf32>
    %172 = arith.mulf %168, %171 : vector<1x1x1x128xf32>
    %c0_80 = arith.constant 0 : index
    %c0_81 = arith.constant 0 : index
    %c0_82 = arith.constant 0 : index
    %c0_83 = arith.constant 0 : index
    %173 = vector.load %arg7[%c0_80, %c0_81, %c0_82, %c0_83] : memref<1x1x1x128xf32, #tpu.memory_space<vmem>>, vector<1x1x1x128xf32>
    %174 = arith.mulf %154, %172 : vector<1x1x1x128xf32>
    %175 = arith.subf %173, %174 : vector<1x1x1x128xf32>
    %176 = vector.broadcast %172 : vector<1x1x1x128xf32> to vector<2x7x7x128xf32>
    %177 = arith.mulf %146, %176 : vector<2x7x7x128xf32>
    %178 = vector.broadcast %175 : vector<1x1x1x128xf32> to vector<2x7x7x128xf32>
    %179 = arith.addf %177, %178 : vector<2x7x7x128xf32>
    %cst_84 = arith.constant 0.000000e+00 : f32
    %180 = vector.broadcast %cst_84 : f32 to vector<2x7x7x128xf32>
    %181 = arith.maximumf %179, %180 : vector<2x7x7x128xf32>
    %c0_85 = arith.constant 0 : index
    %c0_86 = arith.constant 0 : index
    %c0_87 = arith.constant 0 : index
    %c0_88 = arith.constant 0 : index
    %182 = vector.load %arg8[%c0_85, %c0_86, %c0_87, %c0_88] : memref<1x7x7x128xf32, #tpu.memory_space<vmem>>, vector<1x7x7x128xf32>
    %183 = vector.broadcast %182 : vector<1x7x7x128xf32> to vector<2x7x7x128xf32>
    %184 = arith.mulf %181, %183 : vector<2x7x7x128xf32>
    %cst_89 = arith.constant dense<0.000000e+00> : vector<2x7x7xf32>
    %185 = vector.multi_reduction <add>, %184, %cst_89 [3] : vector<2x7x7x128xf32> to vector<2x7x7xf32>
    %186 = vector.shape_cast %185 : vector<2x7x7xf32> to vector<2x7x7x1xf32>
    %cst_90 = arith.constant dense<0.000000e+00> : vector<2x7x1xf32>
    %187 = vector.multi_reduction <add>, %186, %cst_90 [2] : vector<2x7x7x1xf32> to vector<2x7x1xf32>
    %188 = vector.shape_cast %187 : vector<2x7x1xf32> to vector<2x7x1x1xf32>
    %cst_91 = arith.constant dense<0.000000e+00> : vector<2x1x1xf32>
    %189 = vector.multi_reduction <add>, %188, %cst_91 [1] : vector<2x7x1x1xf32> to vector<2x1x1xf32>
    %190 = vector.shape_cast %189 : vector<2x1x1xf32> to vector<2x1x1x1xf32>
    %c0_92 = arith.constant 0 : index
    %c0_93 = arith.constant 0 : index
    %c0_94 = arith.constant 0 : index
    %c0_95 = arith.constant 0 : index
    %191 = vector.load %arg9[%c0_92, %c0_93, %c0_94, %c0_95] : memref<1x1x1x1xf32, #tpu.memory_space<vmem>>, vector<1x1x1x1xf32>
    %192 = vector.broadcast %191 : vector<1x1x1x1xf32> to vector<2x1x1x1xf32>
    %193 = arith.addf %190, %192 : vector<2x1x1x1xf32>
    %194 = arith.negf %193 : vector<2x1x1x1xf32>
    %195 = math.exp %194 : vector<2x1x1x1xf32>
    %cst_96 = arith.constant 1.000000e+00 : f32
    %196 = vector.broadcast %cst_96 : f32 to vector<2x1x1x1xf32>
    %197 = arith.addf %196, %195 : vector<2x1x1x1xf32>
    %198 = arith.divf %196, %197 : vector<2x1x1x1xf32>
    %c0_97 = arith.constant 0 : index
    %c0_98 = arith.constant 0 : index
    %c0_99 = arith.constant 0 : index
    %c0_100 = arith.constant 0 : index
    %199 = vector.load %arg10[%c0_97, %c0_98, %c0_99, %c0_100] : memref<2x1x1x1xf32, #tpu.memory_space<vmem>>, vector<2x1x1x1xf32>
    tpu.vector_store %arg10[%c0_97, %c0_98, %c0_99, %c0_100], %198 {strides = array<i32>} : memref<2x1x1x1xf32, #tpu.memory_space<vmem>>, vector<2x1x1x1xf32>,
    return
  }
}

</mosaic_0001>

<llo_original>
// kernel: discriminator_forward.1
$region0: #{discriminator_forward.1}
  #allocation0 [shape = 'u32[]', space=smem, size = 0x4, offset = 0x4, fixed_abs, tag = 'smem constant byte address 0x4 - core index']
  #allocation1 [shape = 'u32[144,128]{1,0:T(1,128)}', space=vmem, size = 0x12000, scoped, tag = 'internal scratch']
  #allocation2 [shape = 'f32[1,1,1,1]{3,2,1,0:T(1,128)S(1)}', space=vmem, size = 0x200, scoped, tag = 'scoped memory for discriminator_forward.1']
  %s0 = inlined_call_operand.vmem [shape: bf16[512,16], index: 0, kind: input, shape index: {}]
  %s1 = inlined_call_operand.vmem [shape: f32[512,1], index: 1, kind: input, shape index: {}]
  %s2 = inlined_call_operand.vmem [shape: bf16[16,64], index: 2, kind: input, shape index: {}]
  %s3 = inlined_call_operand.vmem [shape: f32[1,64], index: 3, kind: input, shape index: {}]
  %s4 = inlined_call_operand.vmem [shape: f32[1,64], index: 4, kind: input, shape index: {}]
  %s5 = inlined_call_operand.vmem [shape: bf16[16,64,128], index: 5, kind: input, shape index: {}]
  %s6 = inlined_call_operand.vmem [shape: f32[1,1,1,128], index: 6, kind: input, shape index: {}]
  %s7 = inlined_call_operand.vmem [shape: f32[1,1,1,128], index: 7, kind: input, shape index: {}]
  %s8 = inlined_call_operand.vmem [shape: f32[1,7,7,128], index: 8, kind: input, shape index: {}]
  %s9 = inlined_call_operand.<no memory space> [shape: f32[1,1,1,1], index: 9, kind: input, shape index: {}]
  %s10 = inlined_call_operand.vmem [shape: f32[2,1,1,1], index: 10, kind: output, shape index: {}]
  %s11 = sld [smem:[#allocation0]]
  $region50: #{discriminator_forward.1} parent=0
    _
  %s13 = ssub.s32 1, %s11
  %s14 = scalar_select 0, %s13, %s11
  %v15 = vstv %s9
  %16 = vst [vmem:[#allocation2] sm:$0x1] %v15
  // Predicated region
  $region2: #{discriminator_forward.1} parent=0 // pred_check
    _
  $region3: #{discriminator_forward.1} parent=0 // pred_check_branch
    %18 = sbr.rel (0) target = $region5
  $region4: #{discriminator_forward.1} parent=0 // pred_region
    _
  $region5: #{discriminator_forward.1} parent=0 // pred_fallthru
    _
  // Predicated region
  $region6: #{discriminator_forward.1} parent=0 // pred_check
    _
  $region7: #{discriminator_forward.1} parent=0 // pred_check_branch
    %20 = sbr.rel (0) target = $region9
  $region8: #{discriminator_forward.1} parent=0 // pred_region
    _
  $region9: #{discriminator_forward.1} parent=0 // pred_fallthru
    _
  // Predicated region
  $region10: #{discriminator_forward.1} parent=0 // pred_check
    _
  $region11: #{discriminator_forward.1} parent=0 // pred_check_branch
    %22 = sbr.rel (0) target = $region13
  $region12: #{discriminator_forward.1} parent=0 // pred_region
    _
  $region13: #{discriminator_forward.1} parent=0 // pred_fallthru
    _
  // Predicated region
  $region14: #{discriminator_forward.1} parent=0 // pred_check
    _
  $region15: #{discriminator_forward.1} parent=0 // pred_check_branch
    %24 = sbr.rel (0) target = $region17
  $region16: #{discriminator_forward.1} parent=0 // pred_region
    _
  $region17: #{discriminator_forward.1} parent=0 // pred_fallthru
    _
  // Predicated region
  $region18: #{discriminator_forward.1} parent=0 // pred_check
    _
  $region19: #{discriminator_forward.1} parent=0 // pred_check_branch
    %26 = sbr.rel (0) target = $region21
  $region20: #{discriminator_forward.1} parent=0 // pred_region
    _
  $region21: #{discriminator_forward.1} parent=0 // pred_fallthru
    _
  // Predicated region
  $region22: #{discriminator_forward.1} parent=0 // pred_check
    _
  $region23: #{discriminator_forward.1} parent=0 // pred_check_branch
    %28 = sbr.rel (0) target = $region25
  $region24: #{discriminator_forward.1} parent=0 // pred_region
    _
  $region25: #{discriminator_forward.1} parent=0 // pred_fallthru
    _
  // Predicated region
  $region26: #{discriminator_forward.1} parent=0 // pred_check
    _
  $region27: #{discriminator_forward.1} parent=0 // pred_check_branch
    %30 = sbr.rel (0) target = $region29
  $region28: #{discriminator_forward.1} parent=0 // pred_region
    _
  $region29: #{discriminator_forward.1} parent=0 // pred_fallthru
    _
  // Predicated region
  $region30: #{discriminator_forward.1} parent=0 // pred_check
    _
  $region31: #{discriminator_forward.1} parent=0 // pred_check_branch
    %32 = sbr.rel (0) target = $region33
  $region32: #{discriminator_forward.1} parent=0 // pred_region
    _
  $region33: #{discriminator_forward.1} parent=0 // pred_fallthru
    _
  // Predicated region
  $region34: #{discriminator_forward.1} parent=0 // pred_check
    _
  $region35: #{discriminator_forward.1} parent=0 // pred_check_branch
    %34 = sbr.rel (0) target = $region37
  $region36: #{discriminator_forward.1} parent=0 // pred_region
    _
  $region37: #{discriminator_forward.1} parent=0 // pred_fallthru
    _
  // Predicated region
  $region38: #{discriminator_forward.1} parent=0 // pred_check
    _
  $region39: #{discriminator_forward.1} parent=0 // pred_check_branch
    %36 = sbr.rel (0) target = $region41
  $region40: #{discriminator_forward.1} parent=0 // pred_region
    _
  $region41: #{discriminator_forward.1} parent=0 // pred_fallthru
    _
  %v38 = vld [vmem:[%s0] sm:$0xf]
  %v39 = vld [vmem:[%s0 + $0x4] sm:$0xf]
  %v40 = vld [vmem:[%s0 + $0x8] sm:$0xf]
  %v41 = vld [vmem:[%s0 + $0xc] sm:$0xf]
  %v42 = vld [vmem:[%s0 + $0x10] sm:$0xf]
  %v43 = vld [vmem:[%s0 + $0x14] sm:$0xf]
  %v44 = vld [vmem:[%s0 + $0x18] sm:$0xf]
  %v45 = vld [vmem:[%s0 + $0x1c] sm:$0xf]
  %v46 = vld [vmem:[%s0 + $0x20] sm:$0xf]
  %v47 = vld [vmem:[%s0 + $0x24] sm:$0xf]
  %v48 = vld [vmem:[%s0 + $0x28] sm:$0xf]
  %v49 = vld [vmem:[%s0 + $0x2c] sm:$0xf]
  %v50 = vld [vmem:[%s0 + $0x30] sm:$0xf]
  %v51 = vld [vmem:[%s0 + $0x34] sm:$0xf]
  %v52 = vld [vmem:[%s0 + $0x38] sm:$0xf]
  %v53 = vld [vmem:[%s0 + $0x3c] sm:$0xf]
  %v54 = vld [vmem:[%s0 + $0x40] sm:$0xf]
  %v55 = vld [vmem:[%s0 + $0x44] sm:$0xf]
  %v56 = vld [vmem:[%s0 + $0x48] sm:$0xf]
  %v57 = vld [vmem:[%s0 + $0x4c] sm:$0xf]
  %v58 = vld [vmem:[%s0 + $0x50] sm:$0xf]
  %v59 = vld [vmem:[%s0 + $0x54] sm:$0xf]
  %v60 = vld [vmem:[%s0 + $0x58] sm:$0xf]
  %v61 = vld [vmem:[%s0 + $0x5c] sm:$0xf]
  %v62 = vld [vmem:[%s0 + $0x60] sm:$0xf]
  %v63 = vld [vmem:[%s0 + $0x64] sm:$0xf]
  %v64 = vld [vmem:[%s0 + $0x68] sm:$0xf]
  %v65 = vld [vmem:[%s0 + $0x6c] sm:$0xf]
  %v66 = vld [vmem:[%s0 + $0x70] sm:$0xf]
  %v67 = vld [vmem:[%s0 + $0x74] sm:$0xf]
  %v68 = vld [vmem:[%s0 + $0x78] sm:$0xf]
  %v69 = vld [vmem:[%s0 + $0x7c] sm:$0xf]
  %v70 = vld [vmem:[%s0 + $0x80] sm:$0xf]
  %v71 = vld [vmem:[%s0 + $0x84] sm:$0xf]
  %v72 = vld [vmem:[%s0 + $0x88] sm:$0xf]
  %v73 = vld [vmem:[%s0 + $0x8c] sm:$0xf]
  %v74 = vld [vmem:[%s0 + $0x90] sm:$0xf]
  %v75 = vld [vmem:[%s0 + $0x94] sm:$0xf]
  %v76 = vld [vmem:[%s0 + $0x98] sm:$0xf]
  %v77 = vld [vmem:[%s0 + $0x9c] sm:$0xf]
  %v78 = vld [vmem:[%s0 + $0xa0] sm:$0xf]
  %v79 = vld [vmem:[%s0 + $0xa4] sm:$0xf]
  %v80 = vld [vmem:[%s0 + $0xa8] sm:$0xf]
  %v81 = vld [vmem:[%s0 + $0xac] sm:$0xf]
  %v82 = vld [vmem:[%s0 + $0xb0] sm:$0xf]
  %v83 = vld [vmem:[%s0 + $0xb4] sm:$0xf]
  %v84 = vld [vmem:[%s0 + $0xb8] sm:$0xf]
  %v85 = vld [vmem:[%s0 + $0xbc] sm:$0xf]
  %v86 = vld [vmem:[%s0 + $0xc0] sm:$0xf]
  %v87 = vld [vmem:[%s0 + $0xc4] sm:$0xf]
  %v88 = vld [vmem:[%s0 + $0xc8] sm:$0xf]
  %v89 = vld [vmem:[%s0 + $0xcc] sm:$0xf]
  %v90 = vld [vmem:[%s0 + $0xd0] sm:$0xf]
  %v91 = vld [vmem:[%s0 + $0xd4] sm:$0xf]
  %v92 = vld [vmem:[%s0 + $0xd8] sm:$0xf]
  %v93 = vld [vmem:[%s0 + $0xdc] sm:$0xf]
  %v94 = vld [vmem:[%s0 + $0xe0] sm:$0xf]
  %v95 = vld [vmem:[%s0 + $0xe4] sm:$0xf]
  %v96 = vld [vmem:[%s0 + $0xe8] sm:$0xf]
  %v97 = vld [vmem:[%s0 + $0xec] sm:$0xf]
  %v98 = vld [vmem:[%s0 + $0xf0] sm:$0xf]
  %v99 = vld [vmem:[%s0 + $0xf4] sm:$0xf]
  %v100 = vld [vmem:[%s0 + $0xf8] sm:$0xf]
  %v101 = vld [vmem:[%s0 + $0xfc] sm:$0xf]
  %v102 = vld [vmem:[%s2] sm:$0xf]
  %v103 = vld [vmem:[%s2 + $0x4] sm:$0xf]
  %v168 = vunpack.c.l.b16 %v38
  %v169 = vunpack.c.l.b16 %v39
  %v170 = vunpack.c.l.b16 %v40
  %v171 = vunpack.c.l.b16 %v41
  %v172 = vunpack.c.l.b16 %v42
  %v173 = vunpack.c.l.b16 %v43
  %v174 = vunpack.c.l.b16 %v44
  %v175 = vunpack.c.l.b16 %v45
  %v176 = vunpack.c.l.b16 %v46
  %v177 = vunpack.c.l.b16 %v47
  %v178 = vunpack.c.l.b16 %v48
  %v179 = vunpack.c.l.b16 %v49
  %v180 = vunpack.c.l.b16 %v50
  %v181 = vunpack.c.l.b16 %v51
  %v182 = vunpack.c.l.b16 %v52
  %v183 = vunpack.c.l.b16 %v53
  %v184 = vunpack.c.l.b16 %v54
  %v185 = vunpack.c.l.b16 %v55
  %v186 = vunpack.c.l.b16 %v56
  %v187 = vunpack.c.l.b16 %v57
  %v188 = vunpack.c.l.b16 %v58
  %v189 = vunpack.c.l.b16 %v59
  %v190 = vunpack.c.l.b16 %v60
  %v191 = vunpack.c.l.b16 %v61
  %v192 = vunpack.c.l.b16 %v62
  %v193 = vunpack.c.l.b16 %v63
  %v194 = vunpack.c.l.b16 %v64
  %v195 = vunpack.c.l.b16 %v65
  %v196 = vunpack.c.l.b16 %v66
  %v197 = vunpack.c.l.b16 %v67
  %v198 = vunpack.c.l.b16 %v68
  %v199 = vunpack.c.l.b16 %v69
  %v200 = vunpack.c.l.b16 %v70
  %v201 = vunpack.c.l.b16 %v71
  %v202 = vunpack.c.l.b16 %v72
  %v203 = vunpack.c.l.b16 %v73
  %v204 = vunpack.c.l.b16 %v74
  %v205 = vunpack.c.l.b16 %v75
  %v206 = vunpack.c.l.b16 %v76
  %v207 = vunpack.c.l.b16 %v77
  %v208 = vunpack.c.l.b16 %v78
  %v209 = vunpack.c.l.b16 %v79
  %v210 = vunpack.c.l.b16 %v80
  %v211 = vunpack.c.l.b16 %v81
  %v212 = vunpack.c.l.b16 %v82
  %v213 = vunpack.c.l.b16 %v83
  %v214 = vunpack.c.l.b16 %v84
  %v215 = vunpack.c.l.b16 %v85
  %v216 = vunpack.c.l.b16 %v86
  %v217 = vunpack.c.l.b16 %v87
  %v218 = vunpack.c.l.b16 %v88
  %v219 = vunpack.c.l.b16 %v89
  %v220 = vunpack.c.l.b16 %v90
  %v221 = vunpack.c.l.b16 %v91
  %v222 = vunpack.c.l.b16 %v92
  %v223 = vunpack.c.l.b16 %v93
  %v224 = vunpack.c.l.b16 %v94
  %v225 = vunpack.c.l.b16 %v95
  %v226 = vunpack.c.l.b16 %v96
  %v227 = vunpack.c.l.b16 %v97
  %v228 = vunpack.c.l.b16 %v98
  %v229 = vunpack.c.l.b16 %v99
  %v230 = vunpack.c.l.b16 %v100
  %v231 = vunpack.c.l.b16 %v101
  %v232 = vpack.c.b16 %v169, %v168
  %v233 = vpack.c.b16 %v171, %v170
  %v234 = vpack.c.b16 %v173, %v172
  %v235 = vpack.c.b16 %v175, %v174
  %v236 = vpack.c.b16 %v177, %v176
  %v237 = vpack.c.b16 %v179, %v178
  %v238 = vpack.c.b16 %v181, %v180
  %v239 = vpack.c.b16 %v183, %v182
  %v240 = vpack.c.b16 %v185, %v184
  %v241 = vpack.c.b16 %v187, %v186
  %v242 = vpack.c.b16 %v189, %v188
  %v243 = vpack.c.b16 %v191, %v190
  %v244 = vpack.c.b16 %v193, %v192
  %v245 = vpack.c.b16 %v195, %v194
  %v246 = vpack.c.b16 %v197, %v196
  %v247 = vpack.c.b16 %v199, %v198
  %v248 = vpack.c.b16 %v201, %v200
  %v249 = vpack.c.b16 %v203, %v202
  %v250 = vpack.c.b16 %v205, %v204
  %v251 = vpack.c.b16 %v207, %v206
  %v252 = vpack.c.b16 %v209, %v208
  %v253 = vpack.c.b16 %v211, %v210
  %v254 = vpack.c.b16 %v213, %v212
  %v255 = vpack.c.b16 %v215, %v214
  %v256 = vpack.c.b16 %v217, %v216
  %v257 = vpack.c.b16 %v219, %v218
  %v258 = vpack.c.b16 %v221, %v220
  %v259 = vpack.c.b16 %v223, %v222
  %v260 = vpack.c.b16 %v225, %v224
  %v261 = vpack.c.b16 %v227, %v226
  %v262 = vpack.c.b16 %v229, %v228
  %v263 = vpack.c.b16 %v231, %v230
  %v266 = vunpack.c.l.b16 %v102
  %v267 = vunpack.c.l.b16 %v103
  %v268 = vpack.c.b16 %v267, %v266
  %vm270 = vcmask 130048
  %v272 = vsel %vm270, %v232, 0
  %v275 = vsel %vm270, %v233, 0
  %v278 = vsel %vm270, %v234, 0
  %v281 = vsel %vm270, %v235, 0
  %v284 = vsel %vm270, %v236, 0
  %v287 = vsel %vm270, %v237, 0
  %v290 = vsel %vm270, %v238, 0
  %v293 = vsel %vm270, %v239, 0
  %v296 = vsel %vm270, %v240, 0
  %v299 = vsel %vm270, %v241, 0
  %v302 = vsel %vm270, %v242, 0
  %v305 = vsel %vm270, %v243, 0
  %v308 = vsel %vm270, %v244, 0
  %v311 = vsel %vm270, %v245, 0
  %v314 = vsel %vm270, %v246, 0
  %v317 = vsel %vm270, %v247, 0
  %v320 = vsel %vm270, %v248, 0
  %v323 = vsel %vm270, %v249, 0
  %v326 = vsel %vm270, %v250, 0
  %v329 = vsel %vm270, %v251, 0
  %v332 = vsel %vm270, %v252, 0
  %v335 = vsel %vm270, %v253, 0
  %v338 = vsel %vm270, %v254, 0
  %v341 = vsel %vm270, %v255, 0
  %v344 = vsel %vm270, %v256, 0
  %v347 = vsel %vm270, %v257, 0
  %v350 = vsel %vm270, %v258, 0
  %v353 = vsel %vm270, %v259, 0
  %v356 = vsel %vm270, %v260, 0
  %v359 = vsel %vm270, %v261, 0
  %v362 = vsel %vm270, %v262, 0
  %v365 = vsel %vm270, %v263, 0
  %367 = vmatprep.subr.bf16.mxu0 0
  %368 = vmatpush1.bf16.msra.mxu0 0
  %369 = vmatprep.subr.bf16.mxu0 0
  %370 = vmatpush1.bf16.msra.mxu0 0
  %371 = vmatprep.subr.bf16.mxu0 0
  %372 = vmatpush1.bf16.msra.mxu0 0
  %373 = vmatprep.subr.bf16.mxu0 0
  %374 = vmatpush1.bf16.msra.mxu0 0
  %375 = vmatprep.subr.bf16.mxu0 0
  %376 = vmatpush1.bf16.msra.mxu0 0
  %377 = vmatprep.subr.bf16.mxu0 0
  %378 = vmatpush1.bf16.msra.mxu0 0
  %379 = vmatprep.subr.bf16.mxu0 0
  %380 = vmatpush1.bf16.msra.mxu0 0
  %381 = vmatprep.subr.bf16.mxu0 0
  %382 = vmatpush1.bf16.msra.mxu0 %v268
  %383 = vmatprep.subr.bf16.mxu0 0
  %384 = vmatpush2.bf16.msra.mxu0 0
  %385 = vmatprep.subr.bf16.mxu0 0
  %386 = vmatpush2.bf16.msra.mxu0 0
  %387 = vmatprep.subr.bf16.mxu0 0
  %388 = vmatpush2.bf16.msra.mxu0 0
  %389 = vmatprep.subr.bf16.mxu0 0
  %390 = vmatpush2.bf16.msra.mxu0 0
  %391 = vmatprep.subr.bf16.mxu0 0
  %392 = vmatpush2.bf16.msra.mxu0 0
  %393 = vmatprep.subr.bf16.mxu0 0
  %394 = vmatpush2.bf16.msra.mxu0 0
  %395 = vmatprep.subr.bf16.mxu0 0
  %396 = vmatpush2.bf16.msra.mxu0 0
  %397 = vmatprep.subr.bf16.mxu0 0
  %398 = vmatpush2.bf16.msra.mxu0 0
  %399 = vmatprep.mubr.bf16.mxu0 0
  %400 = vmatmul.mubr.bf16.gmra.mxu0 %v272
  %v401 = vpop.f32.mrf.mxu0
  %v402 = vadd.f32 0.0, %v401
  %v403 = vpop.f32.mrf.mxu0
  %v404 = vpop.f32.mrf.mxu0
  %v405 = vadd.f32 0.0, %v404
  %v406 = vpop.f32.mrf.mxu0
  %407 = vmatprep.mubr.bf16.mxu0 0
  %408 = vmatmul.mubr.bf16.gmra.mxu0 %v275
  %v409 = vpop.f32.mrf.mxu0
  %v410 = vadd.f32 0.0, %v409
  %v411 = vpop.f32.mrf.mxu0
  %v412 = vpop.f32.mrf.mxu0
  %v413 = vadd.f32 0.0, %v412
  %v414 = vpop.f32.mrf.mxu0
  %415 = vmatprep.mubr.bf16.mxu0 0
  %416 = vmatmul.mubr.bf16.gmra.mxu0 %v278
  %v417 = vpop.f32.mrf.mxu0
  %v418 = vadd.f32 0.0, %v417
  %v419 = vpop.f32.mrf.mxu0
  %v420 = vpop.f32.mrf.mxu0
  %v421 = vadd.f32 0.0, %v420
  %v422 = vpop.f32.mrf.mxu0
  %423 = vmatprep.mubr.bf16.mxu0 0
  %424 = vmatmul.mubr.bf16.gmra.mxu0 %v281
  %v425 = vpop.f32.mrf.mxu0
  %v426 = vadd.f32 0.0, %v425
  %v427 = vpop.f32.mrf.mxu0
  %v428 = vpop.f32.mrf.mxu0
  %v429 = vadd.f32 0.0, %v428
  %v430 = vpop.f32.mrf.mxu0
  %431 = vmatprep.mubr.bf16.mxu0 0
  %432 = vmatmul.mubr.bf16.gmra.mxu0 %v284
  %v433 = vpop.f32.mrf.mxu0
  %v434 = vadd.f32 0.0, %v433
  %v435 = vpop.f32.mrf.mxu0
  %v436 = vpop.f32.mrf.mxu0
  %v437 = vadd.f32 0.0, %v436
  %v438 = vpop.f32.mrf.mxu0
  %439 = vmatprep.mubr.bf16.mxu0 0
  %440 = vmatmul.mubr.bf16.gmra.mxu0 %v287
  %v441 = vpop.f32.mrf.mxu0
  %v442 = vadd.f32 0.0, %v441
  %v443 = vpop.f32.mrf.mxu0
  %v444 = vpop.f32.mrf.mxu0
  %v445 = vadd.f32 0.0, %v444
  %v446 = vpop.f32.mrf.mxu0
  %447 = vmatprep.mubr.bf16.mxu0 0
  %448 = vmatmul.mubr.bf16.gmra.mxu0 %v290
  %v449 = vpop.f32.mrf.mxu0
  %v450 = vadd.f32 0.0, %v449
  %v451 = vpop.f32.mrf.mxu0
  %v452 = vpop.f32.mrf.mxu0
  %v453 = vadd.f32 0.0, %v452
  %v454 = vpop.f32.mrf.mxu0
  %455 = vmatprep.mubr.bf16.mxu0 0
  %456 = vmatmul.mubr.bf16.gmra.mxu0 %v293
  %v457 = vpop.f32.mrf.mxu0
  %v458 = vadd.f32 0.0, %v457
  %v459 = vpop.f32.mrf.mxu0
  %v460 = vpop.f32.mrf.mxu0
  %v461 = vadd.f32 0.0, %v460
  %v462 = vpop.f32.mrf.mxu0
  %463 = vmatprep.mubr.bf16.mxu0 0
  %464 = vmatmul.mubr.bf16.gmra.mxu0 %v296
  %v465 = vpop.f32.mrf.mxu0
  %v466 = vadd.f32 0.0, %v465
  %v467 = vpop.f32.mrf.mxu0
  %v468 = vpop.f32.mrf.mxu0
  %v469 = vadd.f32 0.0, %v468
  %v470 = vpop.f32.mrf.mxu0
  %471 = vmatprep.mubr.bf16.mxu0 0
  %472 = vmatmul.mubr.bf16.gmra.mxu0 %v299
  %v473 = vpop.f32.mrf.mxu0
  %v474 = vadd.f32 0.0, %v473
  %v475 = vpop.f32.mrf.mxu0
  %v476 = vpop.f32.mrf.mxu0
  %v477 = vadd.f32 0.0, %v476
  %v478 = vpop.f32.mrf.mxu0
  %479 = vmatprep.mubr.bf16.mxu0 0
  %480 = vmatmul.mubr.bf16.gmra.mxu0 %v302
  %v481 = vpop.f32.mrf.mxu0
  %v482 = vadd.f32 0.0, %v481
  %v483 = vpop.f32.mrf.mxu0
  %v484 = vpop.f32.mrf.mxu0
  %v485 = vadd.f32 0.0, %v484
  %v486 = vpop.f32.mrf.mxu0
  %487 = vmatprep.mubr.bf16.mxu0 0
  %488 = vmatmul.mubr.bf16.gmra.mxu0 %v305
  %v489 = vpop.f32.mrf.mxu0
  %v490 = vadd.f32 0.0, %v489
  %v491 = vpop.f32.mrf.mxu0
  %v492 = vpop.f32.mrf.mxu0
  %v493 = vadd.f32 0.0, %v492
  %v494 = vpop.f32.mrf.mxu0
  %495 = vmatprep.mubr.bf16.mxu0 0
  %496 = vmatmul.mubr.bf16.gmra.mxu0 %v308
  %v497 = vpop.f32.mrf.mxu0
  %v498 = vadd.f32 0.0, %v497
  %v499 = vpop.f32.mrf.mxu0
  %v500 = vpop.f32.mrf.mxu0
  %v501 = vadd.f32 0.0, %v500
  %v502 = vpop.f32.mrf.mxu0
  %503 = vmatprep.mubr.bf16.mxu0 0
  %504 = vmatmul.mubr.bf16.gmra.mxu0 %v311
  %v505 = vpop.f32.mrf.mxu0
  %v506 = vadd.f32 0.0, %v505
  %v507 = vpop.f32.mrf.mxu0
  %v508 = vpop.f32.mrf.mxu0
  %v509 = vadd.f32 0.0, %v508
  %v510 = vpop.f32.mrf.mxu0
  %511 = vmatprep.mubr.bf16.mxu0 0
  %512 = vmatmul.mubr.bf16.gmra.mxu0 %v314
  %v513 = vpop.f32.mrf.mxu0
  %v514 = vadd.f32 0.0, %v513
  %v515 = vpop.f32.mrf.mxu0
  %v516 = vpop.f32.mrf.mxu0
  %v517 = vadd.f32 0.0, %v516
  %v518 = vpop.f32.mrf.mxu0
  %519 = vmatprep.mubr.bf16.mxu0 0
  %520 = vmatmul.mubr.bf16.gmra.mxu0 %v317
  %v521 = vpop.f32.mrf.mxu0
  %v522 = vadd.f32 0.0, %v521
  %v523 = vpop.f32.mrf.mxu0
  %v524 = vpop.f32.mrf.mxu0
  %v525 = vadd.f32 0.0, %v524
  %v526 = vpop.f32.mrf.mxu0
  %527 = vmatprep.mubr.bf16.mxu0 0
  %528 = vmatmul.mubr.bf16.gmra.mxu0 %v320
  %v529 = vpop.f32.mrf.mxu0
  %v530 = vadd.f32 0.0, %v529
  %v531 = vpop.f32.mrf.mxu0
  %v532 = vpop.f32.mrf.mxu0
  %v533 = vadd.f32 0.0, %v532
  %v534 = vpop.f32.mrf.mxu0
  %535 = vmatprep.mubr.bf16.mxu0 0
  %536 = vmatmul.mubr.bf16.gmra.mxu0 %v323
  %v537 = vpop.f32.mrf.mxu0
  %v538 = vadd.f32 0.0, %v537
  %v539 = vpop.f32.mrf.mxu0
  %v540 = vpop.f32.mrf.mxu0
  %v541 = vadd.f32 0.0, %v540
  %v542 = vpop.f32.mrf.mxu0
  %543 = vmatprep.mubr.bf16.mxu0 0
  %544 = vmatmul.mubr.bf16.gmra.mxu0 %v326
  %v545 = vpop.f32.mrf.mxu0
  %v546 = vadd.f32 0.0, %v545
  %v547 = vpop.f32.mrf.mxu0
  %v548 = vpop.f32.mrf.mxu0
  %v549 = vadd.f32 0.0, %v548
  %v550 = vpop.f32.mrf.mxu0
  %551 = vmatprep.mubr.bf16.mxu0 0
  %552 = vmatmul.mubr.bf16.gmra.mxu0 %v329
  %v553 = vpop.f32.mrf.mxu0
  %v554 = vadd.f32 0.0, %v553
  %v555 = vpop.f32.mrf.mxu0
  %v556 = vpop.f32.mrf.mxu0
  %v557 = vadd.f32 0.0, %v556
  %v558 = vpop.f32.mrf.mxu0
  %559 = vmatprep.mubr.bf16.mxu0 0
  %560 = vmatmul.mubr.bf16.gmra.mxu0 %v332
  %v561 = vpop.f32.mrf.mxu0
  %v562 = vadd.f32 0.0, %v561
  %v563 = vpop.f32.mrf.mxu0
  %v564 = vpop.f32.mrf.mxu0
  %v565 = vadd.f32 0.0, %v564
  %v566 = vpop.f32.mrf.mxu0
  %567 = vmatprep.mubr.bf16.mxu0 0
  %568 = vmatmul.mubr.bf16.gmra.mxu0 %v335
  %v569 = vpop.f32.mrf.mxu0
  %v570 = vadd.f32 0.0, %v569
  %v571 = vpop.f32.mrf.mxu0
  %v572 = vpop.f32.mrf.mxu0
  %v573 = vadd.f32 0.0, %v572
  %v574 = vpop.f32.mrf.mxu0
  %575 = vmatprep.mubr.bf16.mxu0 0
  %576 = vmatmul.mubr.bf16.gmra.mxu0 %v338
  %v577 = vpop.f32.mrf.mxu0
  %v578 = vadd.f32 0.0, %v577
  %v579 = vpop.f32.mrf.mxu0
  %v580 = vpop.f32.mrf.mxu0
  %v581 = vadd.f32 0.0, %v580
  %v582 = vpop.f32.mrf.mxu0
  %583 = vmatprep.mubr.bf16.mxu0 0
  %584 = vmatmul.mubr.bf16.gmra.mxu0 %v341
  %v585 = vpop.f32.mrf.mxu0
  %v586 = vadd.f32 0.0, %v585
  %v587 = vpop.f32.mrf.mxu0
  %v588 = vpop.f32.mrf.mxu0
  %v589 = vadd.f32 0.0, %v588
  %v590 = vpop.f32.mrf.mxu0
  %591 = vmatprep.mubr.bf16.mxu0 0
  %592 = vmatmul.mubr.bf16.gmra.mxu0 %v344
  %v593 = vpop.f32.mrf.mxu0
  %v594 = vadd.f32 0.0, %v593
  %v595 = vpop.f32.mrf.mxu0
  %v596 = vpop.f32.mrf.mxu0
  %v597 = vadd.f32 0.0, %v596
  %v598 = vpop.f32.mrf.mxu0
  %599 = vmatprep.mubr.bf16.mxu0 0
  %600 = vmatmul.mubr.bf16.gmra.mxu0 %v347
  %v601 = vpop.f32.mrf.mxu0
  %v602 = vadd.f32 0.0, %v601
  %v603 = vpop.f32.mrf.mxu0
  %v604 = vpop.f32.mrf.mxu0
  %v605 = vadd.f32 0.0, %v604
  %v606 = vpop.f32.mrf.mxu0
  %607 = vmatprep.mubr.bf16.mxu0 0
  %608 = vmatmul.mubr.bf16.gmra.mxu0 %v350
  %v609 = vpop.f32.mrf.mxu0
  %v610 = vadd.f32 0.0, %v609
  %v611 = vpop.f32.mrf.mxu0
  %v612 = vpop.f32.mrf.mxu0
  %v613 = vadd.f32 0.0, %v612
  %v614 = vpop.f32.mrf.mxu0
  %615 = vmatprep.mubr.bf16.mxu0 0
  %616 = vmatmul.mubr.bf16.gmra.mxu0 %v353
  %v617 = vpop.f32.mrf.mxu0
  %v618 = vadd.f32 0.0, %v617
  %v619 = vpop.f32.mrf.mxu0
  %v620 = vpop.f32.mrf.mxu0
  %v621 = vadd.f32 0.0, %v620
  %v622 = vpop.f32.mrf.mxu0
  %623 = vmatprep.mubr.bf16.mxu0 0
  %624 = vmatmul.mubr.bf16.gmra.mxu0 %v356
  %v625 = vpop.f32.mrf.mxu0
  %v626 = vadd.f32 0.0, %v625
  %v627 = vpop.f32.mrf.mxu0
  %v628 = vpop.f32.mrf.mxu0
  %v629 = vadd.f32 0.0, %v628
  %v630 = vpop.f32.mrf.mxu0
  %631 = vmatprep.mubr.bf16.mxu0 0
  %632 = vmatmul.mubr.bf16.gmra.mxu0 %v359
  %v633 = vpop.f32.mrf.mxu0
  %v634 = vadd.f32 0.0, %v633
  %v635 = vpop.f32.mrf.mxu0
  %v636 = vpop.f32.mrf.mxu0
  %v637 = vadd.f32 0.0, %v636
  %v638 = vpop.f32.mrf.mxu0
  %639 = vmatprep.mubr.bf16.mxu0 0
  %640 = vmatmul.mubr.bf16.gmra.mxu0 %v362
  %v641 = vpop.f32.mrf.mxu0
  %v642 = vadd.f32 0.0, %v641
  %v643 = vpop.f32.mrf.mxu0
  %v644 = vpop.f32.mrf.mxu0
  %v645 = vadd.f32 0.0, %v644
  %v646 = vpop.f32.mrf.mxu0
  %647 = vmatprep.mubr.bf16.mxu0 0
  %648 = vmatmul.mubr.bf16.gmra.mxu0 %v365
  %v649 = vpop.f32.mrf.mxu0
  %v650 = vadd.f32 0.0, %v649
  %v651 = vpop.f32.mrf.mxu0
  %v652 = vpop.f32.mrf.mxu0
  %v653 = vadd.f32 0.0, %v652
  %v654 = vpop.f32.mrf.mxu0
  %655 = vdwg.mxu0
  %vm656 = vcmask 523264
  %v657 = vsel %vm656, %v402, 0.0
  %v658 = vsel %vm656, %v405, 0.0
  %v659 = vadd.f32 %v657, %v658
  %v660 = vsel %vm656, %v410, 0.0
  %v661 = vadd.f32 %v659, %v660
  %v662 = vsel %vm656, %v413, 0.0
  %v663 = vadd.f32 %v661, %v662
  %v664 = vsel %vm656, %v418, 0.0
  %v665 = vadd.f32 %v663, %v664
  %v666 = vsel %vm656, %v421, 0.0
  %v667 = vadd.f32 %v665, %v666
  %v668 = vsel %vm656, %v426, 0.0
  %v669 = vadd.f32 %v667, %v668
  %v670 = vsel %vm656, %v429, 0.0
  %v671 = vadd.f32 %v669, %v670
  %v672 = vsel %vm656, %v434, 0.0
  %v673 = vadd.f32 %v671, %v672
  %v674 = vsel %vm656, %v437, 0.0
  %v675 = vadd.f32 %v673, %v674
  %v676 = vsel %vm656, %v442, 0.0
  %v677 = vadd.f32 %v675, %v676
  %v678 = vsel %vm656, %v445, 0.0
  %v679 = vadd.f32 %v677, %v678
  %v680 = vsel %vm656, %v450, 0.0
  %v681 = vadd.f32 %v679, %v680
  %v682 = vsel %vm656, %v453, 0.0
  %v683 = vadd.f32 %v681, %v682
  %v684 = vsel %vm656, %v458, 0.0
  %v685 = vadd.f32 %v683, %v684
  %v686 = vsel %vm656, %v461, 0.0
  %v687 = vadd.f32 %v685, %v686
  %v688 = vsel %vm656, %v466, 0.0
  %v689 = vadd.f32 %v687, %v688
  %v690 = vsel %vm656, %v469, 0.0
  %v691 = vadd.f32 %v689, %v690
  %v692 = vsel %vm656, %v474, 0.0
  %v693 = vadd.f32 %v691, %v692
  %v694 = vsel %vm656, %v477, 0.0
  %v695 = vadd.f32 %v693, %v694
  %v696 = vsel %vm656, %v482, 0.0
  %v697 = vadd.f32 %v695, %v696
  %v698 = vsel %vm656, %v485, 0.0
  %v699 = vadd.f32 %v697, %v698
  %v700 = vsel %vm656, %v490, 0.0
  %v701 = vadd.f32 %v699, %v700
  %v702 = vsel %vm656, %v493, 0.0
  %v703 = vadd.f32 %v701, %v702
  %v704 = vsel %vm656, %v498, 0.0
  %v705 = vadd.f32 %v703, %v704
  %v706 = vsel %vm656, %v501, 0.0
  %v707 = vadd.f32 %v705, %v706
  %v708 = vsel %vm656, %v506, 0.0
  %v709 = vadd.f32 %v707, %v708
  %v710 = vsel %vm656, %v509, 0.0
  %v711 = vadd.f32 %v709, %v710
  %v712 = vsel %vm656, %v514, 0.0
  %v713 = vadd.f32 %v711, %v712
  %v714 = vsel %vm656, %v517, 0.0
  %v715 = vadd.f32 %v713, %v714
  %v716 = vsel %vm656, %v522, 0.0
  %v717 = vadd.f32 %v715, %v716
  %v718 = vsel %vm656, %v525, 0.0
  %v719 = vadd.f32 %v717, %v718
  %v720 = vsel %vm656, %v530, 0.0
  %v721 = vadd.f32 %v719, %v720
  %v722 = vsel %vm656, %v533, 0.0
  %v723 = vadd.f32 %v721, %v722
  %v724 = vsel %vm656, %v538, 0.0
  %v725 = vadd.f32 %v723, %v724
  %v726 = vsel %vm656, %v541, 0.0
  %v727 = vadd.f32 %v725, %v726
  %v728 = vsel %vm656, %v546, 0.0
  %v729 = vadd.f32 %v727, %v728
  %v730 = vsel %vm656, %v549, 0.0
  %v731 = vadd.f32 %v729, %v730
  %v732 = vsel %vm656, %v554, 0.0
  %v733 = vadd.f32 %v731, %v732
  %v734 = vsel %vm656, %v557, 0.0
  %v735 = vadd.f32 %v733, %v734
  %v736 = vsel %vm656, %v562, 0.0
  %v737 = vadd.f32 %v735, %v736
  %v738 = vsel %vm656, %v565, 0.0
  %v739 = vadd.f32 %v737, %v738
  %v740 = vsel %vm656, %v570, 0.0
  %v741 = vadd.f32 %v739, %v740
  %v742 = vsel %vm656, %v573, 0.0
  %v743 = vadd.f32 %v741, %v742
  %v744 = vsel %vm656, %v578, 0.0
  %v745 = vadd.f32 %v743, %v744
  %v746 = vsel %vm656, %v581, 0.0
  %v747 = vadd.f32 %v745, %v746
  %v748 = vsel %vm656, %v586, 0.0
  %v749 = vadd.f32 %v747, %v748
  %v750 = vsel %vm656, %v589, 0.0
  %v751 = vadd.f32 %v749, %v750
  %v752 = vsel %vm656, %v594, 0.0
  %v753 = vadd.f32 %v751, %v752
  %v754 = vsel %vm656, %v597, 0.0
  %v755 = vadd.f32 %v753, %v754
  %v756 = vsel %vm656, %v602, 0.0
  %v757 = vadd.f32 %v755, %v756
  %v758 = vsel %vm656, %v605, 0.0
  %v759 = vadd.f32 %v757, %v758
  %v760 = vsel %vm656, %v610, 0.0
  %v761 = vadd.f32 %v759, %v760
  %v762 = vsel %vm656, %v613, 0.0
  %v763 = vadd.f32 %v761, %v762
  %v764 = vsel %vm656, %v618, 0.0
  %v765 = vadd.f32 %v763, %v764
  %v766 = vsel %vm656, %v621, 0.0
  %v767 = vadd.f32 %v765, %v766
  %v768 = vsel %vm656, %v626, 0.0
  %v769 = vadd.f32 %v767, %v768
  %v770 = vsel %vm656, %v629, 0.0
  %v771 = vadd.f32 %v769, %v770
  %v772 = vsel %vm656, %v634, 0.0
  %v773 = vadd.f32 %v771, %v772
  %v774 = vsel %vm656, %v637, 0.0
  %v775 = vadd.f32 %v773, %v774
  %v776 = vsel %vm656, %v642, 0.0
  %v777 = vadd.f32 %v775, %v776
  %v778 = vsel %vm656, %v645, 0.0
  %v779 = vadd.f32 %v777, %v778
  %v780 = vsel %vm656, %v650, 0.0
  %v781 = vadd.f32 %v779, %v780
  %v782 = vsel %vm656, %v653, 0.0
  %v783 = vadd.f32 %v781, %v782
  %v784 = vrot.slane %v783, 4
  %v785 = vadd.f32 %v783, %v784
  %v786 = vrot.slane %v785, 2
  %v787 = vadd.f32 %v785, %v786
  %v788 = vrot.slane %v787, 1
  %v789 = vadd.f32 %v787, %v788
  %v790 = vmul.f32 %v789, 0.0025510204
  %v791 = vmul.f32 %v402, %v402
  %v792 = vmul.f32 %v405, %v405
  %v793 = vmul.f32 %v410, %v410
  %v794 = vmul.f32 %v413, %v413
  %v795 = vmul.f32 %v418, %v418
  %v796 = vmul.f32 %v421, %v421
  %v797 = vmul.f32 %v426, %v426
  %v798 = vmul.f32 %v429, %v429
  %v799 = vmul.f32 %v434, %v434
  %v800 = vmul.f32 %v437, %v437
  %v801 = vmul.f32 %v442, %v442
  %v802 = vmul.f32 %v445, %v445
  %v803 = vmul.f32 %v450, %v450
  %v804 = vmul.f32 %v453, %v453
  %v805 = vmul.f32 %v458, %v458
  %v806 = vmul.f32 %v461, %v461
  %v807 = vmul.f32 %v466, %v466
  %v808 = vmul.f32 %v469, %v469
  %v809 = vmul.f32 %v474, %v474
  %v810 = vmul.f32 %v477, %v477
  %v811 = vmul.f32 %v482, %v482
  %v812 = vmul.f32 %v485, %v485
  %v813 = vmul.f32 %v490, %v490
  %v814 = vmul.f32 %v493, %v493
  %v815 = vmul.f32 %v498, %v498
  %v816 = vmul.f32 %v501, %v501
  %v817 = vmul.f32 %v506, %v506
  %v818 = vmul.f32 %v509, %v509
  %v819 = vmul.f32 %v514, %v514
  %v820 = vmul.f32 %v517, %v517
  %v821 = vmul.f32 %v522, %v522
  %v822 = vmul.f32 %v525, %v525
  %v823 = vmul.f32 %v530, %v530
  %v824 = vmul.f32 %v533, %v533
  %v825 = vmul.f32 %v538, %v538
  %v826 = vmul.f32 %v541, %v541
  %v827 = vmul.f32 %v546, %v546
  %v828 = vmul.f32 %v549, %v549
  %v829 = vmul.f32 %v554, %v554
  %v830 = vmul.f32 %v557, %v557
  %v831 = vmul.f32 %v562, %v562
  %v832 = vmul.f32 %v565, %v565
  %v833 = vmul.f32 %v570, %v570
  %v834 = vmul.f32 %v573, %v573
  %v835 = vmul.f32 %v578, %v578
  %v836 = vmul.f32 %v581, %v581
  %v837 = vmul.f32 %v586, %v586
  %v838 = vmul.f32 %v589, %v589
  %v839 = vmul.f32 %v594, %v594
  %v840 = vmul.f32 %v597, %v597
  %v841 = vmul.f32 %v602, %v602
  %v842 = vmul.f32 %v605, %v605
  %v843 = vmul.f32 %v610, %v610
  %v844 = vmul.f32 %v613, %v613
  %v845 = vmul.f32 %v618, %v618
  %v846 = vmul.f32 %v621, %v621
  %v847 = vmul.f32 %v626, %v626
  %v848 = vmul.f32 %v629, %v629
  %v849 = vmul.f32 %v634, %v634
  %v850 = vmul.f32 %v637, %v637
  %v851 = vmul.f32 %v642, %v642
  %v852 = vmul.f32 %v645, %v645
  %v853 = vmul.f32 %v650, %v650
  %v854 = vmul.f32 %v653, %v653
  %v855 = vsel %vm656, %v791, 0.0
  %v856 = vsel %vm656, %v792, 0.0
  %v857 = vadd.f32 %v855, %v856
  %v858 = vsel %vm656, %v793, 0.0
  %v859 = vadd.f32 %v857, %v858
  %v860 = vsel %vm656, %v794, 0.0
  %v861 = vadd.f32 %v859, %v860
  %v862 = vsel %vm656, %v795, 0.0
  %v863 = vadd.f32 %v861, %v862
  %v864 = vsel %vm656, %v796, 0.0
  %v865 = vadd.f32 %v863, %v864
  %v866 = vsel %vm656, %v797, 0.0
  %v867 = vadd.f32 %v865, %v866
  %v868 = vsel %vm656, %v798, 0.0
  %v869 = vadd.f32 %v867, %v868
  %v870 = vsel %vm656, %v799, 0.0
  %v871 = vadd.f32 %v869, %v870
  %v872 = vsel %vm656, %v800, 0.0
  %v873 = vadd.f32 %v871, %v872
  %v874 = vsel %vm656, %v801, 0.0
  %v875 = vadd.f32 %v873, %v874
  %v876 = vsel %vm656, %v802, 0.0
  %v877 = vadd.f32 %v875, %v876
  %v878 = vsel %vm656, %v803, 0.0
  %v879 = vadd.f32 %v877, %v878
  %v880 = vsel %vm656, %v804, 0.0
  %v881 = vadd.f32 %v879, %v880
  %v882 = vsel %vm656, %v805, 0.0
  %v883 = vadd.f32 %v881, %v882
  %v884 = vsel %vm656, %v806, 0.0
  %v885 = vadd.f32 %v883, %v884
  %v886 = vsel %vm656, %v807, 0.0
  %v887 = vadd.f32 %v885, %v886
  %v888 = vsel %vm656, %v808, 0.0
  %v889 = vadd.f32 %v887, %v888
  %v890 = vsel %vm656, %v809, 0.0
  %v891 = vadd.f32 %v889, %v890
  %v892 = vsel %vm656, %v810, 0.0
  %v893 = vadd.f32 %v891, %v892
  %v894 = vsel %vm656, %v811, 0.0
  %v895 = vadd.f32 %v893, %v894
  %v896 = vsel %vm656, %v812, 0.0
  %v897 = vadd.f32 %v895, %v896
  %v898 = vsel %vm656, %v813, 0.0
  %v899 = vadd.f32 %v897, %v898
  %v900 = vsel %vm656, %v814, 0.0
  %v901 = vadd.f32 %v899, %v900
  %v902 = vsel %vm656, %v815, 0.0
  %v903 = vadd.f32 %v901, %v902
  %v904 = vsel %vm656, %v816, 0.0
  %v905 = vadd.f32 %v903, %v904
  %v906 = vsel %vm656, %v817, 0.0
  %v907 = vadd.f32 %v905, %v906
  %v908 = vsel %vm656, %v818, 0.0
  %v909 = vadd.f32 %v907, %v908
  %v910 = vsel %vm656, %v819, 0.0
  %v911 = vadd.f32 %v909, %v910
  %v912 = vsel %vm656, %v820, 0.0
  %v913 = vadd.f32 %v911, %v912
  %v914 = vsel %vm656, %v821, 0.0
  %v915 = vadd.f32 %v913, %v914
  %v916 = vsel %vm656, %v822, 0.0
  %v917 = vadd.f32 %v915, %v916
  %v918 = vsel %vm656, %v823, 0.0
  %v919 = vadd.f32 %v917, %v918
  %v920 = vsel %vm656, %v824, 0.0
  %v921 = vadd.f32 %v919, %v920
  %v922 = vsel %vm656, %v825, 0.0
  %v923 = vadd.f32 %v921, %v922
  %v924 = vsel %vm656, %v826, 0.0
  %v925 = vadd.f32 %v923, %v924
  %v926 = vsel %vm656, %v827, 0.0
  %v927 = vadd.f32 %v925, %v926
  %v928 = vsel %vm656, %v828, 0.0
  %v929 = vadd.f32 %v927, %v928
  %v930 = vsel %vm656, %v829, 0.0
  %v931 = vadd.f32 %v929, %v930
  %v932 = vsel %vm656, %v830, 0.0
  %v933 = vadd.f32 %v931, %v932
  %v934 = vsel %vm656, %v831, 0.0
  %v935 = vadd.f32 %v933, %v934
  %v936 = vsel %vm656, %v832, 0.0
  %v937 = vadd.f32 %v935, %v936
  %v938 = vsel %vm656, %v833, 0.0
  %v939 = vadd.f32 %v937, %v938
  %v940 = vsel %vm656, %v834, 0.0
  %v941 = vadd.f32 %v939, %v940
  %v942 = vsel %vm656, %v835, 0.0
  %v943 = vadd.f32 %v941, %v942
  %v944 = vsel %vm656, %v836, 0.0
  %v945 = vadd.f32 %v943, %v944
  %v946 = vsel %vm656, %v837, 0.0
  %v947 = vadd.f32 %v945, %v946
  %v948 = vsel %vm656, %v838, 0.0
  %v949 = vadd.f32 %v947, %v948
  %v950 = vsel %vm656, %v839, 0.0
  %v951 = vadd.f32 %v949, %v950
  %v952 = vsel %vm656, %v840, 0.0
  %v953 = vadd.f32 %v951, %v952
  %v954 = vsel %vm656, %v841, 0.0
  %v955 = vadd.f32 %v953, %v954
  %v956 = vsel %vm656, %v842, 0.0
  %v957 = vadd.f32 %v955, %v956
  %v958 = vsel %vm656, %v843, 0.0
  %v959 = vadd.f32 %v957, %v958
  %v960 = vsel %vm656, %v844, 0.0
  %v961 = vadd.f32 %v959, %v960
  %v962 = vsel %vm656, %v845, 0.0
  %v963 = vadd.f32 %v961, %v962
  %v964 = vsel %vm656, %v846, 0.0
  %v965 = vadd.f32 %v963, %v964
  %v966 = vsel %vm656, %v847, 0.0
  %v967 = vadd.f32 %v965, %v966
  %v968 = vsel %vm656, %v848, 0.0
  %v969 = vadd.f32 %v967, %v968
  %v970 = vsel %vm656, %v849, 0.0
  %v971 = vadd.f32 %v969, %v970
  %v972 = vsel %vm656, %v850, 0.0
  %v973 = vadd.f32 %v971, %v972
  %v974 = vsel %vm656, %v851, 0.0
  %v975 = vadd.f32 %v973, %v974
  %v976 = vsel %vm656, %v852, 0.0
  %v977 = vadd.f32 %v975, %v976
  %v978 = vsel %vm656, %v853, 0.0
  %v979 = vadd.f32 %v977, %v978
  %v980 = vsel %vm656, %v854, 0.0
  %v981 = vadd.f32 %v979, %v980
  %v982 = vrot.slane %v981, 4
  %v983 = vadd.f32 %v981, %v982
  %v984 = vrot.slane %v983, 2
  %v985 = vadd.f32 %v983, %v984
  %v986 = vrot.slane %v985, 1
  %v987 = vadd.f32 %v985, %v986
  %v988 = vmul.f32 %v987, 0.0025510204
  %v989 = vmul.f32 %v790, %v790
  %v990 = vsub.f32 %v988, %v989
  %v991 = vmax.f32 %v990, 0.0
  %v992 = vld [vmem:[%s3] sm:$0x1]
  %v993 = vadd.f32 %v991, 1e-05
  %v994 = vrsqrt.pop %v993
  %v995 = vmul.f32 %v992, %v994
  %v996 = vld [vmem:[%s4] sm:$0x1]
  %v997 = vmul.f32 %v790, %v995
  %v998 = vsub.f32 %v996, %v997
  %v1000 = vlaneseq
  %v1001 = vshrl.u32 %v1000, 7
  %v1002 = vsub.s32 0, %v1001
  %v1003 = vrot.slane %v995, %v1002
  %v1005 = vmul.f32 %v402, %v1003
  %v1006 = vmul.f32 %v405, %v1003
  %v1007 = vmul.f32 %v410, %v1003
  %v1008 = vmul.f32 %v413, %v1003
  %v1009 = vmul.f32 %v418, %v1003
  %v1010 = vmul.f32 %v421, %v1003
  %v1011 = vmul.f32 %v426, %v1003
  %v1012 = vmul.f32 %v429, %v1003
  %v1013 = vmul.f32 %v434, %v1003
  %v1014 = vmul.f32 %v437, %v1003
  %v1015 = vmul.f32 %v442, %v1003
  %v1016 = vmul.f32 %v445, %v1003
  %v1017 = vmul.f32 %v450, %v1003
  %v1018 = vmul.f32 %v453, %v1003
  %v1019 = vmul.f32 %v458, %v1003
  %v1020 = vmul.f32 %v461, %v1003
  %v1021 = vmul.f32 %v466, %v1003
  %v1022 = vmul.f32 %v469, %v1003
  %v1023 = vmul.f32 %v474, %v1003
  %v1024 = vmul.f32 %v477, %v1003
  %v1025 = vmul.f32 %v482, %v1003
  %v1026 = vmul.f32 %v485, %v1003
  %v1027 = vmul.f32 %v490, %v1003
  %v1028 = vmul.f32 %v493, %v1003
  %v1029 = vmul.f32 %v498, %v1003
  %v1030 = vmul.f32 %v501, %v1003
  %v1031 = vmul.f32 %v506, %v1003
  %v1032 = vmul.f32 %v509, %v1003
  %v1033 = vmul.f32 %v514, %v1003
  %v1034 = vmul.f32 %v517, %v1003
  %v1035 = vmul.f32 %v522, %v1003
  %v1036 = vmul.f32 %v525, %v1003
  %v1037 = vmul.f32 %v530, %v1003
  %v1038 = vmul.f32 %v533, %v1003
  %v1039 = vmul.f32 %v538, %v1003
  %v1040 = vmul.f32 %v541, %v1003
  %v1041 = vmul.f32 %v546, %v1003
  %v1042 = vmul.f32 %v549, %v1003
  %v1043 = vmul.f32 %v554, %v1003
  %v1044 = vmul.f32 %v557, %v1003
  %v1045 = vmul.f32 %v562, %v1003
  %v1046 = vmul.f32 %v565, %v1003
  %v1047 = vmul.f32 %v570, %v1003
  %v1048 = vmul.f32 %v573, %v1003
  %v1049 = vmul.f32 %v578, %v1003
  %v1050 = vmul.f32 %v581, %v1003
  %v1051 = vmul.f32 %v586, %v1003
  %v1052 = vmul.f32 %v589, %v1003
  %v1053 = vmul.f32 %v594, %v1003
  %v1054 = vmul.f32 %v597, %v1003
  %v1055 = vmul.f32 %v602, %v1003
  %v1056 = vmul.f32 %v605, %v1003
  %v1057 = vmul.f32 %v610, %v1003
  %v1058 = vmul.f32 %v613, %v1003
  %v1059 = vmul.f32 %v618, %v1003
  %v1060 = vmul.f32 %v621, %v1003
  %v1061 = vmul.f32 %v626, %v1003
  %v1062 = vmul.f32 %v629, %v1003
  %v1063 = vmul.f32 %v634, %v1003
  %v1064 = vmul.f32 %v637, %v1003
  %v1065 = vmul.f32 %v642, %v1003
  %v1066 = vmul.f32 %v645, %v1003
  %v1067 = vmul.f32 %v650, %v1003
  %v1068 = vmul.f32 %v653, %v1003
  %v1070 = vlaneseq
  %v1071 = vshrl.u32 %v1070, 7
  %v1072 = vsub.s32 0, %v1071
  %v1073 = vrot.slane %v998, %v1072
  %v1075 = vadd.f32 %v1005, %v1073
  %v1076 = vadd.f32 %v1006, %v1073
  %v1077 = vadd.f32 %v1007, %v1073
  %v1078 = vadd.f32 %v1008, %v1073
  %v1079 = vadd.f32 %v1009, %v1073
  %v1080 = vadd.f32 %v1010, %v1073
  %v1081 = vadd.f32 %v1011, %v1073
  %v1082 = vadd.f32 %v1012, %v1073
  %v1083 = vadd.f32 %v1013, %v1073
  %v1084 = vadd.f32 %v1014, %v1073
  %v1085 = vadd.f32 %v1015, %v1073
  %v1086 = vadd.f32 %v1016, %v1073
  %v1087 = vadd.f32 %v1017, %v1073
  %v1088 = vadd.f32 %v1018, %v1073
  %v1089 = vadd.f32 %v1019, %v1073
  %v1090 = vadd.f32 %v1020, %v1073
  %v1091 = vadd.f32 %v1021, %v1073
  %v1092 = vadd.f32 %v1022, %v1073
  %v1093 = vadd.f32 %v1023, %v1073
  %v1094 = vadd.f32 %v1024, %v1073
  %v1095 = vadd.f32 %v1025, %v1073
  %v1096 = vadd.f32 %v1026, %v1073
  %v1097 = vadd.f32 %v1027, %v1073
  %v1098 = vadd.f32 %v1028, %v1073
  %v1099 = vadd.f32 %v1029, %v1073
  %v1100 = vadd.f32 %v1030, %v1073
  %v1101 = vadd.f32 %v1031, %v1073
  %v1102 = vadd.f32 %v1032, %v1073
  %v1103 = vadd.f32 %v1033, %v1073
  %v1104 = vadd.f32 %v1034, %v1073
  %v1105 = vadd.f32 %v1035, %v1073
  %v1106 = vadd.f32 %v1036, %v1073
  %v1107 = vadd.f32 %v1037, %v1073
  %v1108 = vadd.f32 %v1038, %v1073
  %v1109 = vadd.f32 %v1039, %v1073
  %v1110 = vadd.f32 %v1040, %v1073
  %v1111 = vadd.f32 %v1041, %v1073
  %v1112 = vadd.f32 %v1042, %v1073
  %v1113 = vadd.f32 %v1043, %v1073
  %v1114 = vadd.f32 %v1044, %v1073
  %v1115 = vadd.f32 %v1045, %v1073
  %v1116 = vadd.f32 %v1046, %v1073
  %v1117 = vadd.f32 %v1047, %v1073
  %v1118 = vadd.f32 %v1048, %v1073
  %v1119 = vadd.f32 %v1049, %v1073
  %v1120 = vadd.f32 %v1050, %v1073
  %v1121 = vadd.f32 %v1051, %v1073
  %v1122 = vadd.f32 %v1052, %v1073
  %v1123 = vadd.f32 %v1053, %v1073
  %v1124 = vadd.f32 %v1054, %v1073
  %v1125 = vadd.f32 %v1055, %v1073
  %v1126 = vadd.f32 %v1056, %v1073
  %v1127 = vadd.f32 %v1057, %v1073
  %v1128 = vadd.f32 %v1058, %v1073
  %v1129 = vadd.f32 %v1059, %v1073
  %v1130 = vadd.f32 %v1060, %v1073
  %v1131 = vadd.f32 %v1061, %v1073
  %v1132 = vadd.f32 %v1062, %v1073
  %v1133 = vadd.f32 %v1063, %v1073
  %v1134 = vadd.f32 %v1064, %v1073
  %v1135 = vadd.f32 %v1065, %v1073
  %v1136 = vadd.f32 %v1066, %v1073
  %v1137 = vadd.f32 %v1067, %v1073
  %v1138 = vadd.f32 %v1068, %v1073
  %v1139 = vmax.f32 %v1075, 0.0
  %v1140 = vmax.f32 %v1076, 0.0
  %v1141 = vmax.f32 %v1077, 0.0
  %v1142 = vmax.f32 %v1078, 0.0
  %v1143 = vmax.f32 %v1079, 0.0
  %v1144 = vmax.f32 %v1080, 0.0
  %v1145 = vmax.f32 %v1081, 0.0
  %v1146 = vmax.f32 %v1082, 0.0
  %v1147 = vmax.f32 %v1083, 0.0
  %v1148 = vmax.f32 %v1084, 0.0
  %v1149 = vmax.f32 %v1085, 0.0
  %v1150 = vmax.f32 %v1086, 0.0
  %v1151 = vmax.f32 %v1087, 0.0
  %v1152 = vmax.f32 %v1088, 0.0
  %v1153 = vmax.f32 %v1089, 0.0
  %v1154 = vmax.f32 %v1090, 0.0
  %v1155 = vmax.f32 %v1091, 0.0
  %v1156 = vmax.f32 %v1092, 0.0
  %v1157 = vmax.f32 %v1093, 0.0
  %v1158 = vmax.f32 %v1094, 0.0
  %v1159 = vmax.f32 %v1095, 0.0
  %v1160 = vmax.f32 %v1096, 0.0
  %v1161 = vmax.f32 %v1097, 0.0
  %v1162 = vmax.f32 %v1098, 0.0
  %v1163 = vmax.f32 %v1099, 0.0
  %v1164 = vmax.f32 %v1100, 0.0
  %v1165 = vmax.f32 %v1101, 0.0
  %v1166 = vmax.f32 %v1102, 0.0
  %v1167 = vmax.f32 %v1103, 0.0
  %v1168 = vmax.f32 %v1104, 0.0
  %v1169 = vmax.f32 %v1105, 0.0
  %v1170 = vmax.f32 %v1106, 0.0
  %v1171 = vmax.f32 %v1107, 0.0
  %v1172 = vmax.f32 %v1108, 0.0
  %v1173 = vmax.f32 %v1109, 0.0
  %v1174 = vmax.f32 %v1110, 0.0
  %v1175 = vmax.f32 %v1111, 0.0
  %v1176 = vmax.f32 %v1112, 0.0
  %v1177 = vmax.f32 %v1113, 0.0
  %v1178 = vmax.f32 %v1114, 0.0
  %v1179 = vmax.f32 %v1115, 0.0
  %v1180 = vmax.f32 %v1116, 0.0
  %v1181 = vmax.f32 %v1117, 0.0
  %v1182 = vmax.f32 %v1118, 0.0
  %v1183 = vmax.f32 %v1119, 0.0
  %v1184 = vmax.f32 %v1120, 0.0
  %v1185 = vmax.f32 %v1121, 0.0
  %v1186 = vmax.f32 %v1122, 0.0
  %v1187 = vmax.f32 %v1123, 0.0
  %v1188 = vmax.f32 %v1124, 0.0
  %v1189 = vmax.f32 %v1125, 0.0
  %v1190 = vmax.f32 %v1126, 0.0
  %v1191 = vmax.f32 %v1127, 0.0
  %v1192 = vmax.f32 %v1128, 0.0
  %v1193 = vmax.f32 %v1129, 0.0
  %v1194 = vmax.f32 %v1130, 0.0
  %v1195 = vmax.f32 %v1131, 0.0
  %v1196 = vmax.f32 %v1132, 0.0
  %v1197 = vmax.f32 %v1133, 0.0
  %v1198 = vmax.f32 %v1134, 0.0
  %v1199 = vmax.f32 %v1135, 0.0
  %v1200 = vmax.f32 %v1136, 0.0
  %v1201 = vmax.f32 %v1137, 0.0
  %v1202 = vmax.f32 %v1138, 0.0
  %v1203 = vld [vmem:[%s1] sm:$0xff]
  %v1204 = vld [vmem:[%s1 + $0x8] sm:$0xff]
  %v1205 = vld [vmem:[%s1 + $0x10] sm:$0xff]
  %v1206 = vld [vmem:[%s1 + $0x18] sm:$0xff]
  %v1207 = vld [vmem:[%s1 + $0x20] sm:$0xff]
  %v1208 = vld [vmem:[%s1 + $0x28] sm:$0xff]
  %v1209 = vld [vmem:[%s1 + $0x30] sm:$0xff]
  %v1210 = vld [vmem:[%s1 + $0x38] sm:$0xff]
  %v1211 = vld [vmem:[%s1 + $0x40] sm:$0xff]
  %v1212 = vld [vmem:[%s1 + $0x48] sm:$0xff]
  %v1213 = vld [vmem:[%s1 + $0x50] sm:$0xff]
  %v1214 = vld [vmem:[%s1 + $0x58] sm:$0xff]
  %v1215 = vld [vmem:[%s1 + $0x60] sm:$0xff]
  %v1216 = vld [vmem:[%s1 + $0x68] sm:$0xff]
  %v1217 = vld [vmem:[%s1 + $0x70] sm:$0xff]
  %v1218 = vld [vmem:[%s1 + $0x78] sm:$0xff]
  %v1219 = vld [vmem:[%s1 + $0x80] sm:$0xff]
  %v1220 = vld [vmem:[%s1 + $0x88] sm:$0xff]
  %v1221 = vld [vmem:[%s1 + $0x90] sm:$0xff]
  %v1222 = vld [vmem:[%s1 + $0x98] sm:$0xff]
  %v1223 = vld [vmem:[%s1 + $0xa0] sm:$0xff]
  %v1224 = vld [vmem:[%s1 + $0xa8] sm:$0xff]
  %v1225 = vld [vmem:[%s1 + $0xb0] sm:$0xff]
  %v1226 = vld [vmem:[%s1 + $0xb8] sm:$0xff]
  %v1227 = vld [vmem:[%s1 + $0xc0] sm:$0xff]
  %v1228 = vld [vmem:[%s1 + $0xc8] sm:$0xff]
  %v1229 = vld [vmem:[%s1 + $0xd0] sm:$0xff]
  %v1230 = vld [vmem:[%s1 + $0xd8] sm:$0xff]
  %v1231 = vld [vmem:[%s1 + $0xe0] sm:$0xff]
  %v1232 = vld [vmem:[%s1 + $0xe8] sm:$0xff]
  %v1233 = vld [vmem:[%s1 + $0xf0] sm:$0xff]
  %v1234 = vld [vmem:[%s1 + $0xf8] sm:$0xff]
  %v1235 = vld [vmem:[%s1 + $0x100] sm:$0xff]
  %v1236 = vld [vmem:[%s1 + $0x108] sm:$0xff]
  %v1237 = vld [vmem:[%s1 + $0x110] sm:$0xff]
  %v1238 = vld [vmem:[%s1 + $0x118] sm:$0xff]
  %v1239 = vld [vmem:[%s1 + $0x120] sm:$0xff]
  %v1240 = vld [vmem:[%s1 + $0x128] sm:$0xff]
  %v1241 = vld [vmem:[%s1 + $0x130] sm:$0xff]
  %v1242 = vld [vmem:[%s1 + $0x138] sm:$0xff]
  %v1243 = vld [vmem:[%s1 + $0x140] sm:$0xff]
  %v1244 = vld [vmem:[%s1 + $0x148] sm:$0xff]
  %v1245 = vld [vmem:[%s1 + $0x150] sm:$0xff]
  %v1246 = vld [vmem:[%s1 + $0x158] sm:$0xff]
  %v1247 = vld [vmem:[%s1 + $0x160] sm:$0xff]
  %v1248 = vld [vmem:[%s1 + $0x168] sm:$0xff]
  %v1249 = vld [vmem:[%s1 + $0x170] sm:$0xff]
  %v1250 = vld [vmem:[%s1 + $0x178] sm:$0xff]
  %v1251 = vld [vmem:[%s1 + $0x180] sm:$0xff]
  %v1252 = vld [vmem:[%s1 + $0x188] sm:$0xff]
  %v1253 = vld [vmem:[%s1 + $0x190] sm:$0xff]
  %v1254 = vld [vmem:[%s1 + $0x198] sm:$0xff]
  %v1255 = vld [vmem:[%s1 + $0x1a0] sm:$0xff]
  %v1256 = vld [vmem:[%s1 + $0x1a8] sm:$0xff]
  %v1257 = vld [vmem:[%s1 + $0x1b0] sm:$0xff]
  %v1258 = vld [vmem:[%s1 + $0x1b8] sm:$0xff]
  %v1259 = vld [vmem:[%s1 + $0x1c0] sm:$0xff]
  %v1260 = vld [vmem:[%s1 + $0x1c8] sm:$0xff]
  %v1261 = vld [vmem:[%s1 + $0x1d0] sm:$0xff]
  %v1262 = vld [vmem:[%s1 + $0x1d8] sm:$0xff]
  %v1263 = vld [vmem:[%s1 + $0x1e0] sm:$0xff]
  %v1264 = vld [vmem:[%s1 + $0x1e8] sm:$0xff]
  %v1265 = vld [vmem:[%s1 + $0x1f0] sm:$0xff]
  %v1266 = vld [vmem:[%s1 + $0x1f8] sm:$0xff]
  %1268 = vset.pattern.permute.xlu0 0
  %1269 = vperm.xlu0 %1268, %v1203
  %v1270 = vpop.permute.xlu0 %1269
  %1273 = vset.pattern.permute.xlu0 0
  %1274 = vperm.xlu0 %1273, %v1204
  %v1275 = vpop.permute.xlu0 %1274
  %1278 = vset.pattern.permute.xlu0 0
  %1279 = vperm.xlu0 %1278, %v1205
  %v1280 = vpop.permute.xlu0 %1279
  %1283 = vset.pattern.permute.xlu0 0
  %1284 = vperm.xlu0 %1283, %v1206
  %v1285 = vpop.permute.xlu0 %1284
  %1288 = vset.pattern.permute.xlu0 0
  %1289 = vperm.xlu0 %1288, %v1207
  %v1290 = vpop.permute.xlu0 %1289
  %1293 = vset.pattern.permute.xlu0 0
  %1294 = vperm.xlu0 %1293, %v1208
  %v1295 = vpop.permute.xlu0 %1294
  %1298 = vset.pattern.permute.xlu0 0
  %1299 = vperm.xlu0 %1298, %v1209
  %v1300 = vpop.permute.xlu0 %1299
  %1303 = vset.pattern.permute.xlu0 0
  %1304 = vperm.xlu0 %1303, %v1210
  %v1305 = vpop.permute.xlu0 %1304
  %1308 = vset.pattern.permute.xlu0 0
  %1309 = vperm.xlu0 %1308, %v1211
  %v1310 = vpop.permute.xlu0 %1309
  %1313 = vset.pattern.permute.xlu0 0
  %1314 = vperm.xlu0 %1313, %v1212
  %v1315 = vpop.permute.xlu0 %1314
  %1318 = vset.pattern.permute.xlu0 0
  %1319 = vperm.xlu0 %1318, %v1213
  %v1320 = vpop.permute.xlu0 %1319
  %1323 = vset.pattern.permute.xlu0 0
  %1324 = vperm.xlu0 %1323, %v1214
  %v1325 = vpop.permute.xlu0 %1324
  %1328 = vset.pattern.permute.xlu0 0
  %1329 = vperm.xlu0 %1328, %v1215
  %v1330 = vpop.permute.xlu0 %1329
  %1333 = vset.pattern.permute.xlu0 0
  %1334 = vperm.xlu0 %1333, %v1216
  %v1335 = vpop.permute.xlu0 %1334
  %1338 = vset.pattern.permute.xlu0 0
  %1339 = vperm.xlu0 %1338, %v1217
  %v1340 = vpop.permute.xlu0 %1339
  %1343 = vset.pattern.permute.xlu0 0
  %1344 = vperm.xlu0 %1343, %v1218
  %v1345 = vpop.permute.xlu0 %1344
  %1348 = vset.pattern.permute.xlu0 0
  %1349 = vperm.xlu0 %1348, %v1219
  %v1350 = vpop.permute.xlu0 %1349
  %1353 = vset.pattern.permute.xlu0 0
  %1354 = vperm.xlu0 %1353, %v1220
  %v1355 = vpop.permute.xlu0 %1354
  %1358 = vset.pattern.permute.xlu0 0
  %1359 = vperm.xlu0 %1358, %v1221
  %v1360 = vpop.permute.xlu0 %1359
  %1363 = vset.pattern.permute.xlu0 0
  %1364 = vperm.xlu0 %1363, %v1222
  %v1365 = vpop.permute.xlu0 %1364
  %1368 = vset.pattern.permute.xlu0 0
  %1369 = vperm.xlu0 %1368, %v1223
  %v1370 = vpop.permute.xlu0 %1369
  %1373 = vset.pattern.permute.xlu0 0
  %1374 = vperm.xlu0 %1373, %v1224
  %v1375 = vpop.permute.xlu0 %1374
  %1378 = vset.pattern.permute.xlu0 0
  %1379 = vperm.xlu0 %1378, %v1225
  %v1380 = vpop.permute.xlu0 %1379
  %1383 = vset.pattern.permute.xlu0 0
  %1384 = vperm.xlu0 %1383, %v1226
  %v1385 = vpop.permute.xlu0 %1384
  %1388 = vset.pattern.permute.xlu0 0
  %1389 = vperm.xlu0 %1388, %v1227
  %v1390 = vpop.permute.xlu0 %1389
  %1393 = vset.pattern.permute.xlu0 0
  %1394 = vperm.xlu0 %1393, %v1228
  %v1395 = vpop.permute.xlu0 %1394
  %1398 = vset.pattern.permute.xlu0 0
  %1399 = vperm.xlu0 %1398, %v1229
  %v1400 = vpop.permute.xlu0 %1399
  %1403 = vset.pattern.permute.xlu0 0
  %1404 = vperm.xlu0 %1403, %v1230
  %v1405 = vpop.permute.xlu0 %1404
  %1408 = vset.pattern.permute.xlu0 0
  %1409 = vperm.xlu0 %1408, %v1231
  %v1410 = vpop.permute.xlu0 %1409
  %1413 = vset.pattern.permute.xlu0 0
  %1414 = vperm.xlu0 %1413, %v1232
  %v1415 = vpop.permute.xlu0 %1414
  %1418 = vset.pattern.permute.xlu0 0
  %1419 = vperm.xlu0 %1418, %v1233
  %v1420 = vpop.permute.xlu0 %1419
  %1423 = vset.pattern.permute.xlu0 0
  %1424 = vperm.xlu0 %1423, %v1234
  %v1425 = vpop.permute.xlu0 %1424
  %1428 = vset.pattern.permute.xlu0 0
  %1429 = vperm.xlu0 %1428, %v1235
  %v1430 = vpop.permute.xlu0 %1429
  %1433 = vset.pattern.permute.xlu0 0
  %1434 = vperm.xlu0 %1433, %v1236
  %v1435 = vpop.permute.xlu0 %1434
  %1438 = vset.pattern.permute.xlu0 0
  %1439 = vperm.xlu0 %1438, %v1237
  %v1440 = vpop.permute.xlu0 %1439
  %1443 = vset.pattern.permute.xlu0 0
  %1444 = vperm.xlu0 %1443, %v1238
  %v1445 = vpop.permute.xlu0 %1444
  %1448 = vset.pattern.permute.xlu0 0
  %1449 = vperm.xlu0 %1448, %v1239
  %v1450 = vpop.permute.xlu0 %1449
  %1453 = vset.pattern.permute.xlu0 0
  %1454 = vperm.xlu0 %1453, %v1240
  %v1455 = vpop.permute.xlu0 %1454
  %1458 = vset.pattern.permute.xlu0 0
  %1459 = vperm.xlu0 %1458, %v1241
  %v1460 = vpop.permute.xlu0 %1459
  %1463 = vset.pattern.permute.xlu0 0
  %1464 = vperm.xlu0 %1463, %v1242
  %v1465 = vpop.permute.xlu0 %1464
  %1468 = vset.pattern.permute.xlu0 0
  %1469 = vperm.xlu0 %1468, %v1243
  %v1470 = vpop.permute.xlu0 %1469
  %1473 = vset.pattern.permute.xlu0 0
  %1474 = vperm.xlu0 %1473, %v1244
  %v1475 = vpop.permute.xlu0 %1474
  %1478 = vset.pattern.permute.xlu0 0
  %1479 = vperm.xlu0 %1478, %v1245
  %v1480 = vpop.permute.xlu0 %1479
  %1483 = vset.pattern.permute.xlu0 0
  %1484 = vperm.xlu0 %1483, %v1246
  %v1485 = vpop.permute.xlu0 %1484
  %1488 = vset.pattern.permute.xlu0 0
  %1489 = vperm.xlu0 %1488, %v1247
  %v1490 = vpop.permute.xlu0 %1489
  %1493 = vset.pattern.permute.xlu0 0
  %1494 = vperm.xlu0 %1493, %v1248
  %v1495 = vpop.permute.xlu0 %1494
  %1498 = vset.pattern.permute.xlu0 0
  %1499 = vperm.xlu0 %1498, %v1249
  %v1500 = vpop.permute.xlu0 %1499
  %1503 = vset.pattern.permute.xlu0 0
  %1504 = vperm.xlu0 %1503, %v1250
  %v1505 = vpop.permute.xlu0 %1504
  %1508 = vset.pattern.permute.xlu0 0
  %1509 = vperm.xlu0 %1508, %v1251
  %v1510 = vpop.permute.xlu0 %1509
  %1513 = vset.pattern.permute.xlu0 0
  %1514 = vperm.xlu0 %1513, %v1252
  %v1515 = vpop.permute.xlu0 %1514
  %1518 = vset.pattern.permute.xlu0 0
  %1519 = vperm.xlu0 %1518, %v1253
  %v1520 = vpop.permute.xlu0 %1519
  %1523 = vset.pattern.permute.xlu0 0
  %1524 = vperm.xlu0 %1523, %v1254
  %v1525 = vpop.permute.xlu0 %1524
  %1528 = vset.pattern.permute.xlu0 0
  %1529 = vperm.xlu0 %1528, %v1255
  %v1530 = vpop.permute.xlu0 %1529
  %1533 = vset.pattern.permute.xlu0 0
  %1534 = vperm.xlu0 %1533, %v1256
  %v1535 = vpop.permute.xlu0 %1534
  %1538 = vset.pattern.permute.xlu0 0
  %1539 = vperm.xlu0 %1538, %v1257
  %v1540 = vpop.permute.xlu0 %1539
  %1543 = vset.pattern.permute.xlu0 0
  %1544 = vperm.xlu0 %1543, %v1258
  %v1545 = vpop.permute.xlu0 %1544
  %1548 = vset.pattern.permute.xlu0 0
  %1549 = vperm.xlu0 %1548, %v1259
  %v1550 = vpop.permute.xlu0 %1549
  %1553 = vset.pattern.permute.xlu0 0
  %1554 = vperm.xlu0 %1553, %v1260
  %v1555 = vpop.permute.xlu0 %1554
  %1558 = vset.pattern.permute.xlu0 0
  %1559 = vperm.xlu0 %1558, %v1261
  %v1560 = vpop.permute.xlu0 %1559
  %1563 = vset.pattern.permute.xlu0 0
  %1564 = vperm.xlu0 %1563, %v1262
  %v1565 = vpop.permute.xlu0 %1564
  %1568 = vset.pattern.permute.xlu0 0
  %1569 = vperm.xlu0 %1568, %v1263
  %v1570 = vpop.permute.xlu0 %1569
  %1573 = vset.pattern.permute.xlu0 0
  %1574 = vperm.xlu0 %1573, %v1264
  %v1575 = vpop.permute.xlu0 %1574
  %1578 = vset.pattern.permute.xlu0 0
  %1579 = vperm.xlu0 %1578, %v1265
  %v1580 = vpop.permute.xlu0 %1579
  %1583 = vset.pattern.permute.xlu0 0
  %1584 = vperm.xlu0 %1583, %v1266
  %v1585 = vpop.permute.xlu0 %1584
  %v1587 = vmul.f32 %v1139, %v1270
  %v1588 = vmul.f32 %v1140, %v1275
  %v1589 = vmul.f32 %v1141, %v1280
  %v1590 = vmul.f32 %v1142, %v1285
  %v1591 = vmul.f32 %v1143, %v1290
  %v1592 = vmul.f32 %v1144, %v1295
  %v1593 = vmul.f32 %v1145, %v1300
  %v1594 = vmul.f32 %v1146, %v1305
  %v1595 = vmul.f32 %v1147, %v1310
  %v1596 = vmul.f32 %v1148, %v1315
  %v1597 = vmul.f32 %v1149, %v1320
  %v1598 = vmul.f32 %v1150, %v1325
  %v1599 = vmul.f32 %v1151, %v1330
  %v1600 = vmul.f32 %v1152, %v1335
  %v1601 = vmul.f32 %v1153, %v1340
  %v1602 = vmul.f32 %v1154, %v1345
  %v1603 = vmul.f32 %v1155, %v1350
  %v1604 = vmul.f32 %v1156, %v1355
  %v1605 = vmul.f32 %v1157, %v1360
  %v1606 = vmul.f32 %v1158, %v1365
  %v1607 = vmul.f32 %v1159, %v1370
  %v1608 = vmul.f32 %v1160, %v1375
  %v1609 = vmul.f32 %v1161, %v1380
  %v1610 = vmul.f32 %v1162, %v1385
  %v1611 = vmul.f32 %v1163, %v1390
  %v1612 = vmul.f32 %v1164, %v1395
  %v1613 = vmul.f32 %v1165, %v1400
  %v1614 = vmul.f32 %v1166, %v1405
  %v1615 = vmul.f32 %v1167, %v1410
  %v1616 = vmul.f32 %v1168, %v1415
  %v1617 = vmul.f32 %v1169, %v1420
  %v1618 = vmul.f32 %v1170, %v1425
  %v1619 = vmul.f32 %v1171, %v1430
  %v1620 = vmul.f32 %v1172, %v1435
  %v1621 = vmul.f32 %v1173, %v1440
  %v1622 = vmul.f32 %v1174, %v1445
  %v1623 = vmul.f32 %v1175, %v1450
  %v1624 = vmul.f32 %v1176, %v1455
  %v1625 = vmul.f32 %v1177, %v1460
  %v1626 = vmul.f32 %v1178, %v1465
  %v1627 = vmul.f32 %v1179, %v1470
  %v1628 = vmul.f32 %v1180, %v1475
  %v1629 = vmul.f32 %v1181, %v1480
  %v1630 = vmul.f32 %v1182, %v1485
  %v1631 = vmul.f32 %v1183, %v1490
  %v1632 = vmul.f32 %v1184, %v1495
  %v1633 = vmul.f32 %v1185, %v1500
  %v1634 = vmul.f32 %v1186, %v1505
  %v1635 = vmul.f32 %v1187, %v1510
  %v1636 = vmul.f32 %v1188, %v1515
  %v1637 = vmul.f32 %v1189, %v1520
  %v1638 = vmul.f32 %v1190, %v1525
  %v1639 = vmul.f32 %v1191, %v1530
  %v1640 = vmul.f32 %v1192, %v1535
  %v1641 = vmul.f32 %v1193, %v1540
  %v1642 = vmul.f32 %v1194, %v1545
  %v1643 = vmul.f32 %v1195, %v1550
  %v1644 = vmul.f32 %v1196, %v1555
  %v1645 = vmul.f32 %v1197, %v1560
  %v1646 = vmul.f32 %v1198, %v1565
  %v1647 = vmul.f32 %v1199, %v1570
  %v1648 = vmul.f32 %v1200, %v1575
  %v1649 = vmul.f32 %v1201, %v1580
  %v1650 = vmul.f32 %v1202, %v1585
  %v1651 = vpack.c.bf16 %v1588, %v1587
  %v1652 = vpack.c.bf16 %v1590, %v1589
  %v1653 = vpack.c.bf16 %v1592, %v1591
  %v1654 = vpack.c.bf16 %v1594, %v1593
  %v1655 = vpack.c.bf16 %v1596, %v1595
  %v1656 = vpack.c.bf16 %v1598, %v1597
  %v1657 = vpack.c.bf16 %v1600, %v1599
  %v1658 = vpack.c.bf16 %v1602, %v1601
  %v1659 = vpack.c.bf16 %v1604, %v1603
  %v1660 = vpack.c.bf16 %v1606, %v1605
  %v1661 = vpack.c.bf16 %v1608, %v1607
  %v1662 = vpack.c.bf16 %v1610, %v1609
  %v1663 = vpack.c.bf16 %v1612, %v1611
  %v1664 = vpack.c.bf16 %v1614, %v1613
  %v1665 = vpack.c.bf16 %v1616, %v1615
  %v1666 = vpack.c.bf16 %v1618, %v1617
  %v1667 = vpack.c.bf16 %v1620, %v1619
  %v1668 = vpack.c.bf16 %v1622, %v1621
  %v1669 = vpack.c.bf16 %v1624, %v1623
  %v1670 = vpack.c.bf16 %v1626, %v1625
  %v1671 = vpack.c.bf16 %v1628, %v1627
  %v1672 = vpack.c.bf16 %v1630, %v1629
  %v1673 = vpack.c.bf16 %v1632, %v1631
  %v1674 = vpack.c.bf16 %v1634, %v1633
  %v1675 = vpack.c.bf16 %v1636, %v1635
  %v1676 = vpack.c.bf16 %v1638, %v1637
  %v1677 = vpack.c.bf16 %v1640, %v1639
  %v1678 = vpack.c.bf16 %v1642, %v1641
  %v1679 = vpack.c.bf16 %v1644, %v1643
  %v1680 = vpack.c.bf16 %v1646, %v1645
  %v1681 = vpack.c.bf16 %v1648, %v1647
  %v1682 = vpack.c.bf16 %v1650, %v1649
  %v1683 = vld [vmem:[%s5] sm:$0xf]
  %v1684 = vld [vmem:[%s5 + $0x4] sm:$0xf]
  %v1685 = vld [vmem:[%s5 + $0x8] sm:$0xf]
  %v1686 = vld [vmem:[%s5 + $0xc] sm:$0xf]
  %v1687 = vld [vmem:[%s5 + $0x10] sm:$0xf]
  %v1688 = vld [vmem:[%s5 + $0x14] sm:$0xf]
  %v1689 = vld [vmem:[%s5 + $0x18] sm:$0xf]
  %v1690 = vld [vmem:[%s5 + $0x1c] sm:$0xf]
  %v1699 = vunpack.c.l.b16 %v1683
  %v1700 = vunpack.c.l.b16 %v1684
  %v1701 = vunpack.c.l.b16 %v1685
  %v1702 = vunpack.c.l.b16 %v1686
  %v1703 = vunpack.c.l.b16 %v1687
  %v1704 = vunpack.c.l.b16 %v1688
  %v1705 = vunpack.c.l.b16 %v1689
  %v1706 = vunpack.c.l.b16 %v1690
  %v1707 = vpack.c.b16 %v1700, %v1699
  %v1708 = vpack.c.b16 %v1702, %v1701
  %v1709 = vpack.c.b16 %v1704, %v1703
  %v1710 = vpack.c.b16 %v1706, %v1705
  %v1716 = vsel %vm656, %v1651, 0
  %v1719 = vsel %vm656, %v1652, 0
  %v1722 = vsel %vm656, %v1653, 0
  %v1725 = vsel %vm656, %v1654, 0
  %v1728 = vsel %vm656, %v1655, 0
  %v1731 = vsel %vm656, %v1656, 0
  %v1734 = vsel %vm656, %v1657, 0
  %v1737 = vsel %vm656, %v1658, 0
  %1739 = vmatprep.subr.bf16.mxu0 0
  %1740 = vmatpush1.bf16.msra.mxu0 0
  %1741 = vmatprep.subr.bf16.mxu0 0
  %1742 = vmatpush1.bf16.msra.mxu0 0
  %1743 = vmatprep.subr.bf16.mxu0 0
  %1744 = vmatpush1.bf16.msra.mxu0 0
  %1745 = vmatprep.subr.bf16.mxu0 0
  %1746 = vmatpush1.bf16.msra.mxu0 0
  %1747 = vmatprep.subr.bf16.mxu0 0
  %1748 = vmatpush1.bf16.msra.mxu0 %v1710
  %1749 = vmatprep.subr.bf16.mxu0 0
  %1750 = vmatpush1.bf16.msra.mxu0 %v1709
  %1751 = vmatprep.subr.bf16.mxu0 0
  %1752 = vmatpush1.bf16.msra.mxu0 %v1708
  %1753 = vmatprep.subr.bf16.mxu0 0
  %1754 = vmatpush1.bf16.msra.mxu0 %v1707
  %1755 = vmatprep.subr.bf16.mxu0 0
  %1756 = vmatpush2.bf16.msra.mxu0 0
  %1757 = vmatprep.subr.bf16.mxu0 0
  %1758 = vmatpush2.bf16.msra.mxu0 0
  %1759 = vmatprep.subr.bf16.mxu0 0
  %1760 = vmatpush2.bf16.msra.mxu0 0
  %1761 = vmatprep.subr.bf16.mxu0 0
  %1762 = vmatpush2.bf16.msra.mxu0 0
  %1763 = vmatprep.subr.bf16.mxu0 0
  %1764 = vmatpush2.bf16.msra.mxu0 0
  %1765 = vmatprep.subr.bf16.mxu0 0
  %1766 = vmatpush2.bf16.msra.mxu0 0
  %1767 = vmatprep.subr.bf16.mxu0 0
  %1768 = vmatpush2.bf16.msra.mxu0 0
  %1769 = vmatprep.subr.bf16.mxu0 0
  %1770 = vmatpush2.bf16.msra.mxu0 0
  %1771 = vmatprep.mubr.bf16.mxu0 0
  %1772 = vmatmul.mubr.bf16.gmra.mxu0 %v1716
  %v1773 = vpop.f32.mrf.mxu0
  %v1774 = vadd.f32 0.0, %v1773
  %v1775 = vpop.f32.mrf.mxu0
  %v1776 = vpop.f32.mrf.mxu0
  %v1777 = vadd.f32 0.0, %v1776
  %v1778 = vpop.f32.mrf.mxu0
  %1779 = vmatprep.mubr.bf16.mxu0 0
  %1780 = vmatmul.mubr.bf16.gmra.mxu0 %v1719
  %v1781 = vpop.f32.mrf.mxu0
  %v1782 = vadd.f32 0.0, %v1781
  %v1783 = vpop.f32.mrf.mxu0
  %v1784 = vpop.f32.mrf.mxu0
  %v1785 = vadd.f32 0.0, %v1784
  %v1786 = vpop.f32.mrf.mxu0
  %1787 = vmatprep.mubr.bf16.mxu0 0
  %1788 = vmatmul.mubr.bf16.gmra.mxu0 %v1722
  %v1789 = vpop.f32.mrf.mxu0
  %v1790 = vadd.f32 0.0, %v1789
  %v1791 = vpop.f32.mrf.mxu0
  %v1792 = vpop.f32.mrf.mxu0
  %v1793 = vadd.f32 0.0, %v1792
  %v1794 = vpop.f32.mrf.mxu0
  %1795 = vmatprep.mubr.bf16.mxu0 0
  %1796 = vmatmul.mubr.bf16.gmra.mxu0 %v1725
  %v1797 = vpop.f32.mrf.mxu0
  %v1798 = vadd.f32 0.0, %v1797
  %v1799 = vpop.f32.mrf.mxu0
  %v1800 = vpop.f32.mrf.mxu0
  %v1801 = vpop.f32.mrf.mxu0
  %1802 = vmatprep.mubr.bf16.mxu0 0
  %1803 = vmatmul.mubr.bf16.gmra.mxu0 %v1728
  %v1804 = vpop.f32.mrf.mxu0
  %v1805 = vadd.f32 0.0, %v1804
  %v1806 = vpop.f32.mrf.mxu0
  %v1807 = vpop.f32.mrf.mxu0
  %v1808 = vadd.f32 0.0, %v1807
  %v1809 = vpop.f32.mrf.mxu0
  %1810 = vmatprep.mubr.bf16.mxu0 0
  %1811 = vmatmul.mubr.bf16.gmra.mxu0 %v1731
  %v1812 = vpop.f32.mrf.mxu0
  %v1813 = vadd.f32 0.0, %v1812
  %v1814 = vpop.f32.mrf.mxu0
  %v1815 = vpop.f32.mrf.mxu0
  %v1816 = vadd.f32 0.0, %v1815
  %v1817 = vpop.f32.mrf.mxu0
  %1818 = vmatprep.mubr.bf16.mxu0 0
  %1819 = vmatmul.mubr.bf16.gmra.mxu0 %v1734
  %v1820 = vpop.f32.mrf.mxu0
  %v1821 = vadd.f32 0.0, %v1820
  %v1822 = vpop.f32.mrf.mxu0
  %v1823 = vpop.f32.mrf.mxu0
  %v1824 = vadd.f32 0.0, %v1823
  %v1825 = vpop.f32.mrf.mxu0
  %1826 = vmatprep.mubr.bf16.mxu0 0
  %1827 = vmatmul.mubr.bf16.gmra.mxu0 %v1737
  %v1828 = vpop.f32.mrf.mxu0
  %v1829 = vadd.f32 0.0, %v1828
  %v1830 = vpop.f32.mrf.mxu0
  %v1831 = vpop.f32.mrf.mxu0
  %v1832 = vpop.f32.mrf.mxu0
  %1833 = vdwg.mxu0
  %v1834 = vadd.f32 %v1774, 0.0
  %v1835 = vadd.f32 %v1777, 0.0
  %v1836 = vadd.f32 %v1782, 0.0
  %v1837 = vadd.f32 %v1785, 0.0
  %v1838 = vadd.f32 %v1790, 0.0
  %v1839 = vadd.f32 %v1793, 0.0
  %v1840 = vadd.f32 %v1798, 0.0
  %v1841 = vadd.f32 %v1805, 0.0
  %v1842 = vadd.f32 %v1808, 0.0
  %v1843 = vadd.f32 %v1813, 0.0
  %v1844 = vadd.f32 %v1816, 0.0
  %v1845 = vadd.f32 %v1821, 0.0
  %v1846 = vadd.f32 %v1824, 0.0
  %v1847 = vadd.f32 %v1829, 0.0
  %s1848 = scalar_lea.vmem %s5, 32
  %v1849 = vld [vmem:[%s1848] sm:$0xf]
  %v1850 = vld [vmem:[%s1848 + $0x4] sm:$0xf]
  %v1851 = vld [vmem:[%s1848 + $0x8] sm:$0xf]
  %v1852 = vld [vmem:[%s1848 + $0xc] sm:$0xf]
  %v1853 = vld [vmem:[%s1848 + $0x10] sm:$0xf]
  %v1854 = vld [vmem:[%s1848 + $0x14] sm:$0xf]
  %v1855 = vld [vmem:[%s1848 + $0x18] sm:$0xf]
  %v1856 = vld [vmem:[%s1848 + $0x1c] sm:$0xf]
  %v1865 = vunpack.c.l.b16 %v1849
  %v1866 = vunpack.c.l.b16 %v1850
  %v1867 = vunpack.c.l.b16 %v1851
  %v1868 = vunpack.c.l.b16 %v1852
  %v1869 = vunpack.c.l.b16 %v1853
  %v1870 = vunpack.c.l.b16 %v1854
  %v1871 = vunpack.c.l.b16 %v1855
  %v1872 = vunpack.c.l.b16 %v1856
  %v1873 = vpack.c.b16 %v1866, %v1865
  %v1874 = vpack.c.b16 %v1868, %v1867
  %v1875 = vpack.c.b16 %v1870, %v1869
  %v1876 = vpack.c.b16 %v1872, %v1871
  %v1882 = vsel %vm656, %v1659, 0
  %v1885 = vsel %vm656, %v1660, 0
  %v1888 = vsel %vm656, %v1661, 0
  %v1891 = vsel %vm656, %v1662, 0
  %v1894 = vsel %vm656, %v1663, 0
  %v1897 = vsel %vm656, %v1664, 0
  %v1900 = vsel %vm656, %v1665, 0
  %v1903 = vsel %vm656, %v1666, 0
  %1905 = vmatprep.subr.bf16.mxu0 0
  %1906 = vmatpush1.bf16.msra.mxu0 0
  %1907 = vmatprep.subr.bf16.mxu0 0
  %1908 = vmatpush1.bf16.msra.mxu0 0
  %1909 = vmatprep.subr.bf16.mxu0 0
  %1910 = vmatpush1.bf16.msra.mxu0 0
  %1911 = vmatprep.subr.bf16.mxu0 0
  %1912 = vmatpush1.bf16.msra.mxu0 0
  %1913 = vmatprep.subr.bf16.mxu0 0
  %1914 = vmatpush1.bf16.msra.mxu0 %v1876
  %1915 = vmatprep.subr.bf16.mxu0 0
  %1916 = vmatpush1.bf16.msra.mxu0 %v1875
  %1917 = vmatprep.subr.bf16.mxu0 0
  %1918 = vmatpush1.bf16.msra.mxu0 %v1874
  %1919 = vmatprep.subr.bf16.mxu0 0
  %1920 = vmatpush1.bf16.msra.mxu0 %v1873
  %1921 = vmatprep.subr.bf16.mxu0 0
  %1922 = vmatpush2.bf16.msra.mxu0 0
  %1923 = vmatprep.subr.bf16.mxu0 0
  %1924 = vmatpush2.bf16.msra.mxu0 0
  %1925 = vmatprep.subr.bf16.mxu0 0
  %1926 = vmatpush2.bf16.msra.mxu0 0
  %1927 = vmatprep.subr.bf16.mxu0 0
  %1928 = vmatpush2.bf16.msra.mxu0 0
  %1929 = vmatprep.subr.bf16.mxu0 0
  %1930 = vmatpush2.bf16.msra.mxu0 0
  %1931 = vmatprep.subr.bf16.mxu0 0
  %1932 = vmatpush2.bf16.msra.mxu0 0
  %1933 = vmatprep.subr.bf16.mxu0 0
  %1934 = vmatpush2.bf16.msra.mxu0 0
  %1935 = vmatprep.subr.bf16.mxu0 0
  %1936 = vmatpush2.bf16.msra.mxu0 0
  %1937 = vmatprep.mubr.bf16.mxu0 0
  %1938 = vmatmul.mubr.bf16.gmra.mxu0 %v1882
  %v1939 = vpop.f32.mrf.mxu0
  %v1940 = vadd.f32 0.0, %v1939
  %v1941 = vpop.f32.mrf.mxu0
  %v1942 = vpop.f32.mrf.mxu0
  %v1943 = vadd.f32 0.0, %v1942
  %v1944 = vpop.f32.mrf.mxu0
  %1945 = vmatprep.mubr.bf16.mxu0 0
  %1946 = vmatmul.mubr.bf16.gmra.mxu0 %v1885
  %v1947 = vpop.f32.mrf.mxu0
  %v1948 = vadd.f32 0.0, %v1947
  %v1949 = vpop.f32.mrf.mxu0
  %v1950 = vpop.f32.mrf.mxu0
  %v1951 = vadd.f32 0.0, %v1950
  %v1952 = vpop.f32.mrf.mxu0
  %1953 = vmatprep.mubr.bf16.mxu0 0
  %1954 = vmatmul.mubr.bf16.gmra.mxu0 %v1888
  %v1955 = vpop.f32.mrf.mxu0
  %v1956 = vadd.f32 0.0, %v1955
  %v1957 = vpop.f32.mrf.mxu0
  %v1958 = vpop.f32.mrf.mxu0
  %v1959 = vadd.f32 0.0, %v1958
  %v1960 = vpop.f32.mrf.mxu0
  %1961 = vmatprep.mubr.bf16.mxu0 0
  %1962 = vmatmul.mubr.bf16.gmra.mxu0 %v1891
  %v1963 = vpop.f32.mrf.mxu0
  %v1964 = vadd.f32 0.0, %v1963
  %v1965 = vpop.f32.mrf.mxu0
  %v1966 = vpop.f32.mrf.mxu0
  %v1967 = vpop.f32.mrf.mxu0
  %1968 = vmatprep.mubr.bf16.mxu0 0
  %1969 = vmatmul.mubr.bf16.gmra.mxu0 %v1894
  %v1970 = vpop.f32.mrf.mxu0
  %v1971 = vadd.f32 0.0, %v1970
  %v1972 = vpop.f32.mrf.mxu0
  %v1973 = vpop.f32.mrf.mxu0
  %v1974 = vadd.f32 0.0, %v1973
  %v1975 = vpop.f32.mrf.mxu0
  %1976 = vmatprep.mubr.bf16.mxu0 0
  %1977 = vmatmul.mubr.bf16.gmra.mxu0 %v1897
  %v1978 = vpop.f32.mrf.mxu0
  %v1979 = vadd.f32 0.0, %v1978
  %v1980 = vpop.f32.mrf.mxu0
  %v1981 = vpop.f32.mrf.mxu0
  %v1982 = vadd.f32 0.0, %v1981
  %v1983 = vpop.f32.mrf.mxu0
  %1984 = vmatprep.mubr.bf16.mxu0 0
  %1985 = vmatmul.mubr.bf16.gmra.mxu0 %v1900
  %v1986 = vpop.f32.mrf.mxu0
  %v1987 = vadd.f32 0.0, %v1986
  %v1988 = vpop.f32.mrf.mxu0
  %v1989 = vpop.f32.mrf.mxu0
  %v1990 = vadd.f32 0.0, %v1989
  %v1991 = vpop.f32.mrf.mxu0
  %1992 = vmatprep.mubr.bf16.mxu0 0
  %1993 = vmatmul.mubr.bf16.gmra.mxu0 %v1903
  %v1994 = vpop.f32.mrf.mxu0
  %v1995 = vadd.f32 0.0, %v1994
  %v1996 = vpop.f32.mrf.mxu0
  %v1997 = vpop.f32.mrf.mxu0
  %v1998 = vpop.f32.mrf.mxu0
  %1999 = vdwg.mxu0
  %v2000 = vadd.f32 %v1834, %v1940
  %v2001 = vadd.f32 %v1835, %v1943
  %v2002 = vadd.f32 %v1836, %v1948
  %v2003 = vadd.f32 %v1837, %v1951
  %v2004 = vadd.f32 %v1838, %v1956
  %v2005 = vadd.f32 %v1839, %v1959
  %v2006 = vadd.f32 %v1840, %v1964
  %v2007 = vadd.f32 %v1841, %v1971
  %v2008 = vadd.f32 %v1842, %v1974
  %v2009 = vadd.f32 %v1843, %v1979
  %v2010 = vadd.f32 %v1844, %v1982
  %v2011 = vadd.f32 %v1845, %v1987
  %v2012 = vadd.f32 %v1846, %v1990
  %v2013 = vadd.f32 %v1847, %v1995
  %s2014 = scalar_lea.vmem %s5, 64
  %v2015 = vld [vmem:[%s2014] sm:$0xf]
  %v2016 = vld [vmem:[%s2014 + $0x4] sm:$0xf]
  %v2017 = vld [vmem:[%s2014 + $0x8] sm:$0xf]
  %v2018 = vld [vmem:[%s2014 + $0xc] sm:$0xf]
  %v2019 = vld [vmem:[%s2014 + $0x10] sm:$0xf]
  %v2020 = vld [vmem:[%s2014 + $0x14] sm:$0xf]
  %v2021 = vld [vmem:[%s2014 + $0x18] sm:$0xf]
  %v2022 = vld [vmem:[%s2014 + $0x1c] sm:$0xf]
  %v2031 = vunpack.c.l.b16 %v2015
  %v2032 = vunpack.c.l.b16 %v2016
  %v2033 = vunpack.c.l.b16 %v2017
  %v2034 = vunpack.c.l.b16 %v2018
  %v2035 = vunpack.c.l.b16 %v2019
  %v2036 = vunpack.c.l.b16 %v2020
  %v2037 = vunpack.c.l.b16 %v2021
  %v2038 = vunpack.c.l.b16 %v2022
  %v2039 = vpack.c.b16 %v2032, %v2031
  %v2040 = vpack.c.b16 %v2034, %v2033
  %v2041 = vpack.c.b16 %v2036, %v2035
  %v2042 = vpack.c.b16 %v2038, %v2037
  %2047 = vmatprep.subr.bf16.mxu0 0
  %2048 = vmatpush1.bf16.msra.mxu0 0
  %2049 = vmatprep.subr.bf16.mxu0 0
  %2050 = vmatpush1.bf16.msra.mxu0 0
  %2051 = vmatprep.subr.bf16.mxu0 0
  %2052 = vmatpush1.bf16.msra.mxu0 0
  %2053 = vmatprep.subr.bf16.mxu0 0
  %2054 = vmatpush1.bf16.msra.mxu0 0
  %2055 = vmatprep.subr.bf16.mxu0 0
  %2056 = vmatpush1.bf16.msra.mxu0 %v2042
  %2057 = vmatprep.subr.bf16.mxu0 0
  %2058 = vmatpush1.bf16.msra.mxu0 %v2041
  %2059 = vmatprep.subr.bf16.mxu0 0
  %2060 = vmatpush1.bf16.msra.mxu0 %v2040
  %2061 = vmatprep.subr.bf16.mxu0 0
  %2062 = vmatpush1.bf16.msra.mxu0 %v2039
  %2063 = vmatprep.subr.bf16.mxu0 0
  %2064 = vmatpush2.bf16.msra.mxu0 0
  %2065 = vmatprep.subr.bf16.mxu0 0
  %2066 = vmatpush2.bf16.msra.mxu0 0
  %2067 = vmatprep.subr.bf16.mxu0 0
  %2068 = vmatpush2.bf16.msra.mxu0 0
  %2069 = vmatprep.subr.bf16.mxu0 0
  %2070 = vmatpush2.bf16.msra.mxu0 0
  %2071 = vmatprep.subr.bf16.mxu0 0
  %2072 = vmatpush2.bf16.msra.mxu0 0
  %2073 = vmatprep.subr.bf16.mxu0 0
  %2074 = vmatpush2.bf16.msra.mxu0 0
  %2075 = vmatprep.subr.bf16.mxu0 0
  %2076 = vmatpush2.bf16.msra.mxu0 0
  %2077 = vmatprep.subr.bf16.mxu0 0
  %2078 = vmatpush2.bf16.msra.mxu0 0
  %2079 = vmatprep.mubr.bf16.mxu0 0
  %2080 = vmatmul.mubr.bf16.gmra.mxu0 %v1716
  %v2081 = vpop.f32.mrf.mxu0
  %v2082 = vadd.f32 0.0, %v2081
  %v2083 = vpop.f32.mrf.mxu0
  %v2084 = vpop.f32.mrf.mxu0
  %v2085 = vadd.f32 0.0, %v2084
  %v2086 = vpop.f32.mrf.mxu0
  %2087 = vmatprep.mubr.bf16.mxu0 0
  %2088 = vmatmul.mubr.bf16.gmra.mxu0 %v1719
  %v2089 = vpop.f32.mrf.mxu0
  %v2090 = vadd.f32 0.0, %v2089
  %v2091 = vpop.f32.mrf.mxu0
  %v2092 = vpop.f32.mrf.mxu0
  %v2093 = vadd.f32 0.0, %v2092
  %v2094 = vpop.f32.mrf.mxu0
  %2095 = vmatprep.mubr.bf16.mxu0 0
  %2096 = vmatmul.mubr.bf16.gmra.mxu0 %v1722
  %v2097 = vpop.f32.mrf.mxu0
  %v2098 = vadd.f32 0.0, %v2097
  %v2099 = vpop.f32.mrf.mxu0
  %v2100 = vpop.f32.mrf.mxu0
  %v2101 = vadd.f32 0.0, %v2100
  %v2102 = vpop.f32.mrf.mxu0
  %2103 = vmatprep.mubr.bf16.mxu0 0
  %2104 = vmatmul.mubr.bf16.gmra.mxu0 %v1725
  %v2105 = vpop.f32.mrf.mxu0
  %v2106 = vadd.f32 0.0, %v2105
  %v2107 = vpop.f32.mrf.mxu0
  %v2108 = vpop.f32.mrf.mxu0
  %v2109 = vpop.f32.mrf.mxu0
  %2110 = vmatprep.mubr.bf16.mxu0 0
  %2111 = vmatmul.mubr.bf16.gmra.mxu0 %v1728
  %v2112 = vpop.f32.mrf.mxu0
  %v2113 = vadd.f32 0.0, %v2112
  %v2114 = vpop.f32.mrf.mxu0
  %v2115 = vpop.f32.mrf.mxu0
  %v2116 = vadd.f32 0.0, %v2115
  %v2117 = vpop.f32.mrf.mxu0
  %2118 = vmatprep.mubr.bf16.mxu0 0
  %2119 = vmatmul.mubr.bf16.gmra.mxu0 %v1731
  %v2120 = vpop.f32.mrf.mxu0
  %v2121 = vadd.f32 0.0, %v2120
  %v2122 = vpop.f32.mrf.mxu0
  %v2123 = vpop.f32.mrf.mxu0
  %v2124 = vadd.f32 0.0, %v2123
  %v2125 = vpop.f32.mrf.mxu0
  %2126 = vmatprep.mubr.bf16.mxu0 0
  %2127 = vmatmul.mubr.bf16.gmra.mxu0 %v1734
  %v2128 = vpop.f32.mrf.mxu0
  %v2129 = vadd.f32 0.0, %v2128
  %v2130 = vpop.f32.mrf.mxu0
  %v2131 = vpop.f32.mrf.mxu0
  %v2132 = vadd.f32 0.0, %v2131
  %v2133 = vpop.f32.mrf.mxu0
  %2134 = vmatprep.mubr.bf16.mxu0 0
  %2135 = vmatmul.mubr.bf16.gmra.mxu0 %v1737
  %v2136 = vpop.f32.mrf.mxu0
  %v2137 = vadd.f32 0.0, %v2136
  %v2138 = vpop.f32.mrf.mxu0
  %v2139 = vpop.f32.mrf.mxu0
  %v2140 = vpop.f32.mrf.mxu0
  %2141 = vdwg.mxu0
  %v2156 = vrot.slane %v2082, 1
  %v2157 = vrot.slane %v2085, 1
  %v2158 = vrot.slane %v2090, 1
  %v2159 = vrot.slane %v2093, 1
  %v2160 = vrot.slane %v2098, 1
  %v2161 = vrot.slane %v2101, 1
  %v2162 = vrot.slane %v2106, 1
  %v2163 = vrot.slane %v2113, 1
  %v2164 = vrot.slane %v2116, 1
  %v2165 = vrot.slane %v2121, 1
  %v2166 = vrot.slane %v2124, 1
  %v2167 = vrot.slane %v2129, 1
  %v2168 = vrot.slane %v2132, 1
  %v2169 = vrot.slane %v2137, 1
  %v2184 = vadd.f32 %v2000, %v2156
  %v2185 = vadd.f32 %v2001, %v2157
  %v2186 = vadd.f32 %v2002, %v2158
  %v2187 = vadd.f32 %v2003, %v2159
  %v2188 = vadd.f32 %v2004, %v2160
  %v2189 = vadd.f32 %v2005, %v2161
  %v2190 = vadd.f32 %v2006, %v2162
  %v2191 = vadd.f32 %v2007, %v2163
  %v2192 = vadd.f32 %v2008, %v2164
  %v2193 = vadd.f32 %v2009, %v2165
  %v2194 = vadd.f32 %v2010, %v2166
  %v2195 = vadd.f32 %v2011, %v2167
  %v2196 = vadd.f32 %v2012, %v2168
  %v2197 = vadd.f32 %v2013, %v2169
  %s2198 = scalar_lea.vmem %s5, 96
  %v2199 = vld [vmem:[%s2198] sm:$0xf]
  %v2200 = vld [vmem:[%s2198 + $0x4] sm:$0xf]
  %v2201 = vld [vmem:[%s2198 + $0x8] sm:$0xf]
  %v2202 = vld [vmem:[%s2198 + $0xc] sm:$0xf]
  %v2203 = vld [vmem:[%s2198 + $0x10] sm:$0xf]
  %v2204 = vld [vmem:[%s2198 + $0x14] sm:$0xf]
  %v2205 = vld [vmem:[%s2198 + $0x18] sm:$0xf]
  %v2206 = vld [vmem:[%s2198 + $0x1c] sm:$0xf]
  %v2215 = vunpack.c.l.b16 %v2199
  %v2216 = vunpack.c.l.b16 %v2200
  %v2217 = vunpack.c.l.b16 %v2201
  %v2218 = vunpack.c.l.b16 %v2202
  %v2219 = vunpack.c.l.b16 %v2203
  %v2220 = vunpack.c.l.b16 %v2204
  %v2221 = vunpack.c.l.b16 %v2205
  %v2222 = vunpack.c.l.b16 %v2206
  %v2223 = vpack.c.b16 %v2216, %v2215
  %v2224 = vpack.c.b16 %v2218, %v2217
  %v2225 = vpack.c.b16 %v2220, %v2219
  %v2226 = vpack.c.b16 %v2222, %v2221
  %2231 = vmatprep.subr.bf16.mxu0 0
  %2232 = vmatpush1.bf16.msra.mxu0 0
  %2233 = vmatprep.subr.bf16.mxu0 0
  %2234 = vmatpush1.bf16.msra.mxu0 0
  %2235 = vmatprep.subr.bf16.mxu0 0
  %2236 = vmatpush1.bf16.msra.mxu0 0
  %2237 = vmatprep.subr.bf16.mxu0 0
  %2238 = vmatpush1.bf16.msra.mxu0 0
  %2239 = vmatprep.subr.bf16.mxu0 0
  %2240 = vmatpush1.bf16.msra.mxu0 %v2226
  %2241 = vmatprep.subr.bf16.mxu0 0
  %2242 = vmatpush1.bf16.msra.mxu0 %v2225
  %2243 = vmatprep.subr.bf16.mxu0 0
  %2244 = vmatpush1.bf16.msra.mxu0 %v2224
  %2245 = vmatprep.subr.bf16.mxu0 0
  %2246 = vmatpush1.bf16.msra.mxu0 %v2223
  %2247 = vmatprep.subr.bf16.mxu0 0
  %2248 = vmatpush2.bf16.msra.mxu0 0
  %2249 = vmatprep.subr.bf16.mxu0 0
  %2250 = vmatpush2.bf16.msra.mxu0 0
  %2251 = vmatprep.subr.bf16.mxu0 0
  %2252 = vmatpush2.bf16.msra.mxu0 0
  %2253 = vmatprep.subr.bf16.mxu0 0
  %2254 = vmatpush2.bf16.msra.mxu0 0
  %2255 = vmatprep.subr.bf16.mxu0 0
  %2256 = vmatpush2.bf16.msra.mxu0 0
  %2257 = vmatprep.subr.bf16.mxu0 0
  %2258 = vmatpush2.bf16.msra.mxu0 0
  %2259 = vmatprep.subr.bf16.mxu0 0
  %2260 = vmatpush2.bf16.msra.mxu0 0
  %2261 = vmatprep.subr.bf16.mxu0 0
  %2262 = vmatpush2.bf16.msra.mxu0 0
  %2263 = vmatprep.mubr.bf16.mxu0 0
  %2264 = vmatmul.mubr.bf16.gmra.mxu0 %v1882
  %v2265 = vpop.f32.mrf.mxu0
  %v2266 = vadd.f32 0.0, %v2265
  %v2267 = vpop.f32.mrf.mxu0
  %v2268 = vpop.f32.mrf.mxu0
  %v2269 = vadd.f32 0.0, %v2268
  %v2270 = vpop.f32.mrf.mxu0
  %2271 = vmatprep.mubr.bf16.mxu0 0
  %2272 = vmatmul.mubr.bf16.gmra.mxu0 %v1885
  %v2273 = vpop.f32.mrf.mxu0
  %v2274 = vadd.f32 0.0, %v2273
  %v2275 = vpop.f32.mrf.mxu0
  %v2276 = vpop.f32.mrf.mxu0
  %v2277 = vadd.f32 0.0, %v2276
  %v2278 = vpop.f32.mrf.mxu0
  %2279 = vmatprep.mubr.bf16.mxu0 0
  %2280 = vmatmul.mubr.bf16.gmra.mxu0 %v1888
  %v2281 = vpop.f32.mrf.mxu0
  %v2282 = vadd.f32 0.0, %v2281
  %v2283 = vpop.f32.mrf.mxu0
  %v2284 = vpop.f32.mrf.mxu0
  %v2285 = vadd.f32 0.0, %v2284
  %v2286 = vpop.f32.mrf.mxu0
  %2287 = vmatprep.mubr.bf16.mxu0 0
  %2288 = vmatmul.mubr.bf16.gmra.mxu0 %v1891
  %v2289 = vpop.f32.mrf.mxu0
  %v2290 = vadd.f32 0.0, %v2289
  %v2291 = vpop.f32.mrf.mxu0
  %v2292 = vpop.f32.mrf.mxu0
  %v2293 = vpop.f32.mrf.mxu0
  %2294 = vmatprep.mubr.bf16.mxu0 0
  %2295 = vmatmul.mubr.bf16.gmra.mxu0 %v1894
  %v2296 = vpop.f32.mrf.mxu0
  %v2297 = vadd.f32 0.0, %v2296
  %v2298 = vpop.f32.mrf.mxu0
  %v2299 = vpop.f32.mrf.mxu0
  %v2300 = vadd.f32 0.0, %v2299
  %v2301 = vpop.f32.mrf.mxu0
  %2302 = vmatprep.mubr.bf16.mxu0 0
  %2303 = vmatmul.mubr.bf16.gmra.mxu0 %v1897
  %v2304 = vpop.f32.mrf.mxu0
  %v2305 = vadd.f32 0.0, %v2304
  %v2306 = vpop.f32.mrf.mxu0
  %v2307 = vpop.f32.mrf.mxu0
  %v2308 = vadd.f32 0.0, %v2307
  %v2309 = vpop.f32.mrf.mxu0
  %2310 = vmatprep.mubr.bf16.mxu0 0
  %2311 = vmatmul.mubr.bf16.gmra.mxu0 %v1900
  %v2312 = vpop.f32.mrf.mxu0
  %v2313 = vadd.f32 0.0, %v2312
  %v2314 = vpop.f32.mrf.mxu0
  %v2315 = vpop.f32.mrf.mxu0
  %v2316 = vadd.f32 0.0, %v2315
  %v2317 = vpop.f32.mrf.mxu0
  %2318 = vmatprep.mubr.bf16.mxu0 0
  %2319 = vmatmul.mubr.bf16.gmra.mxu0 %v1903
  %v2320 = vpop.f32.mrf.mxu0
  %v2321 = vadd.f32 0.0, %v2320
  %v2322 = vpop.f32.mrf.mxu0
  %v2323 = vpop.f32.mrf.mxu0
  %v2324 = vpop.f32.mrf.mxu0
  %2325 = vdwg.mxu0
  %v2340 = vrot.slane %v2266, 1
  %v2341 = vrot.slane %v2269, 1
  %v2342 = vrot.slane %v2274, 1
  %v2343 = vrot.slane %v2277, 1
  %v2344 = vrot.slane %v2282, 1
  %v2345 = vrot.slane %v2285, 1
  %v2346 = vrot.slane %v2290, 1
  %v2347 = vrot.slane %v2297, 1
  %v2348 = vrot.slane %v2300, 1
  %v2349 = vrot.slane %v2305, 1
  %v2350 = vrot.slane %v2308, 1
  %v2351 = vrot.slane %v2313, 1
  %v2352 = vrot.slane %v2316, 1
  %v2353 = vrot.slane %v2321, 1
  %v2368 = vadd.f32 %v2184, %v2340
  %v2369 = vadd.f32 %v2185, %v2341
  %v2370 = vadd.f32 %v2186, %v2342
  %v2371 = vadd.f32 %v2187, %v2343
  %v2372 = vadd.f32 %v2188, %v2344
  %v2373 = vadd.f32 %v2189, %v2345
  %v2374 = vadd.f32 %v2190, %v2346
  %v2375 = vadd.f32 %v2191, %v2347
  %v2376 = vadd.f32 %v2192, %v2348
  %v2377 = vadd.f32 %v2193, %v2349
  %v2378 = vadd.f32 %v2194, %v2350
  %v2379 = vadd.f32 %v2195, %v2351
  %v2380 = vadd.f32 %v2196, %v2352
  %v2381 = vadd.f32 %v2197, %v2353
  %s2382 = scalar_lea.vmem %s5, 128
  %v2383 = vld [vmem:[%s2382] sm:$0xf]
  %v2384 = vld [vmem:[%s2382 + $0x4] sm:$0xf]
  %v2385 = vld [vmem:[%s2382 + $0x8] sm:$0xf]
  %v2386 = vld [vmem:[%s2382 + $0xc] sm:$0xf]
  %v2387 = vld [vmem:[%s2382 + $0x10] sm:$0xf]
  %v2388 = vld [vmem:[%s2382 + $0x14] sm:$0xf]
  %v2389 = vld [vmem:[%s2382 + $0x18] sm:$0xf]
  %v2390 = vld [vmem:[%s2382 + $0x1c] sm:$0xf]
  %v2399 = vunpack.c.l.b16 %v2383
  %v2400 = vunpack.c.l.b16 %v2384
  %v2401 = vunpack.c.l.b16 %v2385
  %v2402 = vunpack.c.l.b16 %v2386
  %v2403 = vunpack.c.l.b16 %v2387
  %v2404 = vunpack.c.l.b16 %v2388
  %v2405 = vunpack.c.l.b16 %v2389
  %v2406 = vunpack.c.l.b16 %v2390
  %v2407 = vpack.c.b16 %v2400, %v2399
  %v2408 = vpack.c.b16 %v2402, %v2401
  %v2409 = vpack.c.b16 %v2404, %v2403
  %v2410 = vpack.c.b16 %v2406, %v2405
  %v2416 = vsel %vm656, %v1667, 0
  %v2419 = vsel %vm656, %v1668, 0
  %v2422 = vsel %vm656, %v1669, 0
  %v2425 = vsel %vm656, %v1670, 0
  %v2428 = vsel %vm656, %v1671, 0
  %v2431 = vsel %vm656, %v1672, 0
  %v2434 = vsel %vm656, %v1673, 0
  %v2437 = vsel %vm656, %v1674, 0
  %2439 = vmatprep.subr.bf16.mxu0 0
  %2440 = vmatpush1.bf16.msra.mxu0 0
  %2441 = vmatprep.subr.bf16.mxu0 0
  %2442 = vmatpush1.bf16.msra.mxu0 0
  %2443 = vmatprep.subr.bf16.mxu0 0
  %2444 = vmatpush1.bf16.msra.mxu0 0
  %2445 = vmatprep.subr.bf16.mxu0 0
  %2446 = vmatpush1.bf16.msra.mxu0 0
  %2447 = vmatprep.subr.bf16.mxu0 0
  %2448 = vmatpush1.bf16.msra.mxu0 %v2410
  %2449 = vmatprep.subr.bf16.mxu0 0
  %2450 = vmatpush1.bf16.msra.mxu0 %v2409
  %2451 = vmatprep.subr.bf16.mxu0 0
  %2452 = vmatpush1.bf16.msra.mxu0 %v2408
  %2453 = vmatprep.subr.bf16.mxu0 0
  %2454 = vmatpush1.bf16.msra.mxu0 %v2407
  %2455 = vmatprep.subr.bf16.mxu0 0
  %2456 = vmatpush2.bf16.msra.mxu0 0
  %2457 = vmatprep.subr.bf16.mxu0 0
  %2458 = vmatpush2.bf16.msra.mxu0 0
  %2459 = vmatprep.subr.bf16.mxu0 0
  %2460 = vmatpush2.bf16.msra.mxu0 0
  %2461 = vmatprep.subr.bf16.mxu0 0
  %2462 = vmatpush2.bf16.msra.mxu0 0
  %2463 = vmatprep.subr.bf16.mxu0 0
  %2464 = vmatpush2.bf16.msra.mxu0 0
  %2465 = vmatprep.subr.bf16.mxu0 0
  %2466 = vmatpush2.bf16.msra.mxu0 0
  %2467 = vmatprep.subr.bf16.mxu0 0
  %2468 = vmatpush2.bf16.msra.mxu0 0
  %2469 = vmatprep.subr.bf16.mxu0 0
  %2470 = vmatpush2.bf16.msra.mxu0 0
  %2471 = vmatprep.mubr.bf16.mxu0 0
  %2472 = vmatmul.mubr.bf16.gmra.mxu0 %v2416
  %v2473 = vpop.f32.mrf.mxu0
  %v2474 = vadd.f32 0.0, %v2473
  %v2475 = vpop.f32.mrf.mxu0
  %v2476 = vpop.f32.mrf.mxu0
  %v2477 = vadd.f32 0.0, %v2476
  %v2478 = vpop.f32.mrf.mxu0
  %2479 = vmatprep.mubr.bf16.mxu0 0
  %2480 = vmatmul.mubr.bf16.gmra.mxu0 %v2419
  %v2481 = vpop.f32.mrf.mxu0
  %v2482 = vadd.f32 0.0, %v2481
  %v2483 = vpop.f32.mrf.mxu0
  %v2484 = vpop.f32.mrf.mxu0
  %v2485 = vadd.f32 0.0, %v2484
  %v2486 = vpop.f32.mrf.mxu0
  %2487 = vmatprep.mubr.bf16.mxu0 0
  %2488 = vmatmul.mubr.bf16.gmra.mxu0 %v2422
  %v2489 = vpop.f32.mrf.mxu0
  %v2490 = vadd.f32 0.0, %v2489
  %v2491 = vpop.f32.mrf.mxu0
  %v2492 = vpop.f32.mrf.mxu0
  %v2493 = vadd.f32 0.0, %v2492
  %v2494 = vpop.f32.mrf.mxu0
  %2495 = vmatprep.mubr.bf16.mxu0 0
  %2496 = vmatmul.mubr.bf16.gmra.mxu0 %v2425
  %v2497 = vpop.f32.mrf.mxu0
  %v2498 = vadd.f32 0.0, %v2497
  %v2499 = vpop.f32.mrf.mxu0
  %v2500 = vpop.f32.mrf.mxu0
  %v2501 = vpop.f32.mrf.mxu0
  %2502 = vmatprep.mubr.bf16.mxu0 0
  %2503 = vmatmul.mubr.bf16.gmra.mxu0 %v2428
  %v2504 = vpop.f32.mrf.mxu0
  %v2505 = vadd.f32 0.0, %v2504
  %v2506 = vpop.f32.mrf.mxu0
  %v2507 = vpop.f32.mrf.mxu0
  %v2508 = vadd.f32 0.0, %v2507
  %v2509 = vpop.f32.mrf.mxu0
  %2510 = vmatprep.mubr.bf16.mxu0 0
  %2511 = vmatmul.mubr.bf16.gmra.mxu0 %v2431
  %v2512 = vpop.f32.mrf.mxu0
  %v2513 = vadd.f32 0.0, %v2512
  %v2514 = vpop.f32.mrf.mxu0
  %v2515 = vpop.f32.mrf.mxu0
  %v2516 = vadd.f32 0.0, %v2515
  %v2517 = vpop.f32.mrf.mxu0
  %2518 = vmatprep.mubr.bf16.mxu0 0
  %2519 = vmatmul.mubr.bf16.gmra.mxu0 %v2434
  %v2520 = vpop.f32.mrf.mxu0
  %v2521 = vadd.f32 0.0, %v2520
  %v2522 = vpop.f32.mrf.mxu0
  %v2523 = vpop.f32.mrf.mxu0
  %v2524 = vadd.f32 0.0, %v2523
  %v2525 = vpop.f32.mrf.mxu0
  %2526 = vmatprep.mubr.bf16.mxu0 0
  %2527 = vmatmul.mubr.bf16.gmra.mxu0 %v2437
  %v2528 = vpop.f32.mrf.mxu0
  %v2529 = vadd.f32 0.0, %v2528
  %v2530 = vpop.f32.mrf.mxu0
  %v2531 = vpop.f32.mrf.mxu0
  %v2532 = vpop.f32.mrf.mxu0
  %2533 = vdwg.mxu0
  %v2534 = vadd.f32 %v2368, %v2474
  %v2535 = vadd.f32 %v2369, %v2477
  %v2536 = vadd.f32 %v2370, %v2482
  %v2537 = vadd.f32 %v2371, %v2485
  %v2538 = vadd.f32 %v2372, %v2490
  %v2539 = vadd.f32 %v2373, %v2493
  %v2540 = vadd.f32 %v2374, %v2498
  %v2541 = vadd.f32 %v2375, %v2505
  %v2542 = vadd.f32 %v2376, %v2508
  %v2543 = vadd.f32 %v2377, %v2513
  %v2544 = vadd.f32 %v2378, %v2516
  %v2545 = vadd.f32 %v2379, %v2521
  %v2546 = vadd.f32 %v2380, %v2524
  %v2547 = vadd.f32 %v2381, %v2529
  %s2548 = scalar_lea.vmem %s5, 160
  %v2549 = vld [vmem:[%s2548] sm:$0xf]
  %v2550 = vld [vmem:[%s2548 + $0x4] sm:$0xf]
  %v2551 = vld [vmem:[%s2548 + $0x8] sm:$0xf]
  %v2552 = vld [vmem:[%s2548 + $0xc] sm:$0xf]
  %v2553 = vld [vmem:[%s2548 + $0x10] sm:$0xf]
  %v2554 = vld [vmem:[%s2548 + $0x14] sm:$0xf]
  %v2555 = vld [vmem:[%s2548 + $0x18] sm:$0xf]
  %v2556 = vld [vmem:[%s2548 + $0x1c] sm:$0xf]
  %v2565 = vunpack.c.l.b16 %v2549
  %v2566 = vunpack.c.l.b16 %v2550
  %v2567 = vunpack.c.l.b16 %v2551
  %v2568 = vunpack.c.l.b16 %v2552
  %v2569 = vunpack.c.l.b16 %v2553
  %v2570 = vunpack.c.l.b16 %v2554
  %v2571 = vunpack.c.l.b16 %v2555
  %v2572 = vunpack.c.l.b16 %v2556
  %v2573 = vpack.c.b16 %v2566, %v2565
  %v2574 = vpack.c.b16 %v2568, %v2567
  %v2575 = vpack.c.b16 %v2570, %v2569
  %v2576 = vpack.c.b16 %v2572, %v2571
  %v2582 = vsel %vm656, %v1675, 0
  %v2585 = vsel %vm656, %v1676, 0
  %v2588 = vsel %vm656, %v1677, 0
  %v2591 = vsel %vm656, %v1678, 0
  %v2594 = vsel %vm656, %v1679, 0
  %v2597 = vsel %vm656, %v1680, 0
  %v2600 = vsel %vm656, %v1681, 0
  %v2603 = vsel %vm656, %v1682, 0
  %2605 = vmatprep.subr.bf16.mxu0 0
  %2606 = vmatpush1.bf16.msra.mxu0 0
  %2607 = vmatprep.subr.bf16.mxu0 0
  %2608 = vmatpush1.bf16.msra.mxu0 0
  %2609 = vmatprep.subr.bf16.mxu0 0
  %2610 = vmatpush1.bf16.msra.mxu0 0
  %2611 = vmatprep.subr.bf16.mxu0 0
  %2612 = vmatpush1.bf16.msra.mxu0 0
  %2613 = vmatprep.subr.bf16.mxu0 0
  %2614 = vmatpush1.bf16.msra.mxu0 %v2576
  %2615 = vmatprep.subr.bf16.mxu0 0
  %2616 = vmatpush1.bf16.msra.mxu0 %v2575
  %2617 = vmatprep.subr.bf16.mxu0 0
  %2618 = vmatpush1.bf16.msra.mxu0 %v2574
  %2619 = vmatprep.subr.bf16.mxu0 0
  %2620 = vmatpush1.bf16.msra.mxu0 %v2573
  %2621 = vmatprep.subr.bf16.mxu0 0
  %2622 = vmatpush2.bf16.msra.mxu0 0
  %2623 = vmatprep.subr.bf16.mxu0 0
  %2624 = vmatpush2.bf16.msra.mxu0 0
  %2625 = vmatprep.subr.bf16.mxu0 0
  %2626 = vmatpush2.bf16.msra.mxu0 0
  %2627 = vmatprep.subr.bf16.mxu0 0
  %2628 = vmatpush2.bf16.msra.mxu0 0
  %2629 = vmatprep.subr.bf16.mxu0 0
  %2630 = vmatpush2.bf16.msra.mxu0 0
  %2631 = vmatprep.subr.bf16.mxu0 0
  %2632 = vmatpush2.bf16.msra.mxu0 0
  %2633 = vmatprep.subr.bf16.mxu0 0
  %2634 = vmatpush2.bf16.msra.mxu0 0
  %2635 = vmatprep.subr.bf16.mxu0 0
  %2636 = vmatpush2.bf16.msra.mxu0 0
  %2637 = vmatprep.mubr.bf16.mxu0 0
  %2638 = vmatmul.mubr.bf16.gmra.mxu0 %v2582
  %v2639 = vpop.f32.mrf.mxu0
  %v2640 = vadd.f32 0.0, %v2639
  %v2641 = vpop.f32.mrf.mxu0
  %v2642 = vpop.f32.mrf.mxu0
  %v2643 = vadd.f32 0.0, %v2642
  %v2644 = vpop.f32.mrf.mxu0
  %2645 = vmatprep.mubr.bf16.mxu0 0
  %2646 = vmatmul.mubr.bf16.gmra.mxu0 %v2585
  %v2647 = vpop.f32.mrf.mxu0
  %v2648 = vadd.f32 0.0, %v2647
  %v2649 = vpop.f32.mrf.mxu0
  %v2650 = vpop.f32.mrf.mxu0
  %v2651 = vadd.f32 0.0, %v2650
  %v2652 = vpop.f32.mrf.mxu0
  %2653 = vmatprep.mubr.bf16.mxu0 0
  %2654 = vmatmul.mubr.bf16.gmra.mxu0 %v2588
  %v2655 = vpop.f32.mrf.mxu0
  %v2656 = vadd.f32 0.0, %v2655
  %v2657 = vpop.f32.mrf.mxu0
  %v2658 = vpop.f32.mrf.mxu0
  %v2659 = vadd.f32 0.0, %v2658
  %v2660 = vpop.f32.mrf.mxu0
  %2661 = vmatprep.mubr.bf16.mxu0 0
  %2662 = vmatmul.mubr.bf16.gmra.mxu0 %v2591
  %v2663 = vpop.f32.mrf.mxu0
  %v2664 = vadd.f32 0.0, %v2663
  %v2665 = vpop.f32.mrf.mxu0
  %v2666 = vpop.f32.mrf.mxu0
  %v2667 = vpop.f32.mrf.mxu0
  %2668 = vmatprep.mubr.bf16.mxu0 0
  %2669 = vmatmul.mubr.bf16.gmra.mxu0 %v2594
  %v2670 = vpop.f32.mrf.mxu0
  %v2671 = vadd.f32 0.0, %v2670
  %v2672 = vpop.f32.mrf.mxu0
  %v2673 = vpop.f32.mrf.mxu0
  %v2674 = vadd.f32 0.0, %v2673
  %v2675 = vpop.f32.mrf.mxu0
  %2676 = vmatprep.mubr.bf16.mxu0 0
  %2677 = vmatmul.mubr.bf16.gmra.mxu0 %v2597
  %v2678 = vpop.f32.mrf.mxu0
  %v2679 = vadd.f32 0.0, %v2678
  %v2680 = vpop.f32.mrf.mxu0
  %v2681 = vpop.f32.mrf.mxu0
  %v2682 = vadd.f32 0.0, %v2681
  %v2683 = vpop.f32.mrf.mxu0
  %2684 = vmatprep.mubr.bf16.mxu0 0
  %2685 = vmatmul.mubr.bf16.gmra.mxu0 %v2600
  %v2686 = vpop.f32.mrf.mxu0
  %v2687 = vadd.f32 0.0, %v2686
  %v2688 = vpop.f32.mrf.mxu0
  %v2689 = vpop.f32.mrf.mxu0
  %v2690 = vadd.f32 0.0, %v2689
  %v2691 = vpop.f32.mrf.mxu0
  %2692 = vmatprep.mubr.bf16.mxu0 0
  %2693 = vmatmul.mubr.bf16.gmra.mxu0 %v2603
  %v2694 = vpop.f32.mrf.mxu0
  %v2695 = vadd.f32 0.0, %v2694
  %v2696 = vpop.f32.mrf.mxu0
  %v2697 = vpop.f32.mrf.mxu0
  %v2698 = vpop.f32.mrf.mxu0
  %2699 = vdwg.mxu0
  %v2700 = vadd.f32 %v2534, %v2640
  %v2701 = vadd.f32 %v2535, %v2643
  %v2702 = vadd.f32 %v2536, %v2648
  %v2703 = vadd.f32 %v2537, %v2651
  %v2704 = vadd.f32 %v2538, %v2656
  %v2705 = vadd.f32 %v2539, %v2659
  %v2706 = vadd.f32 %v2540, %v2664
  %v2707 = vadd.f32 %v2541, %v2671
  %v2708 = vadd.f32 %v2542, %v2674
  %v2709 = vadd.f32 %v2543, %v2679
  %v2710 = vadd.f32 %v2544, %v2682
  %v2711 = vadd.f32 %v2545, %v2687
  %v2712 = vadd.f32 %v2546, %v2690
  %v2713 = vadd.f32 %v2547, %v2695
  %s2714 = scalar_lea.vmem %s5, 192
  %v2715 = vld [vmem:[%s2714] sm:$0xf]
  %v2716 = vld [vmem:[%s2714 + $0x4] sm:$0xf]
  %v2717 = vld [vmem:[%s2714 + $0x8] sm:$0xf]
  %v2718 = vld [vmem:[%s2714 + $0xc] sm:$0xf]
  %v2719 = vld [vmem:[%s2714 + $0x10] sm:$0xf]
  %v2720 = vld [vmem:[%s2714 + $0x14] sm:$0xf]
  %v2721 = vld [vmem:[%s2714 + $0x18] sm:$0xf]
  %v2722 = vld [vmem:[%s2714 + $0x1c] sm:$0xf]
  %v2731 = vunpack.c.l.b16 %v2715
  %v2732 = vunpack.c.l.b16 %v2716
  %v2733 = vunpack.c.l.b16 %v2717
  %v2734 = vunpack.c.l.b16 %v2718
  %v2735 = vunpack.c.l.b16 %v2719
  %v2736 = vunpack.c.l.b16 %v2720
  %v2737 = vunpack.c.l.b16 %v2721
  %v2738 = vunpack.c.l.b16 %v2722
  %v2739 = vpack.c.b16 %v2732, %v2731
  %v2740 = vpack.c.b16 %v2734, %v2733
  %v2741 = vpack.c.b16 %v2736, %v2735
  %v2742 = vpack.c.b16 %v2738, %v2737
  %2747 = vmatprep.subr.bf16.mxu0 0
  %2748 = vmatpush1.bf16.msra.mxu0 0
  %2749 = vmatprep.subr.bf16.mxu0 0
  %2750 = vmatpush1.bf16.msra.mxu0 0
  %2751 = vmatprep.subr.bf16.mxu0 0
  %2752 = vmatpush1.bf16.msra.mxu0 0
  %2753 = vmatprep.subr.bf16.mxu0 0
  %2754 = vmatpush1.bf16.msra.mxu0 0
  %2755 = vmatprep.subr.bf16.mxu0 0
  %2756 = vmatpush1.bf16.msra.mxu0 %v2742
  %2757 = vmatprep.subr.bf16.mxu0 0
  %2758 = vmatpush1.bf16.msra.mxu0 %v2741
  %2759 = vmatprep.subr.bf16.mxu0 0
  %2760 = vmatpush1.bf16.msra.mxu0 %v2740
  %2761 = vmatprep.subr.bf16.mxu0 0
  %2762 = vmatpush1.bf16.msra.mxu0 %v2739
  %2763 = vmatprep.subr.bf16.mxu0 0
  %2764 = vmatpush2.bf16.msra.mxu0 0
  %2765 = vmatprep.subr.bf16.mxu0 0
  %2766 = vmatpush2.bf16.msra.mxu0 0
  %2767 = vmatprep.subr.bf16.mxu0 0
  %2768 = vmatpush2.bf16.msra.mxu0 0
  %2769 = vmatprep.subr.bf16.mxu0 0
  %2770 = vmatpush2.bf16.msra.mxu0 0
  %2771 = vmatprep.subr.bf16.mxu0 0
  %2772 = vmatpush2.bf16.msra.mxu0 0
  %2773 = vmatprep.subr.bf16.mxu0 0
  %2774 = vmatpush2.bf16.msra.mxu0 0
  %2775 = vmatprep.subr.bf16.mxu0 0
  %2776 = vmatpush2.bf16.msra.mxu0 0
  %2777 = vmatprep.subr.bf16.mxu0 0
  %2778 = vmatpush2.bf16.msra.mxu0 0
  %2779 = vmatprep.mubr.bf16.mxu0 0
  %2780 = vmatmul.mubr.bf16.gmra.mxu0 %v2416
  %v2781 = vpop.f32.mrf.mxu0
  %v2782 = vadd.f32 0.0, %v2781
  %v2783 = vpop.f32.mrf.mxu0
  %v2784 = vpop.f32.mrf.mxu0
  %v2785 = vadd.f32 0.0, %v2784
  %v2786 = vpop.f32.mrf.mxu0
  %2787 = vmatprep.mubr.bf16.mxu0 0
  %2788 = vmatmul.mubr.bf16.gmra.mxu0 %v2419
  %v2789 = vpop.f32.mrf.mxu0
  %v2790 = vadd.f32 0.0, %v2789
  %v2791 = vpop.f32.mrf.mxu0
  %v2792 = vpop.f32.mrf.mxu0
  %v2793 = vadd.f32 0.0, %v2792
  %v2794 = vpop.f32.mrf.mxu0
  %2795 = vmatprep.mubr.bf16.mxu0 0
  %2796 = vmatmul.mubr.bf16.gmra.mxu0 %v2422
  %v2797 = vpop.f32.mrf.mxu0
  %v2798 = vadd.f32 0.0, %v2797
  %v2799 = vpop.f32.mrf.mxu0
  %v2800 = vpop.f32.mrf.mxu0
  %v2801 = vadd.f32 0.0, %v2800
  %v2802 = vpop.f32.mrf.mxu0
  %2803 = vmatprep.mubr.bf16.mxu0 0
  %2804 = vmatmul.mubr.bf16.gmra.mxu0 %v2425
  %v2805 = vpop.f32.mrf.mxu0
  %v2806 = vadd.f32 0.0, %v2805
  %v2807 = vpop.f32.mrf.mxu0
  %v2808 = vpop.f32.mrf.mxu0
  %v2809 = vpop.f32.mrf.mxu0
  %2810 = vmatprep.mubr.bf16.mxu0 0
  %2811 = vmatmul.mubr.bf16.gmra.mxu0 %v2428
  %v2812 = vpop.f32.mrf.mxu0
  %v2813 = vadd.f32 0.0, %v2812
  %v2814 = vpop.f32.mrf.mxu0
  %v2815 = vpop.f32.mrf.mxu0
  %v2816 = vadd.f32 0.0, %v2815
  %v2817 = vpop.f32.mrf.mxu0
  %2818 = vmatprep.mubr.bf16.mxu0 0
  %2819 = vmatmul.mubr.bf16.gmra.mxu0 %v2431
  %v2820 = vpop.f32.mrf.mxu0
  %v2821 = vadd.f32 0.0, %v2820
  %v2822 = vpop.f32.mrf.mxu0
  %v2823 = vpop.f32.mrf.mxu0
  %v2824 = vadd.f32 0.0, %v2823
  %v2825 = vpop.f32.mrf.mxu0
  %2826 = vmatprep.mubr.bf16.mxu0 0
  %2827 = vmatmul.mubr.bf16.gmra.mxu0 %v2434
  %v2828 = vpop.f32.mrf.mxu0
  %v2829 = vadd.f32 0.0, %v2828
  %v2830 = vpop.f32.mrf.mxu0
  %v2831 = vpop.f32.mrf.mxu0
  %v2832 = vadd.f32 0.0, %v2831
  %v2833 = vpop.f32.mrf.mxu0
  %2834 = vmatprep.mubr.bf16.mxu0 0
  %2835 = vmatmul.mubr.bf16.gmra.mxu0 %v2437
  %v2836 = vpop.f32.mrf.mxu0
  %v2837 = vadd.f32 0.0, %v2836
  %v2838 = vpop.f32.mrf.mxu0
  %v2839 = vpop.f32.mrf.mxu0
  %v2840 = vpop.f32.mrf.mxu0
  %2841 = vdwg.mxu0
  %v2856 = vrot.slane %v2782, 1
  %v2857 = vrot.slane %v2785, 1
  %v2858 = vrot.slane %v2790, 1
  %v2859 = vrot.slane %v2793, 1
  %v2860 = vrot.slane %v2798, 1
  %v2861 = vrot.slane %v2801, 1
  %v2862 = vrot.slane %v2806, 1
  %v2863 = vrot.slane %v2813, 1
  %v2864 = vrot.slane %v2816, 1
  %v2865 = vrot.slane %v2821, 1
  %v2866 = vrot.slane %v2824, 1
  %v2867 = vrot.slane %v2829, 1
  %v2868 = vrot.slane %v2832, 1
  %v2869 = vrot.slane %v2837, 1
  %v2884 = vadd.f32 %v2700, %v2856
  %v2885 = vadd.f32 %v2701, %v2857
  %v2886 = vadd.f32 %v2702, %v2858
  %v2887 = vadd.f32 %v2703, %v2859
  %v2888 = vadd.f32 %v2704, %v2860
  %v2889 = vadd.f32 %v2705, %v2861
  %v2890 = vadd.f32 %v2706, %v2862
  %v2891 = vadd.f32 %v2707, %v2863
  %v2892 = vadd.f32 %v2708, %v2864
  %v2893 = vadd.f32 %v2709, %v2865
  %v2894 = vadd.f32 %v2710, %v2866
  %v2895 = vadd.f32 %v2711, %v2867
  %v2896 = vadd.f32 %v2712, %v2868
  %v2897 = vadd.f32 %v2713, %v2869
  %s2898 = scalar_lea.vmem %s5, 224
  %v2899 = vld [vmem:[%s2898] sm:$0xf]
  %v2900 = vld [vmem:[%s2898 + $0x4] sm:$0xf]
  %v2901 = vld [vmem:[%s2898 + $0x8] sm:$0xf]
  %v2902 = vld [vmem:[%s2898 + $0xc] sm:$0xf]
  %v2903 = vld [vmem:[%s2898 + $0x10] sm:$0xf]
  %v2904 = vld [vmem:[%s2898 + $0x14] sm:$0xf]
  %v2905 = vld [vmem:[%s2898 + $0x18] sm:$0xf]
  %v2906 = vld [vmem:[%s2898 + $0x1c] sm:$0xf]
  %v2915 = vunpack.c.l.b16 %v2899
  %v2916 = vunpack.c.l.b16 %v2900
  %v2917 = vunpack.c.l.b16 %v2901
  %v2918 = vunpack.c.l.b16 %v2902
  %v2919 = vunpack.c.l.b16 %v2903
  %v2920 = vunpack.c.l.b16 %v2904
  %v2921 = vunpack.c.l.b16 %v2905
  %v2922 = vunpack.c.l.b16 %v2906
  %v2923 = vpack.c.b16 %v2916, %v2915
  %v2924 = vpack.c.b16 %v2918, %v2917
  %v2925 = vpack.c.b16 %v2920, %v2919
  %v2926 = vpack.c.b16 %v2922, %v2921
  %2931 = vmatprep.subr.bf16.mxu0 0
  %2932 = vmatpush1.bf16.msra.mxu0 0
  %2933 = vmatprep.subr.bf16.mxu0 0
  %2934 = vmatpush1.bf16.msra.mxu0 0
  %2935 = vmatprep.subr.bf16.mxu0 0
  %2936 = vmatpush1.bf16.msra.mxu0 0
  %2937 = vmatprep.subr.bf16.mxu0 0
  %2938 = vmatpush1.bf16.msra.mxu0 0
  %2939 = vmatprep.subr.bf16.mxu0 0
  %2940 = vmatpush1.bf16.msra.mxu0 %v2926
  %2941 = vmatprep.subr.bf16.mxu0 0
  %2942 = vmatpush1.bf16.msra.mxu0 %v2925
  %2943 = vmatprep.subr.bf16.mxu0 0
  %2944 = vmatpush1.bf16.msra.mxu0 %v2924
  %2945 = vmatprep.subr.bf16.mxu0 0
  %2946 = vmatpush1.bf16.msra.mxu0 %v2923
  %2947 = vmatprep.subr.bf16.mxu0 0
  %2948 = vmatpush2.bf16.msra.mxu0 0
  %2949 = vmatprep.subr.bf16.mxu0 0
  %2950 = vmatpush2.bf16.msra.mxu0 0
  %2951 = vmatprep.subr.bf16.mxu0 0
  %2952 = vmatpush2.bf16.msra.mxu0 0
  %2953 = vmatprep.subr.bf16.mxu0 0
  %2954 = vmatpush2.bf16.msra.mxu0 0
  %2955 = vmatprep.subr.bf16.mxu0 0
  %2956 = vmatpush2.bf16.msra.mxu0 0
  %2957 = vmatprep.subr.bf16.mxu0 0
  %2958 = vmatpush2.bf16.msra.mxu0 0
  %2959 = vmatprep.subr.bf16.mxu0 0
  %2960 = vmatpush2.bf16.msra.mxu0 0
  %2961 = vmatprep.subr.bf16.mxu0 0
  %2962 = vmatpush2.bf16.msra.mxu0 0
  %2963 = vmatprep.mubr.bf16.mxu0 0
  %2964 = vmatmul.mubr.bf16.gmra.mxu0 %v2582
  %v2965 = vpop.f32.mrf.mxu0
  %v2966 = vadd.f32 0.0, %v2965
  %v2967 = vpop.f32.mrf.mxu0
  %v2968 = vpop.f32.mrf.mxu0
  %v2969 = vadd.f32 0.0, %v2968
  %v2970 = vpop.f32.mrf.mxu0
  %2971 = vmatprep.mubr.bf16.mxu0 0
  %2972 = vmatmul.mubr.bf16.gmra.mxu0 %v2585
  %v2973 = vpop.f32.mrf.mxu0
  %v2974 = vadd.f32 0.0, %v2973
  %v2975 = vpop.f32.mrf.mxu0
  %v2976 = vpop.f32.mrf.mxu0
  %v2977 = vadd.f32 0.0, %v2976
  %v2978 = vpop.f32.mrf.mxu0
  %2979 = vmatprep.mubr.bf16.mxu0 0
  %2980 = vmatmul.mubr.bf16.gmra.mxu0 %v2588
  %v2981 = vpop.f32.mrf.mxu0
  %v2982 = vadd.f32 0.0, %v2981
  %v2983 = vpop.f32.mrf.mxu0
  %v2984 = vpop.f32.mrf.mxu0
  %v2985 = vadd.f32 0.0, %v2984
  %v2986 = vpop.f32.mrf.mxu0
  %2987 = vmatprep.mubr.bf16.mxu0 0
  %2988 = vmatmul.mubr.bf16.gmra.mxu0 %v2591
  %v2989 = vpop.f32.mrf.mxu0
  %v2990 = vadd.f32 0.0, %v2989
  %v2991 = vpop.f32.mrf.mxu0
  %v2992 = vpop.f32.mrf.mxu0
  %v2993 = vpop.f32.mrf.mxu0
  %2994 = vmatprep.mubr.bf16.mxu0 0
  %2995 = vmatmul.mubr.bf16.gmra.mxu0 %v2594
  %v2996 = vpop.f32.mrf.mxu0
  %v2997 = vadd.f32 0.0, %v2996
  %v2998 = vpop.f32.mrf.mxu0
  %v2999 = vpop.f32.mrf.mxu0
  %v3000 = vadd.f32 0.0, %v2999
  %v3001 = vpop.f32.mrf.mxu0
  %3002 = vmatprep.mubr.bf16.mxu0 0
  %3003 = vmatmul.mubr.bf16.gmra.mxu0 %v2597
  %v3004 = vpop.f32.mrf.mxu0
  %v3005 = vadd.f32 0.0, %v3004
  %v3006 = vpop.f32.mrf.mxu0
  %v3007 = vpop.f32.mrf.mxu0
  %v3008 = vadd.f32 0.0, %v3007
  %v3009 = vpop.f32.mrf.mxu0
  %3010 = vmatprep.mubr.bf16.mxu0 0
  %3011 = vmatmul.mubr.bf16.gmra.mxu0 %v2600
  %v3012 = vpop.f32.mrf.mxu0
  %v3013 = vadd.f32 0.0, %v3012
  %v3014 = vpop.f32.mrf.mxu0
  %v3015 = vpop.f32.mrf.mxu0
  %v3016 = vadd.f32 0.0, %v3015
  %v3017 = vpop.f32.mrf.mxu0
  %3018 = vmatprep.mubr.bf16.mxu0 0
  %3019 = vmatmul.mubr.bf16.gmra.mxu0 %v2603
  %v3020 = vpop.f32.mrf.mxu0
  %v3021 = vadd.f32 0.0, %v3020
  %v3022 = vpop.f32.mrf.mxu0
  %v3023 = vpop.f32.mrf.mxu0
  %v3024 = vpop.f32.mrf.mxu0
  %3025 = vdwg.mxu0
  %v3040 = vrot.slane %v2966, 1
  %v3041 = vrot.slane %v2969, 1
  %v3042 = vrot.slane %v2974, 1
  %v3043 = vrot.slane %v2977, 1
  %v3044 = vrot.slane %v2982, 1
  %v3045 = vrot.slane %v2985, 1
  %v3046 = vrot.slane %v2990, 1
  %v3047 = vrot.slane %v2997, 1
  %v3048 = vrot.slane %v3000, 1
  %v3049 = vrot.slane %v3005, 1
  %v3050 = vrot.slane %v3008, 1
  %v3051 = vrot.slane %v3013, 1
  %v3052 = vrot.slane %v3016, 1
  %v3053 = vrot.slane %v3021, 1
  %v3068 = vadd.f32 %v2884, %v3040
  %v3069 = vadd.f32 %v2885, %v3041
  %v3070 = vadd.f32 %v2886, %v3042
  %v3071 = vadd.f32 %v2887, %v3043
  %v3072 = vadd.f32 %v2888, %v3044
  %v3073 = vadd.f32 %v2889, %v3045
  %v3074 = vadd.f32 %v2890, %v3046
  %v3075 = vadd.f32 %v2891, %v3047
  %v3076 = vadd.f32 %v2892, %v3048
  %v3077 = vadd.f32 %v2893, %v3049
  %v3078 = vadd.f32 %v2894, %v3050
  %v3079 = vadd.f32 %v2895, %v3051
  %v3080 = vadd.f32 %v2896, %v3052
  %v3081 = vadd.f32 %v2897, %v3053
  %s3082 = scalar_lea.vmem %s5, 256
  %v3083 = vld [vmem:[%s3082] sm:$0xf]
  %v3084 = vld [vmem:[%s3082 + $0x4] sm:$0xf]
  %v3085 = vld [vmem:[%s3082 + $0x8] sm:$0xf]
  %v3086 = vld [vmem:[%s3082 + $0xc] sm:$0xf]
  %v3087 = vld [vmem:[%s3082 + $0x10] sm:$0xf]
  %v3088 = vld [vmem:[%s3082 + $0x14] sm:$0xf]
  %v3089 = vld [vmem:[%s3082 + $0x18] sm:$0xf]
  %v3090 = vld [vmem:[%s3082 + $0x1c] sm:$0xf]
  %v3099 = vunpack.c.l.b16 %v3083
  %v3100 = vunpack.c.l.b16 %v3084
  %v3101 = vunpack.c.l.b16 %v3085
  %v3102 = vunpack.c.l.b16 %v3086
  %v3103 = vunpack.c.l.b16 %v3087
  %v3104 = vunpack.c.l.b16 %v3088
  %v3105 = vunpack.c.l.b16 %v3089
  %v3106 = vunpack.c.l.b16 %v3090
  %v3107 = vpack.c.b16 %v3100, %v3099
  %v3108 = vpack.c.b16 %v3102, %v3101
  %v3109 = vpack.c.b16 %v3104, %v3103
  %v3110 = vpack.c.b16 %v3106, %v3105
  %3115 = vmatprep.subr.bf16.mxu0 0
  %3116 = vmatpush1.bf16.msra.mxu0 0
  %3117 = vmatprep.subr.bf16.mxu0 0
  %3118 = vmatpush1.bf16.msra.mxu0 0
  %3119 = vmatprep.subr.bf16.mxu0 0
  %3120 = vmatpush1.bf16.msra.mxu0 0
  %3121 = vmatprep.subr.bf16.mxu0 0
  %3122 = vmatpush1.bf16.msra.mxu0 0
  %3123 = vmatprep.subr.bf16.mxu0 0
  %3124 = vmatpush1.bf16.msra.mxu0 %v3110
  %3125 = vmatprep.subr.bf16.mxu0 0
  %3126 = vmatpush1.bf16.msra.mxu0 %v3109
  %3127 = vmatprep.subr.bf16.mxu0 0
  %3128 = vmatpush1.bf16.msra.mxu0 %v3108
  %3129 = vmatprep.subr.bf16.mxu0 0
  %3130 = vmatpush1.bf16.msra.mxu0 %v3107
  %3131 = vmatprep.subr.bf16.mxu0 0
  %3132 = vmatpush2.bf16.msra.mxu0 0
  %3133 = vmatprep.subr.bf16.mxu0 0
  %3134 = vmatpush2.bf16.msra.mxu0 0
  %3135 = vmatprep.subr.bf16.mxu0 0
  %3136 = vmatpush2.bf16.msra.mxu0 0
  %3137 = vmatprep.subr.bf16.mxu0 0
  %3138 = vmatpush2.bf16.msra.mxu0 0
  %3139 = vmatprep.subr.bf16.mxu0 0
  %3140 = vmatpush2.bf16.msra.mxu0 0
  %3141 = vmatprep.subr.bf16.mxu0 0
  %3142 = vmatpush2.bf16.msra.mxu0 0
  %3143 = vmatprep.subr.bf16.mxu0 0
  %3144 = vmatpush2.bf16.msra.mxu0 0
  %3145 = vmatprep.subr.bf16.mxu0 0
  %3146 = vmatpush2.bf16.msra.mxu0 0
  %3147 = vmatprep.mubr.bf16.mxu0 0
  %3148 = vmatmul.mubr.bf16.gmra.mxu0 %v1716
  %v3149 = vpop.f32.mrf.mxu0
  %v3150 = vpop.f32.mrf.mxu0
  %v3151 = vpop.f32.mrf.mxu0
  %v3152 = vadd.f32 0.0, %v3151
  %v3153 = vpop.f32.mrf.mxu0
  %3154 = vmatprep.mubr.bf16.mxu0 0
  %3155 = vmatmul.mubr.bf16.gmra.mxu0 %v1719
  %v3156 = vpop.f32.mrf.mxu0
  %v3157 = vadd.f32 0.0, %v3156
  %v3158 = vpop.f32.mrf.mxu0
  %v3159 = vpop.f32.mrf.mxu0
  %v3160 = vadd.f32 0.0, %v3159
  %v3161 = vpop.f32.mrf.mxu0
  %3162 = vmatprep.mubr.bf16.mxu0 0
  %3163 = vmatmul.mubr.bf16.gmra.mxu0 %v1722
  %v3164 = vpop.f32.mrf.mxu0
  %v3165 = vadd.f32 0.0, %v3164
  %v3166 = vpop.f32.mrf.mxu0
  %v3167 = vpop.f32.mrf.mxu0
  %v3168 = vadd.f32 0.0, %v3167
  %v3169 = vpop.f32.mrf.mxu0
  %3170 = vmatprep.mubr.bf16.mxu0 0
  %3171 = vmatmul.mubr.bf16.gmra.mxu0 %v1725
  %v3172 = vpop.f32.mrf.mxu0
  %v3173 = vadd.f32 0.0, %v3172
  %v3174 = vpop.f32.mrf.mxu0
  %v3175 = vpop.f32.mrf.mxu0
  %v3176 = vadd.f32 0.0, %v3175
  %v3177 = vpop.f32.mrf.mxu0
  %3178 = vmatprep.mubr.bf16.mxu0 0
  %3179 = vmatmul.mubr.bf16.gmra.mxu0 %v1728
  %v3180 = vpop.f32.mrf.mxu0
  %v3181 = vpop.f32.mrf.mxu0
  %v3182 = vpop.f32.mrf.mxu0
  %v3183 = vadd.f32 0.0, %v3182
  %v3184 = vpop.f32.mrf.mxu0
  %3185 = vmatprep.mubr.bf16.mxu0 0
  %3186 = vmatmul.mubr.bf16.gmra.mxu0 %v1731
  %v3187 = vpop.f32.mrf.mxu0
  %v3188 = vadd.f32 0.0, %v3187
  %v3189 = vpop.f32.mrf.mxu0
  %v3190 = vpop.f32.mrf.mxu0
  %v3191 = vadd.f32 0.0, %v3190
  %v3192 = vpop.f32.mrf.mxu0
  %3193 = vmatprep.mubr.bf16.mxu0 0
  %3194 = vmatmul.mubr.bf16.gmra.mxu0 %v1734
  %v3195 = vpop.f32.mrf.mxu0
  %v3196 = vadd.f32 0.0, %v3195
  %v3197 = vpop.f32.mrf.mxu0
  %v3198 = vpop.f32.mrf.mxu0
  %v3199 = vadd.f32 0.0, %v3198
  %v3200 = vpop.f32.mrf.mxu0
  %3201 = vmatprep.mubr.bf16.mxu0 0
  %3202 = vmatmul.mubr.bf16.gmra.mxu0 %v1737
  %v3203 = vpop.f32.mrf.mxu0
  %v3204 = vadd.f32 0.0, %v3203
  %v3205 = vpop.f32.mrf.mxu0
  %v3206 = vpop.f32.mrf.mxu0
  %v3207 = vadd.f32 0.0, %v3206
  %v3208 = vpop.f32.mrf.mxu0
  %3209 = vdwg.mxu0
  %v3210 = vadd.f32 %v3068, %v3152
  %v3211 = vadd.f32 %v3069, %v3157
  %v3212 = vadd.f32 %v3070, %v3160
  %v3213 = vadd.f32 %v3071, %v3165
  %v3214 = vadd.f32 %v3072, %v3168
  %v3215 = vadd.f32 %v3073, %v3173
  %v3216 = vadd.f32 %v3074, %v3176
  %v3217 = vadd.f32 %v3075, %v3183
  %v3218 = vadd.f32 %v3076, %v3188
  %v3219 = vadd.f32 %v3077, %v3191
  %v3220 = vadd.f32 %v3078, %v3196
  %v3221 = vadd.f32 %v3079, %v3199
  %v3222 = vadd.f32 %v3080, %v3204
  %v3223 = vadd.f32 %v3081, %v3207
  %s3224 = scalar_lea.vmem %s5, 288
  %v3225 = vld [vmem:[%s3224] sm:$0xf]
  %v3226 = vld [vmem:[%s3224 + $0x4] sm:$0xf]
  %v3227 = vld [vmem:[%s3224 + $0x8] sm:$0xf]
  %v3228 = vld [vmem:[%s3224 + $0xc] sm:$0xf]
  %v3229 = vld [vmem:[%s3224 + $0x10] sm:$0xf]
  %v3230 = vld [vmem:[%s3224 + $0x14] sm:$0xf]
  %v3231 = vld [vmem:[%s3224 + $0x18] sm:$0xf]
  %v3232 = vld [vmem:[%s3224 + $0x1c] sm:$0xf]
  %v3241 = vunpack.c.l.b16 %v3225
  %v3242 = vunpack.c.l.b16 %v3226
  %v3243 = vunpack.c.l.b16 %v3227
  %v3244 = vunpack.c.l.b16 %v3228
  %v3245 = vunpack.c.l.b16 %v3229
  %v3246 = vunpack.c.l.b16 %v3230
  %v3247 = vunpack.c.l.b16 %v3231
  %v3248 = vunpack.c.l.b16 %v3232
  %v3249 = vpack.c.b16 %v3242, %v3241
  %v3250 = vpack.c.b16 %v3244, %v3243
  %v3251 = vpack.c.b16 %v3246, %v3245
  %v3252 = vpack.c.b16 %v3248, %v3247
  %3257 = vmatprep.subr.bf16.mxu0 0
  %3258 = vmatpush1.bf16.msra.mxu0 0
  %3259 = vmatprep.subr.bf16.mxu0 0
  %3260 = vmatpush1.bf16.msra.mxu0 0
  %3261 = vmatprep.subr.bf16.mxu0 0
  %3262 = vmatpush1.bf16.msra.mxu0 0
  %3263 = vmatprep.subr.bf16.mxu0 0
  %3264 = vmatpush1.bf16.msra.mxu0 0
  %3265 = vmatprep.subr.bf16.mxu0 0
  %3266 = vmatpush1.bf16.msra.mxu0 %v3252
  %3267 = vmatprep.subr.bf16.mxu0 0
  %3268 = vmatpush1.bf16.msra.mxu0 %v3251
  %3269 = vmatprep.subr.bf16.mxu0 0
  %3270 = vmatpush1.bf16.msra.mxu0 %v3250
  %3271 = vmatprep.subr.bf16.mxu0 0
  %3272 = vmatpush1.bf16.msra.mxu0 %v3249
  %3273 = vmatprep.subr.bf16.mxu0 0
  %3274 = vmatpush2.bf16.msra.mxu0 0
  %3275 = vmatprep.subr.bf16.mxu0 0
  %3276 = vmatpush2.bf16.msra.mxu0 0
  %3277 = vmatprep.subr.bf16.mxu0 0
  %3278 = vmatpush2.bf16.msra.mxu0 0
  %3279 = vmatprep.subr.bf16.mxu0 0
  %3280 = vmatpush2.bf16.msra.mxu0 0
  %3281 = vmatprep.subr.bf16.mxu0 0
  %3282 = vmatpush2.bf16.msra.mxu0 0
  %3283 = vmatprep.subr.bf16.mxu0 0
  %3284 = vmatpush2.bf16.msra.mxu0 0
  %3285 = vmatprep.subr.bf16.mxu0 0
  %3286 = vmatpush2.bf16.msra.mxu0 0
  %3287 = vmatprep.subr.bf16.mxu0 0
  %3288 = vmatpush2.bf16.msra.mxu0 0
  %3289 = vmatprep.mubr.bf16.mxu0 0
  %3290 = vmatmul.mubr.bf16.gmra.mxu0 %v1882
  %v3291 = vpop.f32.mrf.mxu0
  %v3292 = vpop.f32.mrf.mxu0
  %v3293 = vpop.f32.mrf.mxu0
  %v3294 = vadd.f32 0.0, %v3293
  %v3295 = vpop.f32.mrf.mxu0
  %3296 = vmatprep.mubr.bf16.mxu0 0
  %3297 = vmatmul.mubr.bf16.gmra.mxu0 %v1885
  %v3298 = vpop.f32.mrf.mxu0
  %v3299 = vadd.f32 0.0, %v3298
  %v3300 = vpop.f32.mrf.mxu0
  %v3301 = vpop.f32.mrf.mxu0
  %v3302 = vadd.f32 0.0, %v3301
  %v3303 = vpop.f32.mrf.mxu0
  %3304 = vmatprep.mubr.bf16.mxu0 0
  %3305 = vmatmul.mubr.bf16.gmra.mxu0 %v1888
  %v3306 = vpop.f32.mrf.mxu0
  %v3307 = vadd.f32 0.0, %v3306
  %v3308 = vpop.f32.mrf.mxu0
  %v3309 = vpop.f32.mrf.mxu0
  %v3310 = vadd.f32 0.0, %v3309
  %v3311 = vpop.f32.mrf.mxu0
  %3312 = vmatprep.mubr.bf16.mxu0 0
  %3313 = vmatmul.mubr.bf16.gmra.mxu0 %v1891
  %v3314 = vpop.f32.mrf.mxu0
  %v3315 = vadd.f32 0.0, %v3314
  %v3316 = vpop.f32.mrf.mxu0
  %v3317 = vpop.f32.mrf.mxu0
  %v3318 = vadd.f32 0.0, %v3317
  %v3319 = vpop.f32.mrf.mxu0
  %3320 = vmatprep.mubr.bf16.mxu0 0
  %3321 = vmatmul.mubr.bf16.gmra.mxu0 %v1894
  %v3322 = vpop.f32.mrf.mxu0
  %v3323 = vpop.f32.mrf.mxu0
  %v3324 = vpop.f32.mrf.mxu0
  %v3325 = vadd.f32 0.0, %v3324
  %v3326 = vpop.f32.mrf.mxu0
  %3327 = vmatprep.mubr.bf16.mxu0 0
  %3328 = vmatmul.mubr.bf16.gmra.mxu0 %v1897
  %v3329 = vpop.f32.mrf.mxu0
  %v3330 = vadd.f32 0.0, %v3329
  %v3331 = vpop.f32.mrf.mxu0
  %v3332 = vpop.f32.mrf.mxu0
  %v3333 = vadd.f32 0.0, %v3332
  %v3334 = vpop.f32.mrf.mxu0
  %3335 = vmatprep.mubr.bf16.mxu0 0
  %3336 = vmatmul.mubr.bf16.gmra.mxu0 %v1900
  %v3337 = vpop.f32.mrf.mxu0
  %v3338 = vadd.f32 0.0, %v3337
  %v3339 = vpop.f32.mrf.mxu0
  %v3340 = vpop.f32.mrf.mxu0
  %v3341 = vadd.f32 0.0, %v3340
  %v3342 = vpop.f32.mrf.mxu0
  %3343 = vmatprep.mubr.bf16.mxu0 0
  %3344 = vmatmul.mubr.bf16.gmra.mxu0 %v1903
  %v3345 = vpop.f32.mrf.mxu0
  %v3346 = vadd.f32 0.0, %v3345
  %v3347 = vpop.f32.mrf.mxu0
  %v3348 = vpop.f32.mrf.mxu0
  %v3349 = vadd.f32 0.0, %v3348
  %v3350 = vpop.f32.mrf.mxu0
  %3351 = vdwg.mxu0
  %v3352 = vadd.f32 %v3210, %v3294
  %v3353 = vadd.f32 %v3211, %v3299
  %v3354 = vadd.f32 %v3212, %v3302
  %v3355 = vadd.f32 %v3213, %v3307
  %v3356 = vadd.f32 %v3214, %v3310
  %v3357 = vadd.f32 %v3215, %v3315
  %v3358 = vadd.f32 %v3216, %v3318
  %v3359 = vadd.f32 %v3217, %v3325
  %v3360 = vadd.f32 %v3218, %v3330
  %v3361 = vadd.f32 %v3219, %v3333
  %v3362 = vadd.f32 %v3220, %v3338
  %v3363 = vadd.f32 %v3221, %v3341
  %v3364 = vadd.f32 %v3222, %v3346
  %v3365 = vadd.f32 %v3223, %v3349
  %s3366 = scalar_lea.vmem %s5, 320
  %v3367 = vld [vmem:[%s3366] sm:$0xf]
  %v3368 = vld [vmem:[%s3366 + $0x4] sm:$0xf]
  %v3369 = vld [vmem:[%s3366 + $0x8] sm:$0xf]
  %v3370 = vld [vmem:[%s3366 + $0xc] sm:$0xf]
  %v3371 = vld [vmem:[%s3366 + $0x10] sm:$0xf]
  %v3372 = vld [vmem:[%s3366 + $0x14] sm:$0xf]
  %v3373 = vld [vmem:[%s3366 + $0x18] sm:$0xf]
  %v3374 = vld [vmem:[%s3366 + $0x1c] sm:$0xf]
  %v3383 = vunpack.c.l.b16 %v3367
  %v3384 = vunpack.c.l.b16 %v3368
  %v3385 = vunpack.c.l.b16 %v3369
  %v3386 = vunpack.c.l.b16 %v3370
  %v3387 = vunpack.c.l.b16 %v3371
  %v3388 = vunpack.c.l.b16 %v3372
  %v3389 = vunpack.c.l.b16 %v3373
  %v3390 = vunpack.c.l.b16 %v3374
  %v3391 = vpack.c.b16 %v3384, %v3383
  %v3392 = vpack.c.b16 %v3386, %v3385
  %v3393 = vpack.c.b16 %v3388, %v3387
  %v3394 = vpack.c.b16 %v3390, %v3389
  %3399 = vmatprep.subr.bf16.mxu0 0
  %3400 = vmatpush1.bf16.msra.mxu0 0
  %3401 = vmatprep.subr.bf16.mxu0 0
  %3402 = vmatpush1.bf16.msra.mxu0 0
  %3403 = vmatprep.subr.bf16.mxu0 0
  %3404 = vmatpush1.bf16.msra.mxu0 0
  %3405 = vmatprep.subr.bf16.mxu0 0
  %3406 = vmatpush1.bf16.msra.mxu0 0
  %3407 = vmatprep.subr.bf16.mxu0 0
  %3408 = vmatpush1.bf16.msra.mxu0 %v3394
  %3409 = vmatprep.subr.bf16.mxu0 0
  %3410 = vmatpush1.bf16.msra.mxu0 %v3393
  %3411 = vmatprep.subr.bf16.mxu0 0
  %3412 = vmatpush1.bf16.msra.mxu0 %v3392
  %3413 = vmatprep.subr.bf16.mxu0 0
  %3414 = vmatpush1.bf16.msra.mxu0 %v3391
  %3415 = vmatprep.subr.bf16.mxu0 0
  %3416 = vmatpush2.bf16.msra.mxu0 0
  %3417 = vmatprep.subr.bf16.mxu0 0
  %3418 = vmatpush2.bf16.msra.mxu0 0
  %3419 = vmatprep.subr.bf16.mxu0 0
  %3420 = vmatpush2.bf16.msra.mxu0 0
  %3421 = vmatprep.subr.bf16.mxu0 0
  %3422 = vmatpush2.bf16.msra.mxu0 0
  %3423 = vmatprep.subr.bf16.mxu0 0
  %3424 = vmatpush2.bf16.msra.mxu0 0
  %3425 = vmatprep.subr.bf16.mxu0 0
  %3426 = vmatpush2.bf16.msra.mxu0 0
  %3427 = vmatprep.subr.bf16.mxu0 0
  %3428 = vmatpush2.bf16.msra.mxu0 0
  %3429 = vmatprep.subr.bf16.mxu0 0
  %3430 = vmatpush2.bf16.msra.mxu0 0
  %3431 = vmatprep.mubr.bf16.mxu0 0
  %3432 = vmatmul.mubr.bf16.gmra.mxu0 %v1716
  %v3433 = vpop.f32.mrf.mxu0
  %v3434 = vpop.f32.mrf.mxu0
  %v3435 = vpop.f32.mrf.mxu0
  %v3436 = vadd.f32 0.0, %v3435
  %v3437 = vpop.f32.mrf.mxu0
  %3438 = vmatprep.mubr.bf16.mxu0 0
  %3439 = vmatmul.mubr.bf16.gmra.mxu0 %v1719
  %v3440 = vpop.f32.mrf.mxu0
  %v3441 = vadd.f32 0.0, %v3440
  %v3442 = vpop.f32.mrf.mxu0
  %v3443 = vpop.f32.mrf.mxu0
  %v3444 = vadd.f32 0.0, %v3443
  %v3445 = vpop.f32.mrf.mxu0
  %3446 = vmatprep.mubr.bf16.mxu0 0
  %3447 = vmatmul.mubr.bf16.gmra.mxu0 %v1722
  %v3448 = vpop.f32.mrf.mxu0
  %v3449 = vadd.f32 0.0, %v3448
  %v3450 = vpop.f32.mrf.mxu0
  %v3451 = vpop.f32.mrf.mxu0
  %v3452 = vadd.f32 0.0, %v3451
  %v3453 = vpop.f32.mrf.mxu0
  %3454 = vmatprep.mubr.bf16.mxu0 0
  %3455 = vmatmul.mubr.bf16.gmra.mxu0 %v1725
  %v3456 = vpop.f32.mrf.mxu0
  %v3457 = vadd.f32 0.0, %v3456
  %v3458 = vpop.f32.mrf.mxu0
  %v3459 = vpop.f32.mrf.mxu0
  %v3460 = vadd.f32 0.0, %v3459
  %v3461 = vpop.f32.mrf.mxu0
  %3462 = vmatprep.mubr.bf16.mxu0 0
  %3463 = vmatmul.mubr.bf16.gmra.mxu0 %v1728
  %v3464 = vpop.f32.mrf.mxu0
  %v3465 = vpop.f32.mrf.mxu0
  %v3466 = vpop.f32.mrf.mxu0
  %v3467 = vadd.f32 0.0, %v3466
  %v3468 = vpop.f32.mrf.mxu0
  %3469 = vmatprep.mubr.bf16.mxu0 0
  %3470 = vmatmul.mubr.bf16.gmra.mxu0 %v1731
  %v3471 = vpop.f32.mrf.mxu0
  %v3472 = vadd.f32 0.0, %v3471
  %v3473 = vpop.f32.mrf.mxu0
  %v3474 = vpop.f32.mrf.mxu0
  %v3475 = vadd.f32 0.0, %v3474
  %v3476 = vpop.f32.mrf.mxu0
  %3477 = vmatprep.mubr.bf16.mxu0 0
  %3478 = vmatmul.mubr.bf16.gmra.mxu0 %v1734
  %v3479 = vpop.f32.mrf.mxu0
  %v3480 = vadd.f32 0.0, %v3479
  %v3481 = vpop.f32.mrf.mxu0
  %v3482 = vpop.f32.mrf.mxu0
  %v3483 = vadd.f32 0.0, %v3482
  %v3484 = vpop.f32.mrf.mxu0
  %3485 = vmatprep.mubr.bf16.mxu0 0
  %3486 = vmatmul.mubr.bf16.gmra.mxu0 %v1737
  %v3487 = vpop.f32.mrf.mxu0
  %v3488 = vadd.f32 0.0, %v3487
  %v3489 = vpop.f32.mrf.mxu0
  %v3490 = vpop.f32.mrf.mxu0
  %v3491 = vadd.f32 0.0, %v3490
  %v3492 = vpop.f32.mrf.mxu0
  %3493 = vdwg.mxu0
  %v3508 = vrot.slane %v3436, 1
  %v3509 = vrot.slane %v3441, 1
  %v3510 = vrot.slane %v3444, 1
  %v3511 = vrot.slane %v3449, 1
  %v3512 = vrot.slane %v3452, 1
  %v3513 = vrot.slane %v3457, 1
  %v3514 = vrot.slane %v3460, 1
  %v3515 = vrot.slane %v3467, 1
  %v3516 = vrot.slane %v3472, 1
  %v3517 = vrot.slane %v3475, 1
  %v3518 = vrot.slane %v3480, 1
  %v3519 = vrot.slane %v3483, 1
  %v3520 = vrot.slane %v3488, 1
  %v3521 = vrot.slane %v3491, 1
  %v3536 = vadd.f32 %v3352, %v3508
  %v3537 = vadd.f32 %v3353, %v3509
  %v3538 = vadd.f32 %v3354, %v3510
  %v3539 = vadd.f32 %v3355, %v3511
  %v3540 = vadd.f32 %v3356, %v3512
  %v3541 = vadd.f32 %v3357, %v3513
  %v3542 = vadd.f32 %v3358, %v3514
  %v3543 = vadd.f32 %v3359, %v3515
  %v3544 = vadd.f32 %v3360, %v3516
  %v3545 = vadd.f32 %v3361, %v3517
  %v3546 = vadd.f32 %v3362, %v3518
  %v3547 = vadd.f32 %v3363, %v3519
  %v3548 = vadd.f32 %v3364, %v3520
  %v3549 = vadd.f32 %v3365, %v3521
  %s3550 = scalar_lea.vmem %s5, 352
  %v3551 = vld [vmem:[%s3550] sm:$0xf]
  %v3552 = vld [vmem:[%s3550 + $0x4] sm:$0xf]
  %v3553 = vld [vmem:[%s3550 + $0x8] sm:$0xf]
  %v3554 = vld [vmem:[%s3550 + $0xc] sm:$0xf]
  %v3555 = vld [vmem:[%s3550 + $0x10] sm:$0xf]
  %v3556 = vld [vmem:[%s3550 + $0x14] sm:$0xf]
  %v3557 = vld [vmem:[%s3550 + $0x18] sm:$0xf]
  %v3558 = vld [vmem:[%s3550 + $0x1c] sm:$0xf]
  %v3567 = vunpack.c.l.b16 %v3551
  %v3568 = vunpack.c.l.b16 %v3552
  %v3569 = vunpack.c.l.b16 %v3553
  %v3570 = vunpack.c.l.b16 %v3554
  %v3571 = vunpack.c.l.b16 %v3555
  %v3572 = vunpack.c.l.b16 %v3556
  %v3573 = vunpack.c.l.b16 %v3557
  %v3574 = vunpack.c.l.b16 %v3558
  %v3575 = vpack.c.b16 %v3568, %v3567
  %v3576 = vpack.c.b16 %v3570, %v3569
  %v3577 = vpack.c.b16 %v3572, %v3571
  %v3578 = vpack.c.b16 %v3574, %v3573
  %3583 = vmatprep.subr.bf16.mxu0 0
  %3584 = vmatpush1.bf16.msra.mxu0 0
  %3585 = vmatprep.subr.bf16.mxu0 0
  %3586 = vmatpush1.bf16.msra.mxu0 0
  %3587 = vmatprep.subr.bf16.mxu0 0
  %3588 = vmatpush1.bf16.msra.mxu0 0
  %3589 = vmatprep.subr.bf16.mxu0 0
  %3590 = vmatpush1.bf16.msra.mxu0 0
  %3591 = vmatprep.subr.bf16.mxu0 0
  %3592 = vmatpush1.bf16.msra.mxu0 %v3578
  %3593 = vmatprep.subr.bf16.mxu0 0
  %3594 = vmatpush1.bf16.msra.mxu0 %v3577
  %3595 = vmatprep.subr.bf16.mxu0 0
  %3596 = vmatpush1.bf16.msra.mxu0 %v3576
  %3597 = vmatprep.subr.bf16.mxu0 0
  %3598 = vmatpush1.bf16.msra.mxu0 %v3575
  %3599 = vmatprep.subr.bf16.mxu0 0
  %3600 = vmatpush2.bf16.msra.mxu0 0
  %3601 = vmatprep.subr.bf16.mxu0 0
  %3602 = vmatpush2.bf16.msra.mxu0 0
  %3603 = vmatprep.subr.bf16.mxu0 0
  %3604 = vmatpush2.bf16.msra.mxu0 0
  %3605 = vmatprep.subr.bf16.mxu0 0
  %3606 = vmatpush2.bf16.msra.mxu0 0
  %3607 = vmatprep.subr.bf16.mxu0 0
  %3608 = vmatpush2.bf16.msra.mxu0 0
  %3609 = vmatprep.subr.bf16.mxu0 0
  %3610 = vmatpush2.bf16.msra.mxu0 0
  %3611 = vmatprep.subr.bf16.mxu0 0
  %3612 = vmatpush2.bf16.msra.mxu0 0
  %3613 = vmatprep.subr.bf16.mxu0 0
  %3614 = vmatpush2.bf16.msra.mxu0 0
  %3615 = vmatprep.mubr.bf16.mxu0 0
  %3616 = vmatmul.mubr.bf16.gmra.mxu0 %v1882
  %v3617 = vpop.f32.mrf.mxu0
  %v3618 = vpop.f32.mrf.mxu0
  %v3619 = vpop.f32.mrf.mxu0
  %v3620 = vadd.f32 0.0, %v3619
  %v3621 = vpop.f32.mrf.mxu0
  %3622 = vmatprep.mubr.bf16.mxu0 0
  %3623 = vmatmul.mubr.bf16.gmra.mxu0 %v1885
  %v3624 = vpop.f32.mrf.mxu0
  %v3625 = vadd.f32 0.0, %v3624
  %v3626 = vpop.f32.mrf.mxu0
  %v3627 = vpop.f32.mrf.mxu0
  %v3628 = vadd.f32 0.0, %v3627
  %v3629 = vpop.f32.mrf.mxu0
  %3630 = vmatprep.mubr.bf16.mxu0 0
  %3631 = vmatmul.mubr.bf16.gmra.mxu0 %v1888
  %v3632 = vpop.f32.mrf.mxu0
  %v3633 = vadd.f32 0.0, %v3632
  %v3634 = vpop.f32.mrf.mxu0
  %v3635 = vpop.f32.mrf.mxu0
  %v3636 = vadd.f32 0.0, %v3635
  %v3637 = vpop.f32.mrf.mxu0
  %3638 = vmatprep.mubr.bf16.mxu0 0
  %3639 = vmatmul.mubr.bf16.gmra.mxu0 %v1891
  %v3640 = vpop.f32.mrf.mxu0
  %v3641 = vadd.f32 0.0, %v3640
  %v3642 = vpop.f32.mrf.mxu0
  %v3643 = vpop.f32.mrf.mxu0
  %v3644 = vadd.f32 0.0, %v3643
  %v3645 = vpop.f32.mrf.mxu0
  %3646 = vmatprep.mubr.bf16.mxu0 0
  %3647 = vmatmul.mubr.bf16.gmra.mxu0 %v1894
  %v3648 = vpop.f32.mrf.mxu0
  %v3649 = vpop.f32.mrf.mxu0
  %v3650 = vpop.f32.mrf.mxu0
  %v3651 = vadd.f32 0.0, %v3650
  %v3652 = vpop.f32.mrf.mxu0
  %3653 = vmatprep.mubr.bf16.mxu0 0
  %3654 = vmatmul.mubr.bf16.gmra.mxu0 %v1897
  %v3655 = vpop.f32.mrf.mxu0
  %v3656 = vadd.f32 0.0, %v3655
  %v3657 = vpop.f32.mrf.mxu0
  %v3658 = vpop.f32.mrf.mxu0
  %v3659 = vadd.f32 0.0, %v3658
  %v3660 = vpop.f32.mrf.mxu0
  %3661 = vmatprep.mubr.bf16.mxu0 0
  %3662 = vmatmul.mubr.bf16.gmra.mxu0 %v1900
  %v3663 = vpop.f32.mrf.mxu0
  %v3664 = vadd.f32 0.0, %v3663
  %v3665 = vpop.f32.mrf.mxu0
  %v3666 = vpop.f32.mrf.mxu0
  %v3667 = vadd.f32 0.0, %v3666
  %v3668 = vpop.f32.mrf.mxu0
  %3669 = vmatprep.mubr.bf16.mxu0 0
  %3670 = vmatmul.mubr.bf16.gmra.mxu0 %v1903
  %v3671 = vpop.f32.mrf.mxu0
  %v3672 = vadd.f32 0.0, %v3671
  %v3673 = vpop.f32.mrf.mxu0
  %v3674 = vpop.f32.mrf.mxu0
  %v3675 = vadd.f32 0.0, %v3674
  %v3676 = vpop.f32.mrf.mxu0
  %3677 = vdwg.mxu0
  %v3692 = vrot.slane %v3620, 1
  %v3693 = vrot.slane %v3625, 1
  %v3694 = vrot.slane %v3628, 1
  %v3695 = vrot.slane %v3633, 1
  %v3696 = vrot.slane %v3636, 1
  %v3697 = vrot.slane %v3641, 1
  %v3698 = vrot.slane %v3644, 1
  %v3699 = vrot.slane %v3651, 1
  %v3700 = vrot.slane %v3656, 1
  %v3701 = vrot.slane %v3659, 1
  %v3702 = vrot.slane %v3664, 1
  %v3703 = vrot.slane %v3667, 1
  %v3704 = vrot.slane %v3672, 1
  %v3705 = vrot.slane %v3675, 1
  %v3720 = vadd.f32 %v3536, %v3692
  %v3721 = vadd.f32 %v3537, %v3693
  %v3722 = vadd.f32 %v3538, %v3694
  %v3723 = vadd.f32 %v3539, %v3695
  %v3724 = vadd.f32 %v3540, %v3696
  %v3725 = vadd.f32 %v3541, %v3697
  %v3726 = vadd.f32 %v3542, %v3698
  %v3727 = vadd.f32 %v3543, %v3699
  %v3728 = vadd.f32 %v3544, %v3700
  %v3729 = vadd.f32 %v3545, %v3701
  %v3730 = vadd.f32 %v3546, %v3702
  %v3731 = vadd.f32 %v3547, %v3703
  %v3732 = vadd.f32 %v3548, %v3704
  %v3733 = vadd.f32 %v3549, %v3705
  %s3734 = scalar_lea.vmem %s5, 384
  %v3735 = vld [vmem:[%s3734] sm:$0xf]
  %v3736 = vld [vmem:[%s3734 + $0x4] sm:$0xf]
  %v3737 = vld [vmem:[%s3734 + $0x8] sm:$0xf]
  %v3738 = vld [vmem:[%s3734 + $0xc] sm:$0xf]
  %v3739 = vld [vmem:[%s3734 + $0x10] sm:$0xf]
  %v3740 = vld [vmem:[%s3734 + $0x14] sm:$0xf]
  %v3741 = vld [vmem:[%s3734 + $0x18] sm:$0xf]
  %v3742 = vld [vmem:[%s3734 + $0x1c] sm:$0xf]
  %v3751 = vunpack.c.l.b16 %v3735
  %v3752 = vunpack.c.l.b16 %v3736
  %v3753 = vunpack.c.l.b16 %v3737
  %v3754 = vunpack.c.l.b16 %v3738
  %v3755 = vunpack.c.l.b16 %v3739
  %v3756 = vunpack.c.l.b16 %v3740
  %v3757 = vunpack.c.l.b16 %v3741
  %v3758 = vunpack.c.l.b16 %v3742
  %v3759 = vpack.c.b16 %v3752, %v3751
  %v3760 = vpack.c.b16 %v3754, %v3753
  %v3761 = vpack.c.b16 %v3756, %v3755
  %v3762 = vpack.c.b16 %v3758, %v3757
  %3767 = vmatprep.subr.bf16.mxu0 0
  %3768 = vmatpush1.bf16.msra.mxu0 0
  %3769 = vmatprep.subr.bf16.mxu0 0
  %3770 = vmatpush1.bf16.msra.mxu0 0
  %3771 = vmatprep.subr.bf16.mxu0 0
  %3772 = vmatpush1.bf16.msra.mxu0 0
  %3773 = vmatprep.subr.bf16.mxu0 0
  %3774 = vmatpush1.bf16.msra.mxu0 0
  %3775 = vmatprep.subr.bf16.mxu0 0
  %3776 = vmatpush1.bf16.msra.mxu0 %v3762
  %3777 = vmatprep.subr.bf16.mxu0 0
  %3778 = vmatpush1.bf16.msra.mxu0 %v3761
  %3779 = vmatprep.subr.bf16.mxu0 0
  %3780 = vmatpush1.bf16.msra.mxu0 %v3760
  %3781 = vmatprep.subr.bf16.mxu0 0
  %3782 = vmatpush1.bf16.msra.mxu0 %v3759
  %3783 = vmatprep.subr.bf16.mxu0 0
  %3784 = vmatpush2.bf16.msra.mxu0 0
  %3785 = vmatprep.subr.bf16.mxu0 0
  %3786 = vmatpush2.bf16.msra.mxu0 0
  %3787 = vmatprep.subr.bf16.mxu0 0
  %3788 = vmatpush2.bf16.msra.mxu0 0
  %3789 = vmatprep.subr.bf16.mxu0 0
  %3790 = vmatpush2.bf16.msra.mxu0 0
  %3791 = vmatprep.subr.bf16.mxu0 0
  %3792 = vmatpush2.bf16.msra.mxu0 0
  %3793 = vmatprep.subr.bf16.mxu0 0
  %3794 = vmatpush2.bf16.msra.mxu0 0
  %3795 = vmatprep.subr.bf16.mxu0 0
  %3796 = vmatpush2.bf16.msra.mxu0 0
  %3797 = vmatprep.subr.bf16.mxu0 0
  %3798 = vmatpush2.bf16.msra.mxu0 0
  %3799 = vmatprep.mubr.bf16.mxu0 0
  %3800 = vmatmul.mubr.bf16.gmra.mxu0 %v2416
  %v3801 = vpop.f32.mrf.mxu0
  %v3802 = vpop.f32.mrf.mxu0
  %v3803 = vpop.f32.mrf.mxu0
  %v3804 = vadd.f32 0.0, %v3803
  %v3805 = vpop.f32.mrf.mxu0
  %3806 = vmatprep.mubr.bf16.mxu0 0
  %3807 = vmatmul.mubr.bf16.gmra.mxu0 %v2419
  %v3808 = vpop.f32.mrf.mxu0
  %v3809 = vadd.f32 0.0, %v3808
  %v3810 = vpop.f32.mrf.mxu0
  %v3811 = vpop.f32.mrf.mxu0
  %v3812 = vadd.f32 0.0, %v3811
  %v3813 = vpop.f32.mrf.mxu0
  %3814 = vmatprep.mubr.bf16.mxu0 0
  %3815 = vmatmul.mubr.bf16.gmra.mxu0 %v2422
  %v3816 = vpop.f32.mrf.mxu0
  %v3817 = vadd.f32 0.0, %v3816
  %v3818 = vpop.f32.mrf.mxu0
  %v3819 = vpop.f32.mrf.mxu0
  %v3820 = vadd.f32 0.0, %v3819
  %v3821 = vpop.f32.mrf.mxu0
  %3822 = vmatprep.mubr.bf16.mxu0 0
  %3823 = vmatmul.mubr.bf16.gmra.mxu0 %v2425
  %v3824 = vpop.f32.mrf.mxu0
  %v3825 = vadd.f32 0.0, %v3824
  %v3826 = vpop.f32.mrf.mxu0
  %v3827 = vpop.f32.mrf.mxu0
  %v3828 = vadd.f32 0.0, %v3827
  %v3829 = vpop.f32.mrf.mxu0
  %3830 = vmatprep.mubr.bf16.mxu0 0
  %3831 = vmatmul.mubr.bf16.gmra.mxu0 %v2428
  %v3832 = vpop.f32.mrf.mxu0
  %v3833 = vpop.f32.mrf.mxu0
  %v3834 = vpop.f32.mrf.mxu0
  %v3835 = vadd.f32 0.0, %v3834
  %v3836 = vpop.f32.mrf.mxu0
  %3837 = vmatprep.mubr.bf16.mxu0 0
  %3838 = vmatmul.mubr.bf16.gmra.mxu0 %v2431
  %v3839 = vpop.f32.mrf.mxu0
  %v3840 = vadd.f32 0.0, %v3839
  %v3841 = vpop.f32.mrf.mxu0
  %v3842 = vpop.f32.mrf.mxu0
  %v3843 = vadd.f32 0.0, %v3842
  %v3844 = vpop.f32.mrf.mxu0
  %3845 = vmatprep.mubr.bf16.mxu0 0
  %3846 = vmatmul.mubr.bf16.gmra.mxu0 %v2434
  %v3847 = vpop.f32.mrf.mxu0
  %v3848 = vadd.f32 0.0, %v3847
  %v3849 = vpop.f32.mrf.mxu0
  %v3850 = vpop.f32.mrf.mxu0
  %v3851 = vadd.f32 0.0, %v3850
  %v3852 = vpop.f32.mrf.mxu0
  %3853 = vmatprep.mubr.bf16.mxu0 0
  %3854 = vmatmul.mubr.bf16.gmra.mxu0 %v2437
  %v3855 = vpop.f32.mrf.mxu0
  %v3856 = vadd.f32 0.0, %v3855
  %v3857 = vpop.f32.mrf.mxu0
  %v3858 = vpop.f32.mrf.mxu0
  %v3859 = vadd.f32 0.0, %v3858
  %v3860 = vpop.f32.mrf.mxu0
  %3861 = vdwg.mxu0
  %v3862 = vadd.f32 %v3720, %v3804
  %v3863 = vadd.f32 %v3721, %v3809
  %v3864 = vadd.f32 %v3722, %v3812
  %v3865 = vadd.f32 %v3723, %v3817
  %v3866 = vadd.f32 %v3724, %v3820
  %v3867 = vadd.f32 %v3725, %v3825
  %v3868 = vadd.f32 %v3726, %v3828
  %v3869 = vadd.f32 %v3727, %v3835
  %v3870 = vadd.f32 %v3728, %v3840
  %v3871 = vadd.f32 %v3729, %v3843
  %v3872 = vadd.f32 %v3730, %v3848
  %v3873 = vadd.f32 %v3731, %v3851
  %v3874 = vadd.f32 %v3732, %v3856
  %v3875 = vadd.f32 %v3733, %v3859
  %s3876 = scalar_lea.vmem %s5, 416
  %v3877 = vld [vmem:[%s3876] sm:$0xf]
  %v3878 = vld [vmem:[%s3876 + $0x4] sm:$0xf]
  %v3879 = vld [vmem:[%s3876 + $0x8] sm:$0xf]
  %v3880 = vld [vmem:[%s3876 + $0xc] sm:$0xf]
  %v3881 = vld [vmem:[%s3876 + $0x10] sm:$0xf]
  %v3882 = vld [vmem:[%s3876 + $0x14] sm:$0xf]
  %v3883 = vld [vmem:[%s3876 + $0x18] sm:$0xf]
  %v3884 = vld [vmem:[%s3876 + $0x1c] sm:$0xf]
  %v3893 = vunpack.c.l.b16 %v3877
  %v3894 = vunpack.c.l.b16 %v3878
  %v3895 = vunpack.c.l.b16 %v3879
  %v3896 = vunpack.c.l.b16 %v3880
  %v3897 = vunpack.c.l.b16 %v3881
  %v3898 = vunpack.c.l.b16 %v3882
  %v3899 = vunpack.c.l.b16 %v3883
  %v3900 = vunpack.c.l.b16 %v3884
  %v3901 = vpack.c.b16 %v3894, %v3893
  %v3902 = vpack.c.b16 %v3896, %v3895
  %v3903 = vpack.c.b16 %v3898, %v3897
  %v3904 = vpack.c.b16 %v3900, %v3899
  %3909 = vmatprep.subr.bf16.mxu0 0
  %3910 = vmatpush1.bf16.msra.mxu0 0
  %3911 = vmatprep.subr.bf16.mxu0 0
  %3912 = vmatpush1.bf16.msra.mxu0 0
  %3913 = vmatprep.subr.bf16.mxu0 0
  %3914 = vmatpush1.bf16.msra.mxu0 0
  %3915 = vmatprep.subr.bf16.mxu0 0
  %3916 = vmatpush1.bf16.msra.mxu0 0
  %3917 = vmatprep.subr.bf16.mxu0 0
  %3918 = vmatpush1.bf16.msra.mxu0 %v3904
  %3919 = vmatprep.subr.bf16.mxu0 0
  %3920 = vmatpush1.bf16.msra.mxu0 %v3903
  %3921 = vmatprep.subr.bf16.mxu0 0
  %3922 = vmatpush1.bf16.msra.mxu0 %v3902
  %3923 = vmatprep.subr.bf16.mxu0 0
  %3924 = vmatpush1.bf16.msra.mxu0 %v3901
  %3925 = vmatprep.subr.bf16.mxu0 0
  %3926 = vmatpush2.bf16.msra.mxu0 0
  %3927 = vmatprep.subr.bf16.mxu0 0
  %3928 = vmatpush2.bf16.msra.mxu0 0
  %3929 = vmatprep.subr.bf16.mxu0 0
  %3930 = vmatpush2.bf16.msra.mxu0 0
  %3931 = vmatprep.subr.bf16.mxu0 0
  %3932 = vmatpush2.bf16.msra.mxu0 0
  %3933 = vmatprep.subr.bf16.mxu0 0
  %3934 = vmatpush2.bf16.msra.mxu0 0
  %3935 = vmatprep.subr.bf16.mxu0 0
  %3936 = vmatpush2.bf16.msra.mxu0 0
  %3937 = vmatprep.subr.bf16.mxu0 0
  %3938 = vmatpush2.bf16.msra.mxu0 0
  %3939 = vmatprep.subr.bf16.mxu0 0
  %3940 = vmatpush2.bf16.msra.mxu0 0
  %3941 = vmatprep.mubr.bf16.mxu0 0
  %3942 = vmatmul.mubr.bf16.gmra.mxu0 %v2582
  %v3943 = vpop.f32.mrf.mxu0
  %v3944 = vpop.f32.mrf.mxu0
  %v3945 = vpop.f32.mrf.mxu0
  %v3946 = vadd.f32 0.0, %v3945
  %v3947 = vpop.f32.mrf.mxu0
  %3948 = vmatprep.mubr.bf16.mxu0 0
  %3949 = vmatmul.mubr.bf16.gmra.mxu0 %v2585
  %v3950 = vpop.f32.mrf.mxu0
  %v3951 = vadd.f32 0.0, %v3950
  %v3952 = vpop.f32.mrf.mxu0
  %v3953 = vpop.f32.mrf.mxu0
  %v3954 = vadd.f32 0.0, %v3953
  %v3955 = vpop.f32.mrf.mxu0
  %3956 = vmatprep.mubr.bf16.mxu0 0
  %3957 = vmatmul.mubr.bf16.gmra.mxu0 %v2588
  %v3958 = vpop.f32.mrf.mxu0
  %v3959 = vadd.f32 0.0, %v3958
  %v3960 = vpop.f32.mrf.mxu0
  %v3961 = vpop.f32.mrf.mxu0
  %v3962 = vadd.f32 0.0, %v3961
  %v3963 = vpop.f32.mrf.mxu0
  %3964 = vmatprep.mubr.bf16.mxu0 0
  %3965 = vmatmul.mubr.bf16.gmra.mxu0 %v2591
  %v3966 = vpop.f32.mrf.mxu0
  %v3967 = vadd.f32 0.0, %v3966
  %v3968 = vpop.f32.mrf.mxu0
  %v3969 = vpop.f32.mrf.mxu0
  %v3970 = vadd.f32 0.0, %v3969
  %v3971 = vpop.f32.mrf.mxu0
  %3972 = vmatprep.mubr.bf16.mxu0 0
  %3973 = vmatmul.mubr.bf16.gmra.mxu0 %v2594
  %v3974 = vpop.f32.mrf.mxu0
  %v3975 = vpop.f32.mrf.mxu0
  %v3976 = vpop.f32.mrf.mxu0
  %v3977 = vadd.f32 0.0, %v3976
  %v3978 = vpop.f32.mrf.mxu0
  %3979 = vmatprep.mubr.bf16.mxu0 0
  %3980 = vmatmul.mubr.bf16.gmra.mxu0 %v2597
  %v3981 = vpop.f32.mrf.mxu0
  %v3982 = vadd.f32 0.0, %v3981
  %v3983 = vpop.f32.mrf.mxu0
  %v3984 = vpop.f32.mrf.mxu0
  %v3985 = vadd.f32 0.0, %v3984
  %v3986 = vpop.f32.mrf.mxu0
  %3987 = vmatprep.mubr.bf16.mxu0 0
  %3988 = vmatmul.mubr.bf16.gmra.mxu0 %v2600
  %v3989 = vpop.f32.mrf.mxu0
  %v3990 = vadd.f32 0.0, %v3989
  %v3991 = vpop.f32.mrf.mxu0
  %v3992 = vpop.f32.mrf.mxu0
  %v3993 = vadd.f32 0.0, %v3992
  %v3994 = vpop.f32.mrf.mxu0
  %3995 = vmatprep.mubr.bf16.mxu0 0
  %3996 = vmatmul.mubr.bf16.gmra.mxu0 %v2603
  %v3997 = vpop.f32.mrf.mxu0
  %v3998 = vadd.f32 0.0, %v3997
  %v3999 = vpop.f32.mrf.mxu0
  %v4000 = vpop.f32.mrf.mxu0
  %v4001 = vadd.f32 0.0, %v4000
  %v4002 = vpop.f32.mrf.mxu0
  %4003 = vdwg.mxu0
  %v4004 = vadd.f32 %v3862, %v3946
  %v4005 = vadd.f32 %v3863, %v3951
  %v4006 = vadd.f32 %v3864, %v3954
  %v4007 = vadd.f32 %v3865, %v3959
  %v4008 = vadd.f32 %v3866, %v3962
  %v4009 = vadd.f32 %v3867, %v3967
  %v4010 = vadd.f32 %v3868, %v3970
  %v4011 = vadd.f32 %v3869, %v3977
  %v4012 = vadd.f32 %v3870, %v3982
  %v4013 = vadd.f32 %v3871, %v3985
  %v4014 = vadd.f32 %v3872, %v3990
  %v4015 = vadd.f32 %v3873, %v3993
  %v4016 = vadd.f32 %v3874, %v3998
  %v4017 = vadd.f32 %v3875, %v4001
  %s4018 = scalar_lea.vmem %s5, 448
  %v4019 = vld [vmem:[%s4018] sm:$0xf]
  %v4020 = vld [vmem:[%s4018 + $0x4] sm:$0xf]
  %v4021 = vld [vmem:[%s4018 + $0x8] sm:$0xf]
  %v4022 = vld [vmem:[%s4018 + $0xc] sm:$0xf]
  %v4023 = vld [vmem:[%s4018 + $0x10] sm:$0xf]
  %v4024 = vld [vmem:[%s4018 + $0x14] sm:$0xf]
  %v4025 = vld [vmem:[%s4018 + $0x18] sm:$0xf]
  %v4026 = vld [vmem:[%s4018 + $0x1c] sm:$0xf]
  %v4035 = vunpack.c.l.b16 %v4019
  %v4036 = vunpack.c.l.b16 %v4020
  %v4037 = vunpack.c.l.b16 %v4021
  %v4038 = vunpack.c.l.b16 %v4022
  %v4039 = vunpack.c.l.b16 %v4023
  %v4040 = vunpack.c.l.b16 %v4024
  %v4041 = vunpack.c.l.b16 %v4025
  %v4042 = vunpack.c.l.b16 %v4026
  %v4043 = vpack.c.b16 %v4036, %v4035
  %v4044 = vpack.c.b16 %v4038, %v4037
  %v4045 = vpack.c.b16 %v4040, %v4039
  %v4046 = vpack.c.b16 %v4042, %v4041
  %4051 = vmatprep.subr.bf16.mxu0 0
  %4052 = vmatpush1.bf16.msra.mxu0 0
  %4053 = vmatprep.subr.bf16.mxu0 0
  %4054 = vmatpush1.bf16.msra.mxu0 0
  %4055 = vmatprep.subr.bf16.mxu0 0
  %4056 = vmatpush1.bf16.msra.mxu0 0
  %4057 = vmatprep.subr.bf16.mxu0 0
  %4058 = vmatpush1.bf16.msra.mxu0 0
  %4059 = vmatprep.subr.bf16.mxu0 0
  %4060 = vmatpush1.bf16.msra.mxu0 %v4046
  %4061 = vmatprep.subr.bf16.mxu0 0
  %4062 = vmatpush1.bf16.msra.mxu0 %v4045
  %4063 = vmatprep.subr.bf16.mxu0 0
  %4064 = vmatpush1.bf16.msra.mxu0 %v4044
  %4065 = vmatprep.subr.bf16.mxu0 0
  %4066 = vmatpush1.bf16.msra.mxu0 %v4043
  %4067 = vmatprep.subr.bf16.mxu0 0
  %4068 = vmatpush2.bf16.msra.mxu0 0
  %4069 = vmatprep.subr.bf16.mxu0 0
  %4070 = vmatpush2.bf16.msra.mxu0 0
  %4071 = vmatprep.subr.bf16.mxu0 0
  %4072 = vmatpush2.bf16.msra.mxu0 0
  %4073 = vmatprep.subr.bf16.mxu0 0
  %4074 = vmatpush2.bf16.msra.mxu0 0
  %4075 = vmatprep.subr.bf16.mxu0 0
  %4076 = vmatpush2.bf16.msra.mxu0 0
  %4077 = vmatprep.subr.bf16.mxu0 0
  %4078 = vmatpush2.bf16.msra.mxu0 0
  %4079 = vmatprep.subr.bf16.mxu0 0
  %4080 = vmatpush2.bf16.msra.mxu0 0
  %4081 = vmatprep.subr.bf16.mxu0 0
  %4082 = vmatpush2.bf16.msra.mxu0 0
  %4083 = vmatprep.mubr.bf16.mxu0 0
  %4084 = vmatmul.mubr.bf16.gmra.mxu0 %v2416
  %v4085 = vpop.f32.mrf.mxu0
  %v4086 = vpop.f32.mrf.mxu0
  %v4087 = vpop.f32.mrf.mxu0
  %v4088 = vadd.f32 0.0, %v4087
  %v4089 = vpop.f32.mrf.mxu0
  %4090 = vmatprep.mubr.bf16.mxu0 0
  %4091 = vmatmul.mubr.bf16.gmra.mxu0 %v2419
  %v4092 = vpop.f32.mrf.mxu0
  %v4093 = vadd.f32 0.0, %v4092
  %v4094 = vpop.f32.mrf.mxu0
  %v4095 = vpop.f32.mrf.mxu0
  %v4096 = vadd.f32 0.0, %v4095
  %v4097 = vpop.f32.mrf.mxu0
  %4098 = vmatprep.mubr.bf16.mxu0 0
  %4099 = vmatmul.mubr.bf16.gmra.mxu0 %v2422
  %v4100 = vpop.f32.mrf.mxu0
  %v4101 = vadd.f32 0.0, %v4100
  %v4102 = vpop.f32.mrf.mxu0
  %v4103 = vpop.f32.mrf.mxu0
  %v4104 = vadd.f32 0.0, %v4103
  %v4105 = vpop.f32.mrf.mxu0
  %4106 = vmatprep.mubr.bf16.mxu0 0
  %4107 = vmatmul.mubr.bf16.gmra.mxu0 %v2425
  %v4108 = vpop.f32.mrf.mxu0
  %v4109 = vadd.f32 0.0, %v4108
  %v4110 = vpop.f32.mrf.mxu0
  %v4111 = vpop.f32.mrf.mxu0
  %v4112 = vadd.f32 0.0, %v4111
  %v4113 = vpop.f32.mrf.mxu0
  %4114 = vmatprep.mubr.bf16.mxu0 0
  %4115 = vmatmul.mubr.bf16.gmra.mxu0 %v2428
  %v4116 = vpop.f32.mrf.mxu0
  %v4117 = vpop.f32.mrf.mxu0
  %v4118 = vpop.f32.mrf.mxu0
  %v4119 = vadd.f32 0.0, %v4118
  %v4120 = vpop.f32.mrf.mxu0
  %4121 = vmatprep.mubr.bf16.mxu0 0
  %4122 = vmatmul.mubr.bf16.gmra.mxu0 %v2431
  %v4123 = vpop.f32.mrf.mxu0
  %v4124 = vadd.f32 0.0, %v4123
  %v4125 = vpop.f32.mrf.mxu0
  %v4126 = vpop.f32.mrf.mxu0
  %v4127 = vadd.f32 0.0, %v4126
  %v4128 = vpop.f32.mrf.mxu0
  %4129 = vmatprep.mubr.bf16.mxu0 0
  %4130 = vmatmul.mubr.bf16.gmra.mxu0 %v2434
  %v4131 = vpop.f32.mrf.mxu0
  %v4132 = vadd.f32 0.0, %v4131
  %v4133 = vpop.f32.mrf.mxu0
  %v4134 = vpop.f32.mrf.mxu0
  %v4135 = vadd.f32 0.0, %v4134
  %v4136 = vpop.f32.mrf.mxu0
  %4137 = vmatprep.mubr.bf16.mxu0 0
  %4138 = vmatmul.mubr.bf16.gmra.mxu0 %v2437
  %v4139 = vpop.f32.mrf.mxu0
  %v4140 = vadd.f32 0.0, %v4139
  %v4141 = vpop.f32.mrf.mxu0
  %v4142 = vpop.f32.mrf.mxu0
  %v4143 = vadd.f32 0.0, %v4142
  %v4144 = vpop.f32.mrf.mxu0
  %4145 = vdwg.mxu0
  %v4160 = vrot.slane %v4088, 1
  %v4161 = vrot.slane %v4093, 1
  %v4162 = vrot.slane %v4096, 1
  %v4163 = vrot.slane %v4101, 1
  %v4164 = vrot.slane %v4104, 1
  %v4165 = vrot.slane %v4109, 1
  %v4166 = vrot.slane %v4112, 1
  %v4167 = vrot.slane %v4119, 1
  %v4168 = vrot.slane %v4124, 1
  %v4169 = vrot.slane %v4127, 1
  %v4170 = vrot.slane %v4132, 1
  %v4171 = vrot.slane %v4135, 1
  %v4172 = vrot.slane %v4140, 1
  %v4173 = vrot.slane %v4143, 1
  %v4188 = vadd.f32 %v4004, %v4160
  %v4189 = vadd.f32 %v4005, %v4161
  %v4190 = vadd.f32 %v4006, %v4162
  %v4191 = vadd.f32 %v4007, %v4163
  %v4192 = vadd.f32 %v4008, %v4164
  %v4193 = vadd.f32 %v4009, %v4165
  %v4194 = vadd.f32 %v4010, %v4166
  %v4195 = vadd.f32 %v4011, %v4167
  %v4196 = vadd.f32 %v4012, %v4168
  %v4197 = vadd.f32 %v4013, %v4169
  %v4198 = vadd.f32 %v4014, %v4170
  %v4199 = vadd.f32 %v4015, %v4171
  %v4200 = vadd.f32 %v4016, %v4172
  %v4201 = vadd.f32 %v4017, %v4173
  %s4202 = scalar_lea.vmem %s5, 480
  %v4203 = vld [vmem:[%s4202] sm:$0xf]
  %v4204 = vld [vmem:[%s4202 + $0x4] sm:$0xf]
  %v4205 = vld [vmem:[%s4202 + $0x8] sm:$0xf]
  %v4206 = vld [vmem:[%s4202 + $0xc] sm:$0xf]
  %v4207 = vld [vmem:[%s4202 + $0x10] sm:$0xf]
  %v4208 = vld [vmem:[%s4202 + $0x14] sm:$0xf]
  %v4209 = vld [vmem:[%s4202 + $0x18] sm:$0xf]
  %v4210 = vld [vmem:[%s4202 + $0x1c] sm:$0xf]
  %v4219 = vunpack.c.l.b16 %v4203
  %v4220 = vunpack.c.l.b16 %v4204
  %v4221 = vunpack.c.l.b16 %v4205
  %v4222 = vunpack.c.l.b16 %v4206
  %v4223 = vunpack.c.l.b16 %v4207
  %v4224 = vunpack.c.l.b16 %v4208
  %v4225 = vunpack.c.l.b16 %v4209
  %v4226 = vunpack.c.l.b16 %v4210
  %v4227 = vpack.c.b16 %v4220, %v4219
  %v4228 = vpack.c.b16 %v4222, %v4221
  %v4229 = vpack.c.b16 %v4224, %v4223
  %v4230 = vpack.c.b16 %v4226, %v4225
  %4235 = vmatprep.subr.bf16.mxu0 0
  %4236 = vmatpush1.bf16.msra.mxu0 0
  %4237 = vmatprep.subr.bf16.mxu0 0
  %4238 = vmatpush1.bf16.msra.mxu0 0
  %4239 = vmatprep.subr.bf16.mxu0 0
  %4240 = vmatpush1.bf16.msra.mxu0 0
  %4241 = vmatprep.subr.bf16.mxu0 0
  %4242 = vmatpush1.bf16.msra.mxu0 0
  %4243 = vmatprep.subr.bf16.mxu0 0
  %4244 = vmatpush1.bf16.msra.mxu0 %v4230
  %4245 = vmatprep.subr.bf16.mxu0 0
  %4246 = vmatpush1.bf16.msra.mxu0 %v4229
  %4247 = vmatprep.subr.bf16.mxu0 0
  %4248 = vmatpush1.bf16.msra.mxu0 %v4228
  %4249 = vmatprep.subr.bf16.mxu0 0
  %4250 = vmatpush1.bf16.msra.mxu0 %v4227
  %4251 = vmatprep.subr.bf16.mxu0 0
  %4252 = vmatpush2.bf16.msra.mxu0 0
  %4253 = vmatprep.subr.bf16.mxu0 0
  %4254 = vmatpush2.bf16.msra.mxu0 0
  %4255 = vmatprep.subr.bf16.mxu0 0
  %4256 = vmatpush2.bf16.msra.mxu0 0
  %4257 = vmatprep.subr.bf16.mxu0 0
  %4258 = vmatpush2.bf16.msra.mxu0 0
  %4259 = vmatprep.subr.bf16.mxu0 0
  %4260 = vmatpush2.bf16.msra.mxu0 0
  %4261 = vmatprep.subr.bf16.mxu0 0
  %4262 = vmatpush2.bf16.msra.mxu0 0
  %4263 = vmatprep.subr.bf16.mxu0 0
  %4264 = vmatpush2.bf16.msra.mxu0 0
  %4265 = vmatprep.subr.bf16.mxu0 0
  %4266 = vmatpush2.bf16.msra.mxu0 0
  %4267 = vmatprep.mubr.bf16.mxu0 0
  %4268 = vmatmul.mubr.bf16.gmra.mxu0 %v2582
  %v4269 = vpop.f32.mrf.mxu0
  %v4270 = vpop.f32.mrf.mxu0
  %v4271 = vpop.f32.mrf.mxu0
  %v4272 = vadd.f32 0.0, %v4271
  %v4273 = vpop.f32.mrf.mxu0
  %4274 = vmatprep.mubr.bf16.mxu0 0
  %4275 = vmatmul.mubr.bf16.gmra.mxu0 %v2585
  %v4276 = vpop.f32.mrf.mxu0
  %v4277 = vadd.f32 0.0, %v4276
  %v4278 = vpop.f32.mrf.mxu0
  %v4279 = vpop.f32.mrf.mxu0
  %v4280 = vadd.f32 0.0, %v4279
  %v4281 = vpop.f32.mrf.mxu0
  %4282 = vmatprep.mubr.bf16.mxu0 0
  %4283 = vmatmul.mubr.bf16.gmra.mxu0 %v2588
  %v4284 = vpop.f32.mrf.mxu0
  %v4285 = vadd.f32 0.0, %v4284
  %v4286 = vpop.f32.mrf.mxu0
  %v4287 = vpop.f32.mrf.mxu0
  %v4288 = vadd.f32 0.0, %v4287
  %v4289 = vpop.f32.mrf.mxu0
  %4290 = vmatprep.mubr.bf16.mxu0 0
  %4291 = vmatmul.mubr.bf16.gmra.mxu0 %v2591
  %v4292 = vpop.f32.mrf.mxu0
  %v4293 = vadd.f32 0.0, %v4292
  %v4294 = vpop.f32.mrf.mxu0
  %v4295 = vpop.f32.mrf.mxu0
  %v4296 = vadd.f32 0.0, %v4295
  %v4297 = vpop.f32.mrf.mxu0
  %4298 = vmatprep.mubr.bf16.mxu0 0
  %4299 = vmatmul.mubr.bf16.gmra.mxu0 %v2594
  %v4300 = vpop.f32.mrf.mxu0
  %v4301 = vpop.f32.mrf.mxu0
  %v4302 = vpop.f32.mrf.mxu0
  %v4303 = vadd.f32 0.0, %v4302
  %v4304 = vpop.f32.mrf.mxu0
  %4305 = vmatprep.mubr.bf16.mxu0 0
  %4306 = vmatmul.mubr.bf16.gmra.mxu0 %v2597
  %v4307 = vpop.f32.mrf.mxu0
  %v4308 = vadd.f32 0.0, %v4307
  %v4309 = vpop.f32.mrf.mxu0
  %v4310 = vpop.f32.mrf.mxu0
  %v4311 = vadd.f32 0.0, %v4310
  %v4312 = vpop.f32.mrf.mxu0
  %4313 = vmatprep.mubr.bf16.mxu0 0
  %4314 = vmatmul.mubr.bf16.gmra.mxu0 %v2600
  %v4315 = vpop.f32.mrf.mxu0
  %v4316 = vadd.f32 0.0, %v4315
  %v4317 = vpop.f32.mrf.mxu0
  %v4318 = vpop.f32.mrf.mxu0
  %v4319 = vadd.f32 0.0, %v4318
  %v4320 = vpop.f32.mrf.mxu0
  %4321 = vmatprep.mubr.bf16.mxu0 0
  %4322 = vmatmul.mubr.bf16.gmra.mxu0 %v2603
  %v4323 = vpop.f32.mrf.mxu0
  %v4324 = vadd.f32 0.0, %v4323
  %v4325 = vpop.f32.mrf.mxu0
  %v4326 = vpop.f32.mrf.mxu0
  %v4327 = vadd.f32 0.0, %v4326
  %v4328 = vpop.f32.mrf.mxu0
  %4329 = vdwg.mxu0
  %v4344 = vrot.slane %v4272, 1
  %v4345 = vrot.slane %v4277, 1
  %v4346 = vrot.slane %v4280, 1
  %v4347 = vrot.slane %v4285, 1
  %v4348 = vrot.slane %v4288, 1
  %v4349 = vrot.slane %v4293, 1
  %v4350 = vrot.slane %v4296, 1
  %v4351 = vrot.slane %v4303, 1
  %v4352 = vrot.slane %v4308, 1
  %v4353 = vrot.slane %v4311, 1
  %v4354 = vrot.slane %v4316, 1
  %v4355 = vrot.slane %v4319, 1
  %v4356 = vrot.slane %v4324, 1
  %v4357 = vrot.slane %v4327, 1
  %v4372 = vadd.f32 %v4188, %v4344
  %v4373 = vadd.f32 %v4189, %v4345
  %v4374 = vadd.f32 %v4190, %v4346
  %v4375 = vadd.f32 %v4191, %v4347
  %v4376 = vadd.f32 %v4192, %v4348
  %v4377 = vadd.f32 %v4193, %v4349
  %v4378 = vadd.f32 %v4194, %v4350
  %v4379 = vadd.f32 %v4195, %v4351
  %v4380 = vadd.f32 %v4196, %v4352
  %v4381 = vadd.f32 %v4197, %v4353
  %v4382 = vadd.f32 %v4198, %v4354
  %v4383 = vadd.f32 %v4199, %v4355
  %v4384 = vadd.f32 %v4200, %v4356
  %v4385 = vadd.f32 %v4201, %v4357
  %vm4386 = vcmask 1046528
  %v4387 = vsel %vm4386, %v4372, 0.0
  %v4388 = vsel %vm4386, %v4379, 0.0
  %v4389 = vadd.f32 %v4387, %v4388
  %v4390 = vsel %vm4386, %v4373, 0.0
  %v4391 = vsel %vm4386, %v4380, 0.0
  %v4392 = vadd.f32 %v4390, %v4391
  %v4393 = vsel %vm4386, %v4374, 0.0
  %v4394 = vsel %vm4386, %v4381, 0.0
  %v4395 = vadd.f32 %v4393, %v4394
  %v4396 = vsel %vm4386, %v4375, 0.0
  %v4397 = vsel %vm4386, %v4382, 0.0
  %v4398 = vadd.f32 %v4396, %v4397
  %v4399 = vsel %vm4386, %v4376, 0.0
  %v4400 = vsel %vm4386, %v4383, 0.0
  %v4401 = vadd.f32 %v4399, %v4400
  %v4402 = vsel %vm4386, %v4377, 0.0
  %v4403 = vsel %vm4386, %v4384, 0.0
  %v4404 = vadd.f32 %v4402, %v4403
  %v4405 = vsel %vm4386, %v4378, 0.0
  %v4406 = vsel %vm4386, %v4385, 0.0
  %v4407 = vadd.f32 %v4405, %v4406
  %v4408 = vsel %vm4386, %v4389, 0.0
  %v4409 = vsel %vm4386, %v4392, 0.0
  %v4410 = vadd.f32 %v4408, %v4409
  %v4411 = vsel %vm4386, %v4395, 0.0
  %v4412 = vadd.f32 %v4410, %v4411
  %v4413 = vsel %vm4386, %v4398, 0.0
  %v4414 = vadd.f32 %v4412, %v4413
  %v4415 = vsel %vm4386, %v4401, 0.0
  %v4416 = vadd.f32 %v4414, %v4415
  %v4417 = vsel %vm4386, %v4404, 0.0
  %v4418 = vadd.f32 %v4416, %v4417
  %v4419 = vsel %vm4386, %v4407, 0.0
  %v4420 = vadd.f32 %v4418, %v4419
  %v4421 = vsel %vm4386, %v4420, 0.0
  %v4422 = vrot.slane %v4421, 4
  %v4423 = vadd.f32 %v4421, %v4422
  %v4424 = vrot.slane %v4423, 2
  %v4425 = vadd.f32 %v4423, %v4424
  %v4426 = vrot.slane %v4425, 1
  %v4427 = vadd.f32 %v4425, %v4426
  %v4428 = vmul.f32 %v4427, 0.010204081
  %v4429 = vmul.f32 %v4372, %v4372
  %v4430 = vmul.f32 %v4373, %v4373
  %v4431 = vmul.f32 %v4374, %v4374
  %v4432 = vmul.f32 %v4375, %v4375
  %v4433 = vmul.f32 %v4376, %v4376
  %v4434 = vmul.f32 %v4377, %v4377
  %v4435 = vmul.f32 %v4378, %v4378
  %v4436 = vmul.f32 %v4379, %v4379
  %v4437 = vmul.f32 %v4380, %v4380
  %v4438 = vmul.f32 %v4381, %v4381
  %v4439 = vmul.f32 %v4382, %v4382
  %v4440 = vmul.f32 %v4383, %v4383
  %v4441 = vmul.f32 %v4384, %v4384
  %v4442 = vmul.f32 %v4385, %v4385
  %v4443 = vsel %vm4386, %v4429, 0.0
  %v4444 = vsel %vm4386, %v4436, 0.0
  %v4445 = vadd.f32 %v4443, %v4444
  %v4446 = vsel %vm4386, %v4430, 0.0
  %v4447 = vsel %vm4386, %v4437, 0.0
  %v4448 = vadd.f32 %v4446, %v4447
  %v4449 = vsel %vm4386, %v4431, 0.0
  %v4450 = vsel %vm4386, %v4438, 0.0
  %v4451 = vadd.f32 %v4449, %v4450
  %v4452 = vsel %vm4386, %v4432, 0.0
  %v4453 = vsel %vm4386, %v4439, 0.0
  %v4454 = vadd.f32 %v4452, %v4453
  %v4455 = vsel %vm4386, %v4433, 0.0
  %v4456 = vsel %vm4386, %v4440, 0.0
  %v4457 = vadd.f32 %v4455, %v4456
  %v4458 = vsel %vm4386, %v4434, 0.0
  %v4459 = vsel %vm4386, %v4441, 0.0
  %v4460 = vadd.f32 %v4458, %v4459
  %v4461 = vsel %vm4386, %v4435, 0.0
  %v4462 = vsel %vm4386, %v4442, 0.0
  %v4463 = vadd.f32 %v4461, %v4462
  %v4464 = vsel %vm4386, %v4445, 0.0
  %v4465 = vsel %vm4386, %v4448, 0.0
  %v4466 = vadd.f32 %v4464, %v4465
  %v4467 = vsel %vm4386, %v4451, 0.0
  %v4468 = vadd.f32 %v4466, %v4467
  %v4469 = vsel %vm4386, %v4454, 0.0
  %v4470 = vadd.f32 %v4468, %v4469
  %v4471 = vsel %vm4386, %v4457, 0.0
  %v4472 = vadd.f32 %v4470, %v4471
  %v4473 = vsel %vm4386, %v4460, 0.0
  %v4474 = vadd.f32 %v4472, %v4473
  %v4475 = vsel %vm4386, %v4463, 0.0
  %v4476 = vadd.f32 %v4474, %v4475
  %v4477 = vsel %vm4386, %v4476, 0.0
  %v4478 = vrot.slane %v4477, 4
  %v4479 = vadd.f32 %v4477, %v4478
  %v4480 = vrot.slane %v4479, 2
  %v4481 = vadd.f32 %v4479, %v4480
  %v4482 = vrot.slane %v4481, 1
  %v4483 = vadd.f32 %v4481, %v4482
  %v4484 = vmul.f32 %v4483, 0.010204081
  %v4485 = vmul.f32 %v4428, %v4428
  %v4486 = vsub.f32 %v4484, %v4485
  %v4487 = vmax.f32 %v4486, 0.0
  %v4488 = vld [vmem:[%s6] sm:$0x1]
  %v4489 = vadd.f32 %v4487, 1e-05
  %v4490 = vrsqrt.pop %v4489
  %v4491 = vmul.f32 %v4488, %v4490
  %v4492 = vld [vmem:[%s7] sm:$0x1]
  %v4493 = vmul.f32 %v4428, %v4491
  %v4494 = vsub.f32 %v4492, %v4493
  %v4496 = vlaneseq
  %v4497 = vshrl.u32 %v4496, 7
  %v4498 = vsub.s32 0, %v4497
  %v4499 = vrot.slane %v4491, %v4498
  %v4501 = vmul.f32 %v4372, %v4499
  %v4502 = vmul.f32 %v4373, %v4499
  %v4503 = vmul.f32 %v4374, %v4499
  %v4504 = vmul.f32 %v4375, %v4499
  %v4505 = vmul.f32 %v4376, %v4499
  %v4506 = vmul.f32 %v4377, %v4499
  %v4507 = vmul.f32 %v4378, %v4499
  %v4508 = vmul.f32 %v4379, %v4499
  %v4509 = vmul.f32 %v4380, %v4499
  %v4510 = vmul.f32 %v4381, %v4499
  %v4511 = vmul.f32 %v4382, %v4499
  %v4512 = vmul.f32 %v4383, %v4499
  %v4513 = vmul.f32 %v4384, %v4499
  %v4514 = vmul.f32 %v4385, %v4499
  %v4516 = vlaneseq
  %v4517 = vshrl.u32 %v4516, 7
  %v4518 = vsub.s32 0, %v4517
  %v4519 = vrot.slane %v4494, %v4518
  %v4521 = vadd.f32 %v4501, %v4519
  %v4522 = vadd.f32 %v4502, %v4519
  %v4523 = vadd.f32 %v4503, %v4519
  %v4524 = vadd.f32 %v4504, %v4519
  %v4525 = vadd.f32 %v4505, %v4519
  %v4526 = vadd.f32 %v4506, %v4519
  %v4527 = vadd.f32 %v4507, %v4519
  %v4528 = vadd.f32 %v4508, %v4519
  %v4529 = vadd.f32 %v4509, %v4519
  %v4530 = vadd.f32 %v4510, %v4519
  %v4531 = vadd.f32 %v4511, %v4519
  %v4532 = vadd.f32 %v4512, %v4519
  %v4533 = vadd.f32 %v4513, %v4519
  %v4534 = vadd.f32 %v4514, %v4519
  %v4535 = vmax.f32 %v4521, 0.0
  %v4536 = vmax.f32 %v4522, 0.0
  %v4537 = vmax.f32 %v4523, 0.0
  %v4538 = vmax.f32 %v4524, 0.0
  %v4539 = vmax.f32 %v4525, 0.0
  %v4540 = vmax.f32 %v4526, 0.0
  %v4541 = vmax.f32 %v4527, 0.0
  %v4542 = vmax.f32 %v4528, 0.0
  %v4543 = vmax.f32 %v4529, 0.0
  %v4544 = vmax.f32 %v4530, 0.0
  %v4545 = vmax.f32 %v4531, 0.0
  %v4546 = vmax.f32 %v4532, 0.0
  %v4547 = vmax.f32 %v4533, 0.0
  %v4548 = vmax.f32 %v4534, 0.0
  %v4549 = vld [vmem:[%s8] sm:$0x7f]
  %v4550 = vld [vmem:[%s8 + $0x8] sm:$0x7f]
  %v4551 = vld [vmem:[%s8 + $0x10] sm:$0x7f]
  %v4552 = vld [vmem:[%s8 + $0x18] sm:$0x7f]
  %v4553 = vld [vmem:[%s8 + $0x20] sm:$0x7f]
  %v4554 = vld [vmem:[%s8 + $0x28] sm:$0x7f]
  %v4555 = vld [vmem:[%s8 + $0x30] sm:$0x7f]
  %v4556 = vmul.f32 %v4535, %v4549
  %v4557 = vmul.f32 %v4536, %v4550
  %v4558 = vmul.f32 %v4537, %v4551
  %v4559 = vmul.f32 %v4538, %v4552
  %v4560 = vmul.f32 %v4539, %v4553
  %v4561 = vmul.f32 %v4540, %v4554
  %v4562 = vmul.f32 %v4541, %v4555
  %v4563 = vmul.f32 %v4542, %v4549
  %v4564 = vmul.f32 %v4543, %v4550
  %v4565 = vmul.f32 %v4544, %v4551
  %v4566 = vmul.f32 %v4545, %v4552
  %v4567 = vmul.f32 %v4546, %v4553
  %v4568 = vmul.f32 %v4547, %v4554
  %v4569 = vmul.f32 %v4548, %v4555
  %v4570 = vsel %vm4386, %v4556, 0.0
  %4571 = vadd.xlane.f32.xlu0 %v4570
  %v4572 = vpop.xlane.xlu0 %4571
  %v4573 = vsel %vm4386, %v4557, 0.0
  %4574 = vadd.xlane.f32.xlu0 %v4573
  %v4575 = vpop.xlane.xlu0 %4574
  %v4576 = vsel %vm4386, %v4558, 0.0
  %4577 = vadd.xlane.f32.xlu0 %v4576
  %v4578 = vpop.xlane.xlu0 %4577
  %v4579 = vsel %vm4386, %v4559, 0.0
  %4580 = vadd.xlane.f32.xlu0 %v4579
  %v4581 = vpop.xlane.xlu0 %4580
  %v4582 = vsel %vm4386, %v4560, 0.0
  %4583 = vadd.xlane.f32.xlu0 %v4582
  %v4584 = vpop.xlane.xlu0 %4583
  %v4585 = vsel %vm4386, %v4561, 0.0
  %4586 = vadd.xlane.f32.xlu0 %v4585
  %v4587 = vpop.xlane.xlu0 %4586
  %v4588 = vsel %vm4386, %v4562, 0.0
  %4589 = vadd.xlane.f32.xlu0 %v4588
  %v4590 = vpop.xlane.xlu0 %4589
  %v4591 = vsel %vm4386, %v4563, 0.0
  %4592 = vadd.xlane.f32.xlu0 %v4591
  %v4593 = vpop.xlane.xlu0 %4592
  %v4594 = vsel %vm4386, %v4564, 0.0
  %4595 = vadd.xlane.f32.xlu0 %v4594
  %v4596 = vpop.xlane.xlu0 %4595
  %v4597 = vsel %vm4386, %v4565, 0.0
  %4598 = vadd.xlane.f32.xlu0 %v4597
  %v4599 = vpop.xlane.xlu0 %4598
  %v4600 = vsel %vm4386, %v4566, 0.0
  %4601 = vadd.xlane.f32.xlu0 %v4600
  %v4602 = vpop.xlane.xlu0 %4601
  %v4603 = vsel %vm4386, %v4567, 0.0
  %4604 = vadd.xlane.f32.xlu0 %v4603
  %v4605 = vpop.xlane.xlu0 %4604
  %v4606 = vsel %vm4386, %v4568, 0.0
  %4607 = vadd.xlane.f32.xlu0 %v4606
  %v4608 = vpop.xlane.xlu0 %4607
  %v4609 = vsel %vm4386, %v4569, 0.0
  %4610 = vadd.xlane.f32.xlu0 %v4609
  %v4611 = vpop.xlane.xlu0 %4610
  %v4612 = vsel %vm4386, %v4572, 0.0
  %v4613 = vrot.slane %v4612, 4
  %v4614 = vadd.f32 %v4612, %v4613
  %v4615 = vrot.slane %v4614, 2
  %v4616 = vadd.f32 %v4614, %v4615
  %v4617 = vrot.slane %v4616, 1
  %v4618 = vadd.f32 %v4616, %v4617
  %v4619 = vsel %vm4386, %v4575, 0.0
  %v4620 = vrot.slane %v4619, 4
  %v4621 = vadd.f32 %v4619, %v4620
  %v4622 = vrot.slane %v4621, 2
  %v4623 = vadd.f32 %v4621, %v4622
  %v4624 = vrot.slane %v4623, 1
  %v4625 = vadd.f32 %v4623, %v4624
  %v4626 = vsel %vm4386, %v4578, 0.0
  %v4627 = vrot.slane %v4626, 4
  %v4628 = vadd.f32 %v4626, %v4627
  %v4629 = vrot.slane %v4628, 2
  %v4630 = vadd.f32 %v4628, %v4629
  %v4631 = vrot.slane %v4630, 1
  %v4632 = vadd.f32 %v4630, %v4631
  %v4633 = vsel %vm4386, %v4581, 0.0
  %v4634 = vrot.slane %v4633, 4
  %v4635 = vadd.f32 %v4633, %v4634
  %v4636 = vrot.slane %v4635, 2
  %v4637 = vadd.f32 %v4635, %v4636
  %v4638 = vrot.slane %v4637, 1
  %v4639 = vadd.f32 %v4637, %v4638
  %v4640 = vsel %vm4386, %v4584, 0.0
  %v4641 = vrot.slane %v4640, 4
  %v4642 = vadd.f32 %v4640, %v4641
  %v4643 = vrot.slane %v4642, 2
  %v4644 = vadd.f32 %v4642, %v4643
  %v4645 = vrot.slane %v4644, 1
  %v4646 = vadd.f32 %v4644, %v4645
  %v4647 = vsel %vm4386, %v4587, 0.0
  %v4648 = vrot.slane %v4647, 4
  %v4649 = vadd.f32 %v4647, %v4648
  %v4650 = vrot.slane %v4649, 2
  %v4651 = vadd.f32 %v4649, %v4650
  %v4652 = vrot.slane %v4651, 1
  %v4653 = vadd.f32 %v4651, %v4652
  %v4654 = vsel %vm4386, %v4590, 0.0
  %v4655 = vrot.slane %v4654, 4
  %v4656 = vadd.f32 %v4654, %v4655
  %v4657 = vrot.slane %v4656, 2
  %v4658 = vadd.f32 %v4656, %v4657
  %v4659 = vrot.slane %v4658, 1
  %v4660 = vadd.f32 %v4658, %v4659
  %v4661 = vsel %vm4386, %v4593, 0.0
  %v4662 = vrot.slane %v4661, 4
  %v4663 = vadd.f32 %v4661, %v4662
  %v4664 = vrot.slane %v4663, 2
  %v4665 = vadd.f32 %v4663, %v4664
  %v4666 = vrot.slane %v4665, 1
  %v4667 = vadd.f32 %v4665, %v4666
  %v4668 = vsel %vm4386, %v4596, 0.0
  %v4669 = vrot.slane %v4668, 4
  %v4670 = vadd.f32 %v4668, %v4669
  %v4671 = vrot.slane %v4670, 2
  %v4672 = vadd.f32 %v4670, %v4671
  %v4673 = vrot.slane %v4672, 1
  %v4674 = vadd.f32 %v4672, %v4673
  %v4675 = vsel %vm4386, %v4599, 0.0
  %v4676 = vrot.slane %v4675, 4
  %v4677 = vadd.f32 %v4675, %v4676
  %v4678 = vrot.slane %v4677, 2
  %v4679 = vadd.f32 %v4677, %v4678
  %v4680 = vrot.slane %v4679, 1
  %v4681 = vadd.f32 %v4679, %v4680
  %v4682 = vsel %vm4386, %v4602, 0.0
  %v4683 = vrot.slane %v4682, 4
  %v4684 = vadd.f32 %v4682, %v4683
  %v4685 = vrot.slane %v4684, 2
  %v4686 = vadd.f32 %v4684, %v4685
  %v4687 = vrot.slane %v4686, 1
  %v4688 = vadd.f32 %v4686, %v4687
  %v4689 = vsel %vm4386, %v4605, 0.0
  %v4690 = vrot.slane %v4689, 4
  %v4691 = vadd.f32 %v4689, %v4690
  %v4692 = vrot.slane %v4691, 2
  %v4693 = vadd.f32 %v4691, %v4692
  %v4694 = vrot.slane %v4693, 1
  %v4695 = vadd.f32 %v4693, %v4694
  %v4696 = vsel %vm4386, %v4608, 0.0
  %v4697 = vrot.slane %v4696, 4
  %v4698 = vadd.f32 %v4696, %v4697
  %v4699 = vrot.slane %v4698, 2
  %v4700 = vadd.f32 %v4698, %v4699
  %v4701 = vrot.slane %v4700, 1
  %v4702 = vadd.f32 %v4700, %v4701
  %v4703 = vsel %vm4386, %v4611, 0.0
  %v4704 = vrot.slane %v4703, 4
  %v4705 = vadd.f32 %v4703, %v4704
  %v4706 = vrot.slane %v4705, 2
  %v4707 = vadd.f32 %v4705, %v4706
  %v4708 = vrot.slane %v4707, 1
  %v4709 = vadd.f32 %v4707, %v4708
  %v4710 = vadd.f32 %v4618, %v4625
  %v4711 = vadd.f32 %v4710, %v4632
  %v4712 = vadd.f32 %v4711, %v4639
  %v4713 = vadd.f32 %v4712, %v4646
  %v4714 = vadd.f32 %v4713, %v4653
  %v4715 = vadd.f32 %v4714, %v4660
  %v4716 = vadd.f32 %v4667, %v4674
  %v4717 = vadd.f32 %v4716, %v4681
  %v4718 = vadd.f32 %v4717, %v4688
  %v4719 = vadd.f32 %v4718, %v4695
  %v4720 = vadd.f32 %v4719, %v4702
  %v4721 = vadd.f32 %v4720, %v4709
  %v4722 = vld [vmem:[#allocation2] sm:$0x1]
  %v4723 = vadd.f32 %v4715, %v4722
  %v4724 = vadd.f32 %v4721, %v4722
  %v4725 = vxor.u32 %v4723, 2147483648
  %v4726 = vxor.u32 %v4724, 2147483648
  %v4727 = vmul.f32 %v4725, 1.442695
  %v4728 = vpow.pop %v4727
  %v4729 = vmul.f32 %v4726, 1.442695
  %v4730 = vpow.pop %v4729
  %v4731 = vadd.f32 %v4728, 1.0
  %v4732 = vadd.f32 %v4730, 1.0
  %v4733 = vrcp.pop %v4731
  %v4734 = vmul.f32 1.0, %v4733
  %v4735 = vrcp.pop %v4732
  %v4736 = vmul.f32 1.0, %v4735
  %vm4737 = vcmask 0
  %4738 = vst.msk [vmem:[%s10] sm:$0x1] %vm4737, %v4734
  %4739 = vst.msk [vmem:[%s10 + $0x1] sm:$0x1] %vm4737, %v4736
  // Predicated region
  $region42: #{discriminator_forward.1} parent=0 // pred_check
    _
  $region43: #{discriminator_forward.1} parent=0 // pred_check_branch
    %4741 = sbr.rel (0) target = $region45
  $region44: #{discriminator_forward.1} parent=0 // pred_region
    _
  $region45: #{discriminator_forward.1} parent=0 // pred_fallthru
    _
  // Predicated region
  $region46: #{discriminator_forward.1} parent=0 // pred_check
    _
  $region47: #{discriminator_forward.1} parent=0 // pred_check_branch
    %4743 = sbr.rel (0) target = $region49
  $region48: #{discriminator_forward.1} parent=0 // pred_region
    _
  $region49: #{discriminator_forward.1} parent=0 // pred_fallthru
    _

</llo_original>
